<compile_context>
chip_gen: v5e
topology: v5e:2x2
jax: 0.10.0
libtpu: 0.0.40
codegen_flags: <defaults>
</compile_context>

<pallas_src>
import functools

import jax
import jax.numpy as jnp
from jax.experimental import pallas as pl
from jax.experimental.pallas import tpu as pltpu

# ------------------------- tiny T5 config -------------------------
VOCAB = 128
D_MODEL = 64
D_FF = 128
N_HEADS = 4
D_HEAD = 16          # N_HEADS * D_HEAD == D_MODEL
EPS = 1e-6
NEG_INF = -1e9


# ------------------------- fused per-batch forward kernel -------------------------
def _t5_kernel(
    ids_e_ref, ids_d_ref, lbl_ref, mask_ref, emb_ref, emb_t_ref,
    e_ln1_ref, e_wqkv_ref, e_wo_ref, e_rb_ref, e_ln2_ref, e_wi_ref, e_wo2_ref, e_fln_ref,
    d_ln1_ref, d_wqkv_ref, d_wo_ref, d_rb_ref, d_lnx_ref, d_cq_ref, d_ckv_ref, d_co_ref,
    d_ln2_ref, d_wi_ref, d_wo2_ref, d_fln_ref,
    logits_ref, loss_ref,
    qkv_s,                       # VMEM scratch (S, 3*D_MODEL) bf16: [Q | K | V]
    *, S, T,
):
    f32 = jnp.float32
    bf16 = jnp.bfloat16
    D, DH, H = D_MODEL, D_HEAD, N_HEADS

    def mm(a, b):
        # bf16 MXU operands, f32 accumulation.
        return jnp.dot(a.astype(bf16), b.astype(bf16), preferred_element_type=f32)

    def rms(x, g):
        # T5 LayerNorm: x / sqrt(mean(x^2)+eps) * gamma  (no mean-sub, no bias)
        var = jnp.mean(x * x, axis=-1, keepdims=True)
        return x * jax.lax.rsqrt(var + EPS) * g

    def attention(wo_ref, bias):
        # Per-head scores, stacked along sublanes -> ONE softmax for all heads.
        s_heads = []
        for h in range(H):
            qh = qkv_s[:, h * DH:(h + 1) * DH]            # (S, DH) bf16, static ref slice
            kh = qkv_s[:, D + h * DH:D + (h + 1) * DH]    # (S, DH) bf16
            # T5 attention is NOT scaled by sqrt(d_head).
            s_heads.append(jnp.einsum("qd,kd->qk", qh, kh,
                                      preferred_element_type=f32))      # (S, S)
        s = jnp.concatenate(s_heads, axis=0) + bias                      # (H*S, S)
        m = jnp.max(s, axis=-1, keepdims=True)
        p = jnp.exp(s - m)
        p = p * pl.reciprocal(jnp.sum(p, axis=-1, keepdims=True), approx=True)
        # Per-head contexts concatenated along lanes -> a single Wo matmul.
        ctx = []
        for h in range(H):
            vh = qkv_s[:, 2 * D + h * DH:2 * D + (h + 1) * DH]
            ctx.append(mm(p[h * S:(h + 1) * S], vh))                     # (S, DH)
        return mm(jnp.concatenate(ctx, axis=1), wo_ref[...])             # (S, D)

    # One iota reused for all three one-hots (S == T).
    iota_v = jax.lax.broadcasted_iota(jnp.int32, (S, VOCAB), 1)
    emb = emb_ref[...]                                     # (V, D) bf16
    mask_bias = (1.0 - mask_ref[...]) * NEG_INF            # (1, S) key-padding bias

    # ---------------- encoder ----------------
    oh_e = (iota_v == ids_e_ref[...]).astype(bf16)         # one-hot built directly in bf16
    x = mm(oh_e, emb)                                      # embedding gather via MXU

    e_bias = e_rb_ref[...] + mask_bias                     # (H*S, S), hoisted, one add
    h1 = rms(x, e_ln1_ref[...])
    qkv_s[...] = mm(h1, e_wqkv_ref[...]).astype(bf16)      # fused QKV projection, staged
    x = x + attention(e_wo_ref, e_bias)
    h2 = rms(x, e_ln2_ref[...])
    x = x + mm(jnp.maximum(mm(h2, e_wi_ref[...]), 0.0), e_wo2_ref[...])  # ReLU FFN
    enc_out = rms(x, e_fln_ref[...])                       # (S, D)

    # ---------------- decoder ----------------
    oh_d = (iota_v == ids_d_ref[...]).astype(bf16)         # shifted labels
    y = mm(oh_d, emb)

    row = jax.lax.broadcasted_iota(jnp.int32, (T, T), 0)
    col = jax.lax.broadcasted_iota(jnp.int32, (T, T), 1)
    causal = jnp.where(col <= row, 0.0, NEG_INF)           # (T, T)
    # TODO(synk): T5's bucketed relative position bias is simplified to a dense
    # learned (H*T, T) table (valid while T == S); no decoder-side padding mask.
    d_bias = d_rb_ref[...] + jnp.concatenate([causal] * H, axis=0)

    h1 = rms(y, d_ln1_ref[...])
    qkv_s[...] = mm(h1, d_wqkv_ref[...]).astype(bf16)
    y = y + attention(d_wo_ref, d_bias)

    # cross attention: queries from decoder stream, keys/values from encoder output
    hx = rms(y, d_lnx_ref[...])
    qkv_s[:, :D] = mm(hx, d_cq_ref[...]).astype(bf16)
    qkv_s[:, D:] = mm(enc_out, d_ckv_ref[...]).astype(bf16)   # fused cross K/V
    y = y + attention(d_co_ref, mask_bias)

    h2 = rms(y, d_ln2_ref[...])
    y = y + mm(jnp.maximum(mm(h2, d_wi_ref[...]), 0.0), d_wo2_ref[...])
    dec_out = rms(y, d_fln_ref[...])                       # (T, D)

    # ------- tied lm_head + per-batch token cross-entropy partial sum -------
    logits = mm(dec_out * (D_MODEL ** -0.5), emb_t_ref[...])   # (T, V), lane-dense
    logits_ref[...] = logits

    tgt_oh = (iota_v == lbl_ref[...]).astype(f32)
    m = jnp.max(logits, axis=-1, keepdims=True)
    lse = jnp.log(jnp.sum(jnp.exp(logits - m), axis=-1, keepdims=True)) + m
    tgt = jnp.sum(logits * tgt_oh, axis=-1, keepdims=True)
    # TODO(synk): no ignore-index (-100) handling; synthetic labels never pad.
    loss_ref[...] = jnp.sum(lse - tgt).reshape(1, 1)


# ------------------------- glue (one pallas_call per forward) -------------------------
def t5_forward(kparams, input_ids, attention_mask, labels):
    B_, S_ = input_ids.shape
    T_ = labels.shape[1]
    assert S_ == T_, "kernel assumes encoder/decoder lengths match"
    # decoder inputs = labels shifted right with start token (pad id 0); trivial XLA glue
    dec_ids = jnp.concatenate(
        [jnp.zeros((B_, 1), labels.dtype), labels[:, :-1]], axis=1)

    def _batch_spec(*tail):
        zeros = (0,) * len(tail)
        return pl.BlockSpec((None, *tail), lambda b, _z=zeros: (b, *_z))

    def _bcast_spec(shape):
        zeros = (0,) * len(shape)
        return pl.BlockSpec(tuple(shape), lambda b, _z=zeros: _z)

    in_specs = [
        _batch_spec(S_, 1),          # encoder ids
        _batch_spec(T_, 1),          # decoder ids
        _batch_spec(T_, 1),          # labels
        _batch_spec(1, S_),          # attention mask
    ] + [_bcast_spec(w.shape) for w in kparams]   # weights: same block every step

    out_specs = [
        _batch_spec(T_, VOCAB),      # per-batch logits block (lane-dense, V=128)
        _batch_spec(1, 1),           # per-batch CE partial sum
    ]

    kernel = functools.partial(_t5_kernel, S=S_, T=T_)
    logits, loss_parts = pl.pallas_call(
        kernel,
        out_shape=(
            jax.ShapeDtypeStruct((B_, T_, VOCAB), jnp.float32),
            jax.ShapeDtypeStruct((B_, 1, 1), jnp.float32),
        ),
        grid_spec=pltpu.PrefetchScalarGridSpec(
            num_scalar_prefetch=0,
            grid=(B_,),
            in_specs=in_specs,
            out_specs=out_specs,
            scratch_shapes=[pltpu.VMEM((S_, 3 * D_MODEL), jnp.bfloat16)],
        ),
        compiler_params=pltpu.CompilerParams(
            dimension_semantics=("parallel",)),    # batch split across TCs on v7x
    )(
        input_ids.reshape(B_, S_, 1).astype(jnp.int32),
        dec_ids.reshape(B_, T_, 1).astype(jnp.int32),
        labels.reshape(B_, T_, 1).astype(jnp.int32),
        attention_mask.reshape(B_, 1, S_).astype(jnp.float32),
        *kparams,
    )
    loss = jnp.sum(loss_parts) / (B_ * T_)         # mean token CE, finished in XLA
    return loss, logits


# ------------------------- deterministic params -------------------------
def init_params(key, seq_len):
    ks = iter(jax.random.split(key, 40))
    n = lambda shape, s=0.02: (s * jax.random.normal(next(ks), shape)).astype(jnp.float32)
    ones = lambda d: jnp.ones((1, d), jnp.float32)

    def block(cross=False):
        p = {
            "ln1": ones(D_MODEL),
            "wq": n((D_MODEL, N_HEADS * D_HEAD)),
            "wk": n((D_MODEL, N_HEADS * D_HEAD)),
            "wv": n((D_MODEL, N_HEADS * D_HEAD)),
            "wo": n((N_HEADS * D_HEAD, D_MODEL)),
            "rel_bias": n((N_HEADS, seq_len, seq_len), 0.1),
            "ln2": ones(D_MODEL),
            "wi": n((D_MODEL, D_FF)),
            "wo_ff": n((D_FF, D_MODEL)),
        }
        if cross:
            p.update({
                "ln_x": ones(D_MODEL),
                "cq": n((D_MODEL, N_HEADS * D_HEAD)),
                "ck": n((D_MODEL, N_HEADS * D_HEAD)),
                "cv": n((D_MODEL, N_HEADS * D_HEAD)),
                "co": n((N_HEADS * D_HEAD, D_MODEL)),
            })
        return p

    return {
        "embed": n((VOCAB, D_MODEL), 1.0),
        "enc": block(False),
        "enc_final_ln": ones(D_MODEL),
        "dec": block(True),
        "dec_final_ln": ones(D_MODEL),
    }


def prepare_kernel_params(params):
    """One-time weight prep: concat QKV / cross-KV, transpose tied embedding for
    the lm_head, pre-reshape rel bias to the (H*S, S) sublane stack, cast matmul
    weights to bf16 (norm gammas & biases stay f32)."""
    bf = lambda a: a.astype(jnp.bfloat16)
    rb2 = lambda a: a.reshape(-1, a.shape[-1])          # (H, S, S) -> (H*S, S)
    e, d = params["enc"], params["dec"]
    emb = params["embed"]
    return (
        bf(emb), bf(emb.T),
        # encoder
        e["ln1"], bf(jnp.concatenate([e["wq"], e["wk"], e["wv"]], axis=1)), bf(e["wo"]),
        rb2(e["rel_bias"]), e["ln2"], bf(e["wi"]), bf(e["wo_ff"]), params["enc_final_ln"],
        # decoder
        d["ln1"], bf(jnp.concatenate([d["wq"], d["wk"], d["wv"]], axis=1)), bf(d["wo"]),
        rb2(d["rel_bias"]), d["ln_x"], bf(d["cq"]),
        bf(jnp.concatenate([d["ck"], d["cv"]], axis=1)), bf(d["co"]),
        d["ln2"], bf(d["wi"]), bf(d["wo_ff"]), params["dec_final_ln"],
    )


# ------------------------- main -------------------------
if __name__ == "__main__":
    B, S = 2, 8  # batch=2, seq=8 (labels also length 8)
    key = jax.random.PRNGKey(0)
    k_p, k_ids, k_lbl = jax.random.split(key, 3)

    params = init_params(k_p, S)
    kparams = prepare_kernel_params(params)

    input_ids = jax.random.randint(k_ids, (B, S), 1, VOCAB, dtype=jnp.int32)
    attention_mask = jnp.ones((B, S), jnp.int32).at[1, -2:].set(0)  # pad tail of row 1
    labels = jax.random.randint(k_lbl, (B, S), 1, VOCAB, dtype=jnp.int32)

    fwd = jax.jit(functools.partial(t5_forward, kparams))
    loss, logits = fwd(input_ids, attention_mask, labels)
    jax.block_until_ready((loss, logits))

    assert logits.shape == (B, S, VOCAB)
    assert bool(jnp.isfinite(loss))
    print("KERNEL_OK")
</pallas_src>

<mosaic_0001>
module attributes {stable_mosaic.version = 11 : i64} {
  func.func @_t5_kernel(%arg0: i32, %arg1: memref<1x8x1xi32, #tpu.memory_space<vmem>>, %arg2: memref<1x8x1xi32, #tpu.memory_space<vmem>>, %arg3: memref<1x8x1xi32, #tpu.memory_space<vmem>>, %arg4: memref<1x1x8xf32, #tpu.memory_space<vmem>>, %arg5: memref<128x64xbf16, #tpu.memory_space<vmem>>, %arg6: memref<64x128xbf16, #tpu.memory_space<vmem>>, %arg7: memref<1x64xf32, #tpu.memory_space<vmem>>, %arg8: memref<64x192xbf16, #tpu.memory_space<vmem>>, %arg9: memref<64x64xbf16, #tpu.memory_space<vmem>>, %arg10: memref<32x8xf32, #tpu.memory_space<vmem>>, %arg11: memref<1x64xf32, #tpu.memory_space<vmem>>, %arg12: memref<64x128xbf16, #tpu.memory_space<vmem>>, %arg13: memref<128x64xbf16, #tpu.memory_space<vmem>>, %arg14: memref<1x64xf32, #tpu.memory_space<vmem>>, %arg15: memref<1x64xf32, #tpu.memory_space<vmem>>, %arg16: memref<64x192xbf16, #tpu.memory_space<vmem>>, %arg17: memref<64x64xbf16, #tpu.memory_space<vmem>>, %arg18: memref<32x8xf32, #tpu.memory_space<vmem>>, %arg19: memref<1x64xf32, #tpu.memory_space<vmem>>, %arg20: memref<64x64xbf16, #tpu.memory_space<vmem>>, %arg21: memref<64x128xbf16, #tpu.memory_space<vmem>>, %arg22: memref<64x64xbf16, #tpu.memory_space<vmem>>, %arg23: memref<1x64xf32, #tpu.memory_space<vmem>>, %arg24: memref<64x128xbf16, #tpu.memory_space<vmem>>, %arg25: memref<128x64xbf16, #tpu.memory_space<vmem>>, %arg26: memref<1x64xf32, #tpu.memory_space<vmem>>, %arg27: memref<1x8x128xf32, #tpu.memory_space<vmem>>, %arg28: memref<1x1x1xf32, #tpu.memory_space<vmem>>, %arg29: memref<8x192xbf16, #tpu.memory_space<vmem>>) attributes {dimension_semantics = [#tpu.dimension_semantics<parallel>], iteration_bounds = array<i64: 2>, scalar_prefetch = 0 : i64, scratch_operands = 1 : i64, tpu.core_type = #tpu.core_type<tc>, window_params = [{transform_indices = @transform_0, window_bounds = array<i64: 1, 8, 1>}, {transform_indices = @transform_1, window_bounds = array<i64: 1, 8, 1>}, {transform_indices = @transform_2, window_bounds = array<i64: 1, 8, 1>}, {transform_indices = @transform_3, window_bounds = array<i64: 1, 1, 8>}, {pipeline_mode = #tpu.pipeline_mode<synchronous>, transform_indices = @transform_4, window_bounds = array<i64: 128, 64>}, {pipeline_mode = #tpu.pipeline_mode<synchronous>, transform_indices = @transform_5, window_bounds = array<i64: 64, 128>}, {pipeline_mode = #tpu.pipeline_mode<synchronous>, transform_indices = @transform_6, window_bounds = array<i64: 1, 64>}, {pipeline_mode = #tpu.pipeline_mode<synchronous>, transform_indices = @transform_7, window_bounds = array<i64: 64, 192>}, {pipeline_mode = #tpu.pipeline_mode<synchronous>, transform_indices = @transform_8, window_bounds = array<i64: 64, 64>}, {pipeline_mode = #tpu.pipeline_mode<synchronous>, transform_indices = @transform_9, window_bounds = array<i64: 32, 8>}, {pipeline_mode = #tpu.pipeline_mode<synchronous>, transform_indices = @transform_10, window_bounds = array<i64: 1, 64>}, {pipeline_mode = #tpu.pipeline_mode<synchronous>, transform_indices = @transform_11, window_bounds = array<i64: 64, 128>}, {pipeline_mode = #tpu.pipeline_mode<synchronous>, transform_indices = @transform_12, window_bounds = array<i64: 128, 64>}, {pipeline_mode = #tpu.pipeline_mode<synchronous>, transform_indices = @transform_13, window_bounds = array<i64: 1, 64>}, {pipeline_mode = #tpu.pipeline_mode<synchronous>, transform_indices = @transform_14, window_bounds = array<i64: 1, 64>}, {pipeline_mode = #tpu.pipeline_mode<synchronous>, transform_indices = @transform_15, window_bounds = array<i64: 64, 192>}, {pipeline_mode = #tpu.pipeline_mode<synchronous>, transform_indices = @transform_16, window_bounds = array<i64: 64, 64>}, {pipeline_mode = #tpu.pipeline_mode<synchronous>, transform_indices = @transform_17, window_bounds = array<i64: 32, 8>}, {pipeline_mode = #tpu.pipeline_mode<synchronous>, transform_indices = @transform_18, window_bounds = array<i64: 1, 64>}, {pipeline_mode = #tpu.pipeline_mode<synchronous>, transform_indices = @transform_19, window_bounds = array<i64: 64, 64>}, {pipeline_mode = #tpu.pipeline_mode<synchronous>, transform_indices = @transform_20, window_bounds = array<i64: 64, 128>}, {pipeline_mode = #tpu.pipeline_mode<synchronous>, transform_indices = @transform_21, window_bounds = array<i64: 64, 64>}, {pipeline_mode = #tpu.pipeline_mode<synchronous>, transform_indices = @transform_22, window_bounds = array<i64: 1, 64>}, {pipeline_mode = #tpu.pipeline_mode<synchronous>, transform_indices = @transform_23, window_bounds = array<i64: 64, 128>}, {pipeline_mode = #tpu.pipeline_mode<synchronous>, transform_indices = @transform_24, window_bounds = array<i64: 128, 64>}, {pipeline_mode = #tpu.pipeline_mode<synchronous>, transform_indices = @transform_25, window_bounds = array<i64: 1, 64>}, {transform_indices = @transform_26, window_bounds = array<i64: 1, 8, 128>}, {transform_indices = @transform_27, window_bounds = array<i64: 1, 1, 1>}]} {
    %0 = tpu.iota {dimensions = array<i32: 1>} : vector<8x128xi32>
    %c0 = arith.constant 0 : index
    %c0_0 = arith.constant 0 : index
    %1 = vector.load %arg5[%c0, %c0_0] : memref<128x64xbf16, #tpu.memory_space<vmem>>, vector<128x64xbf16>
    %c0_1 = arith.constant 0 : index
    %c0_2 = arith.constant 0 : index
    %c0_3 = arith.constant 0 : index
    %2 = vector.load %arg4[%c0_1, %c0_2, %c0_3] : memref<1x1x8xf32, #tpu.memory_space<vmem>>, vector<1x1x8xf32>
    %3 = vector.shape_cast %2 : vector<1x1x8xf32> to vector<1x8xf32>
    %cst = arith.constant 1.000000e+00 : f32
    %4 = vector.broadcast %cst : f32 to vector<1x8xf32>
    %5 = arith.subf %4, %3 : vector<1x8xf32>
    %cst_4 = arith.constant -1.000000e+09 : f32
    %6 = vector.broadcast %cst_4 : f32 to vector<1x8xf32>
    %7 = arith.mulf %5, %6 : vector<1x8xf32>
    %c0_5 = arith.constant 0 : index
    %c0_6 = arith.constant 0 : index
    %c0_7 = arith.constant 0 : index
    %8 = vector.load %arg1[%c0_5, %c0_6, %c0_7] : memref<1x8x1xi32, #tpu.memory_space<vmem>>, vector<1x8x1xi32>
    %9 = vector.shape_cast %8 : vector<1x8x1xi32> to vector<8x1xi32>
    %10 = vector.broadcast %9 : vector<8x1xi32> to vector<8x128xi32>
    %11 = arith.cmpi eq, %0, %10 : vector<8x128xi32>
    %12 = arith.extui %11 : vector<8x128xi1> to vector<8x128xi32>
    %13 = arith.sitofp %12 : vector<8x128xi32> to vector<8x128xf32>
    %14 = arith.truncf %13 : vector<8x128xf32> to vector<8x128xbf16>
    %cst_8 = arith.constant dense<0.000000e+00> : vector<8x64xf32>
    %15 = tpu.matmul %14, %1, %cst_8 {dimension_numbers = #tpu.dot_dimension_numbers<[1], [0], [0], [1], [0, 0, 1, 1], [], []>} : vector<8x128xbf16>, vector<128x64xbf16>, vector<8x64xf32> -> vector<8x64xf32>
    %c0_9 = arith.constant 0 : index
    %c0_10 = arith.constant 0 : index
    %16 = vector.load %arg10[%c0_9, %c0_10] : memref<32x8xf32, #tpu.memory_space<vmem>>, vector<32x8xf32>
    %17 = vector.broadcast %7 : vector<1x8xf32> to vector<32x8xf32>
    %18 = arith.addf %16, %17 : vector<32x8xf32>
    %c0_11 = arith.constant 0 : index
    %c0_12 = arith.constant 0 : index
    %19 = vector.load %arg7[%c0_11, %c0_12] : memref<1x64xf32, #tpu.memory_space<vmem>>, vector<1x64xf32>
    %20 = arith.mulf %15, %15 : vector<8x64xf32>
    %cst_13 = arith.constant dense<0.000000e+00> : vector<8xf32>
    %21 = vector.multi_reduction <add>, %20, %cst_13 [1] : vector<8x64xf32> to vector<8xf32>
    %22 = vector.shape_cast %21 : vector<8xf32> to vector<8x1xf32>
    %cst_14 = arith.constant 6.400000e+01 : f32
    %23 = vector.broadcast %cst_14 : f32 to vector<8x1xf32>
    %24 = arith.divf %22, %23 : vector<8x1xf32>
    %cst_15 = arith.constant 9.99999997E-7 : f32
    %25 = vector.broadcast %cst_15 : f32 to vector<8x1xf32>
    %26 = arith.addf %24, %25 : vector<8x1xf32>
    %27 = math.rsqrt %26 : vector<8x1xf32>
    %28 = vector.broadcast %27 : vector<8x1xf32> to vector<8x64xf32>
    %29 = arith.mulf %15, %28 : vector<8x64xf32>
    %30 = vector.broadcast %19 : vector<1x64xf32> to vector<8x64xf32>
    %31 = arith.mulf %29, %30 : vector<8x64xf32>
    %c0_16 = arith.constant 0 : index
    %c0_17 = arith.constant 0 : index
    %32 = vector.load %arg8[%c0_16, %c0_17] : memref<64x192xbf16, #tpu.memory_space<vmem>>, vector<64x192xbf16>
    %33 = arith.truncf %31 : vector<8x64xf32> to vector<8x64xbf16>
    %cst_18 = arith.constant dense<0.000000e+00> : vector<8x192xf32>
    %34 = tpu.matmul %33, %32, %cst_18 {dimension_numbers = #tpu.dot_dimension_numbers<[1], [0], [0], [1], [0, 0, 1, 1], [], []>} : vector<8x64xbf16>, vector<64x192xbf16>, vector<8x192xf32> -> vector<8x192xf32>
    %35 = arith.truncf %34 : vector<8x192xf32> to vector<8x192xbf16>
    %c0_19 = arith.constant 0 : index
    %c0_20 = arith.constant 0 : index
    %36 = vector.load %arg29[%c0_19, %c0_20] : memref<8x192xbf16, #tpu.memory_space<vmem>>, vector<8x192xbf16>
    tpu.vector_store %arg29[%c0_19, %c0_20], %35 {strides = array<i32>} : memref<8x192xbf16, #tpu.memory_space<vmem>>, vector<8x192xbf16>,
    %c0_21 = arith.constant 0 : index
    %c0_22 = arith.constant 0 : index
    %37 = vector.load %arg29[%c0_21, %c0_22] : memref<8x192xbf16, #tpu.memory_space<vmem>>, vector<8x16xbf16>
    %c0_23 = arith.constant 0 : index
    %c64 = arith.constant 64 : index
    %38 = vector.load %arg29[%c0_23, %c64] : memref<8x192xbf16, #tpu.memory_space<vmem>>, vector<8x16xbf16>
    "tpu.trace_start"() <{level = 10 : i32, message = "qd,kd->qk"}> : () -> ()
    %cst_24 = arith.constant dense<0.000000e+00> : vector<8x8xf32>
    %39 = tpu.matmul %37, %38, %cst_24 {dimension_numbers = #tpu.dot_dimension_numbers<[1], [1], [0], [0], [0, 0, 1, 0], [], []>} : vector<8x16xbf16>, vector<8x16xbf16>, vector<8x8xf32> -> vector<8x8xf32>
    "tpu.trace_stop"() : () -> ()
    %c0_25 = arith.constant 0 : index
    %c16 = arith.constant 16 : index
    %40 = vector.load %arg29[%c0_25, %c16] : memref<8x192xbf16, #tpu.memory_space<vmem>>, vector<8x16xbf16>
    %c0_26 = arith.constant 0 : index
    %c80 = arith.constant 80 : index
    %41 = vector.load %arg29[%c0_26, %c80] : memref<8x192xbf16, #tpu.memory_space<vmem>>, vector<8x16xbf16>
    "tpu.trace_start"() <{level = 10 : i32, message = "qd,kd->qk"}> : () -> ()
    %cst_27 = arith.constant dense<0.000000e+00> : vector<8x8xf32>
    %42 = tpu.matmul %40, %41, %cst_27 {dimension_numbers = #tpu.dot_dimension_numbers<[1], [1], [0], [0], [0, 0, 1, 0], [], []>} : vector<8x16xbf16>, vector<8x16xbf16>, vector<8x8xf32> -> vector<8x8xf32>
    "tpu.trace_stop"() : () -> ()
    %c0_28 = arith.constant 0 : index
    %c32 = arith.constant 32 : index
    %43 = vector.load %arg29[%c0_28, %c32] : memref<8x192xbf16, #tpu.memory_space<vmem>>, vector<8x16xbf16>
    %c0_29 = arith.constant 0 : index
    %c96 = arith.constant 96 : index
    %44 = vector.load %arg29[%c0_29, %c96] : memref<8x192xbf16, #tpu.memory_space<vmem>>, vector<8x16xbf16>
    "tpu.trace_start"() <{level = 10 : i32, message = "qd,kd->qk"}> : () -> ()
    %cst_30 = arith.constant dense<0.000000e+00> : vector<8x8xf32>
    %45 = tpu.matmul %43, %44, %cst_30 {dimension_numbers = #tpu.dot_dimension_numbers<[1], [1], [0], [0], [0, 0, 1, 0], [], []>} : vector<8x16xbf16>, vector<8x16xbf16>, vector<8x8xf32> -> vector<8x8xf32>
    "tpu.trace_stop"() : () -> ()
    %c0_31 = arith.constant 0 : index
    %c48 = arith.constant 48 : index
    %46 = vector.load %arg29[%c0_31, %c48] : memref<8x192xbf16, #tpu.memory_space<vmem>>, vector<8x16xbf16>
    %c0_32 = arith.constant 0 : index
    %c112 = arith.constant 112 : index
    %47 = vector.load %arg29[%c0_32, %c112] : memref<8x192xbf16, #tpu.memory_space<vmem>>, vector<8x16xbf16>
    "tpu.trace_start"() <{level = 10 : i32, message = "qd,kd->qk"}> : () -> ()
    %cst_33 = arith.constant dense<0.000000e+00> : vector<8x8xf32>
    %48 = tpu.matmul %46, %47, %cst_33 {dimension_numbers = #tpu.dot_dimension_numbers<[1], [1], [0], [0], [0, 0, 1, 0], [], []>} : vector<8x16xbf16>, vector<8x16xbf16>, vector<8x8xf32> -> vector<8x8xf32>
    "tpu.trace_stop"() : () -> ()
    %49 = tpu.concatenate %39, %42, %45, %48 in 0 : vector<8x8xf32>, vector<8x8xf32>, vector<8x8xf32>, vector<8x8xf32> -> vector<32x8xf32>
    %50 = arith.addf %49, %18 : vector<32x8xf32>
    %cst_34 = arith.constant dense<0xFF800000> : vector<32xf32>
    %51 = vector.multi_reduction <maximumf>, %50, %cst_34 [1] : vector<32x8xf32> to vector<32xf32>
    %52 = vector.shape_cast %51 : vector<32xf32> to vector<32x1xf32>
    %53 = vector.broadcast %52 : vector<32x1xf32> to vector<32x8xf32>
    %54 = arith.subf %50, %53 : vector<32x8xf32>
    %55 = math.exp %54 : vector<32x8xf32>
    %cst_35 = arith.constant dense<0.000000e+00> : vector<32xf32>
    %56 = vector.multi_reduction <add>, %55, %cst_35 [1] : vector<32x8xf32> to vector<32xf32>
    %57 = vector.shape_cast %56 : vector<32xf32> to vector<32x1xf32>
    %58 = tpu.reciprocal %57 {approx = true} : vector<32x1xf32> -> vector<32x1xf32>
    %59 = vector.broadcast %58 : vector<32x1xf32> to vector<32x8xf32>
    %60 = arith.mulf %55, %59 : vector<32x8xf32>
    %c0_36 = arith.constant 0 : index
    %c128 = arith.constant 128 : index
    %61 = vector.load %arg29[%c0_36, %c128] : memref<8x192xbf16, #tpu.memory_space<vmem>>, vector<8x16xbf16>
    %62 = vector.extract_strided_slice %60 {offsets = [0, 0], sizes = [8, 8], strides = [1, 1]} : vector<32x8xf32> to vector<8x8xf32>
    %63 = arith.truncf %62 : vector<8x8xf32> to vector<8x8xbf16>
    %cst_37 = arith.constant dense<0.000000e+00> : vector<8x16xf32>
    %64 = tpu.matmul %63, %61, %cst_37 {dimension_numbers = #tpu.dot_dimension_numbers<[1], [0], [0], [1], [0, 0, 1, 1], [], []>} : vector<8x8xbf16>, vector<8x16xbf16>, vector<8x16xf32> -> vector<8x16xf32>
    %c0_38 = arith.constant 0 : index
    %c144 = arith.constant 144 : index
    %65 = vector.load %arg29[%c0_38, %c144] : memref<8x192xbf16, #tpu.memory_space<vmem>>, vector<8x16xbf16>
    %66 = vector.extract_strided_slice %60 {offsets = [8, 0], sizes = [8, 8], strides = [1, 1]} : vector<32x8xf32> to vector<8x8xf32>
    %67 = arith.truncf %66 : vector<8x8xf32> to vector<8x8xbf16>
    %cst_39 = arith.constant dense<0.000000e+00> : vector<8x16xf32>
    %68 = tpu.matmul %67, %65, %cst_39 {dimension_numbers = #tpu.dot_dimension_numbers<[1], [0], [0], [1], [0, 0, 1, 1], [], []>} : vector<8x8xbf16>, vector<8x16xbf16>, vector<8x16xf32> -> vector<8x16xf32>
    %c0_40 = arith.constant 0 : index
    %c160 = arith.constant 160 : index
    %69 = vector.load %arg29[%c0_40, %c160] : memref<8x192xbf16, #tpu.memory_space<vmem>>, vector<8x16xbf16>
    %70 = vector.extract_strided_slice %60 {offsets = [16, 0], sizes = [8, 8], strides = [1, 1]} : vector<32x8xf32> to vector<8x8xf32>
    %71 = arith.truncf %70 : vector<8x8xf32> to vector<8x8xbf16>
    %cst_41 = arith.constant dense<0.000000e+00> : vector<8x16xf32>
    %72 = tpu.matmul %71, %69, %cst_41 {dimension_numbers = #tpu.dot_dimension_numbers<[1], [0], [0], [1], [0, 0, 1, 1], [], []>} : vector<8x8xbf16>, vector<8x16xbf16>, vector<8x16xf32> -> vector<8x16xf32>
    %c0_42 = arith.constant 0 : index
    %c176 = arith.constant 176 : index
    %73 = vector.load %arg29[%c0_42, %c176] : memref<8x192xbf16, #tpu.memory_space<vmem>>, vector<8x16xbf16>
    %74 = vector.extract_strided_slice %60 {offsets = [24, 0], sizes = [8, 8], strides = [1, 1]} : vector<32x8xf32> to vector<8x8xf32>
    %75 = arith.truncf %74 : vector<8x8xf32> to vector<8x8xbf16>
    %cst_43 = arith.constant dense<0.000000e+00> : vector<8x16xf32>
    %76 = tpu.matmul %75, %73, %cst_43 {dimension_numbers = #tpu.dot_dimension_numbers<[1], [0], [0], [1], [0, 0, 1, 1], [], []>} : vector<8x8xbf16>, vector<8x16xbf16>, vector<8x16xf32> -> vector<8x16xf32>
    %77 = tpu.concatenate %64, %68, %72, %76 in 1 : vector<8x16xf32>, vector<8x16xf32>, vector<8x16xf32>, vector<8x16xf32> -> vector<8x64xf32>
    %c0_44 = arith.constant 0 : index
    %c0_45 = arith.constant 0 : index
    %78 = vector.load %arg9[%c0_44, %c0_45] : memref<64x64xbf16, #tpu.memory_space<vmem>>, vector<64x64xbf16>
    %79 = arith.truncf %77 : vector<8x64xf32> to vector<8x64xbf16>
    %cst_46 = arith.constant dense<0.000000e+00> : vector<8x64xf32>
    %80 = tpu.matmul %79, %78, %cst_46 {dimension_numbers = #tpu.dot_dimension_numbers<[1], [0], [0], [1], [0, 0, 1, 1], [], []>} : vector<8x64xbf16>, vector<64x64xbf16>, vector<8x64xf32> -> vector<8x64xf32>
    %81 = arith.addf %15, %80 : vector<8x64xf32>
    %c0_47 = arith.constant 0 : index
    %c0_48 = arith.constant 0 : index
    %82 = vector.load %arg11[%c0_47, %c0_48] : memref<1x64xf32, #tpu.memory_space<vmem>>, vector<1x64xf32>
    %83 = arith.mulf %81, %81 : vector<8x64xf32>
    %cst_49 = arith.constant dense<0.000000e+00> : vector<8xf32>
    %84 = vector.multi_reduction <add>, %83, %cst_49 [1] : vector<8x64xf32> to vector<8xf32>
    %85 = vector.shape_cast %84 : vector<8xf32> to vector<8x1xf32>
    %cst_50 = arith.constant 6.400000e+01 : f32
    %86 = vector.broadcast %cst_50 : f32 to vector<8x1xf32>
    %87 = arith.divf %85, %86 : vector<8x1xf32>
    %cst_51 = arith.constant 9.99999997E-7 : f32
    %88 = vector.broadcast %cst_51 : f32 to vector<8x1xf32>
    %89 = arith.addf %87, %88 : vector<8x1xf32>
    %90 = math.rsqrt %89 : vector<8x1xf32>
    %91 = vector.broadcast %90 : vector<8x1xf32> to vector<8x64xf32>
    %92 = arith.mulf %81, %91 : vector<8x64xf32>
    %93 = vector.broadcast %82 : vector<1x64xf32> to vector<8x64xf32>
    %94 = arith.mulf %92, %93 : vector<8x64xf32>
    %c0_52 = arith.constant 0 : index
    %c0_53 = arith.constant 0 : index
    %95 = vector.load %arg12[%c0_52, %c0_53] : memref<64x128xbf16, #tpu.memory_space<vmem>>, vector<64x128xbf16>
    %96 = arith.truncf %94 : vector<8x64xf32> to vector<8x64xbf16>
    %cst_54 = arith.constant dense<0.000000e+00> : vector<8x128xf32>
    %97 = tpu.matmul %96, %95, %cst_54 {dimension_numbers = #tpu.dot_dimension_numbers<[1], [0], [0], [1], [0, 0, 1, 1], [], []>} : vector<8x64xbf16>, vector<64x128xbf16>, vector<8x128xf32> -> vector<8x128xf32>
    %cst_55 = arith.constant 0.000000e+00 : f32
    %98 = vector.broadcast %cst_55 : f32 to vector<8x128xf32>
    %99 = arith.maximumf %97, %98 : vector<8x128xf32>
    %c0_56 = arith.constant 0 : index
    %c0_57 = arith.constant 0 : index
    %100 = vector.load %arg13[%c0_56, %c0_57] : memref<128x64xbf16, #tpu.memory_space<vmem>>, vector<128x64xbf16>
    %101 = arith.truncf %99 : vector<8x128xf32> to vector<8x128xbf16>
    %cst_58 = arith.constant dense<0.000000e+00> : vector<8x64xf32>
    %102 = tpu.matmul %101, %100, %cst_58 {dimension_numbers = #tpu.dot_dimension_numbers<[1], [0], [0], [1], [0, 0, 1, 1], [], []>} : vector<8x128xbf16>, vector<128x64xbf16>, vector<8x64xf32> -> vector<8x64xf32>
    %103 = arith.addf %81, %102 : vector<8x64xf32>
    %c0_59 = arith.constant 0 : index
    %c0_60 = arith.constant 0 : index
    %104 = vector.load %arg14[%c0_59, %c0_60] : memref<1x64xf32, #tpu.memory_space<vmem>>, vector<1x64xf32>
    %105 = arith.mulf %103, %103 : vector<8x64xf32>
    %cst_61 = arith.constant dense<0.000000e+00> : vector<8xf32>
    %106 = vector.multi_reduction <add>, %105, %cst_61 [1] : vector<8x64xf32> to vector<8xf32>
    %107 = vector.shape_cast %106 : vector<8xf32> to vector<8x1xf32>
    %cst_62 = arith.constant 6.400000e+01 : f32
    %108 = vector.broadcast %cst_62 : f32 to vector<8x1xf32>
    %109 = arith.divf %107, %108 : vector<8x1xf32>
    %cst_63 = arith.constant 9.99999997E-7 : f32
    %110 = vector.broadcast %cst_63 : f32 to vector<8x1xf32>
    %111 = arith.addf %109, %110 : vector<8x1xf32>
    %112 = math.rsqrt %111 : vector<8x1xf32>
    %113 = vector.broadcast %112 : vector<8x1xf32> to vector<8x64xf32>
    %114 = arith.mulf %103, %113 : vector<8x64xf32>
    %115 = vector.broadcast %104 : vector<1x64xf32> to vector<8x64xf32>
    %116 = arith.mulf %114, %115 : vector<8x64xf32>
    %c0_64 = arith.constant 0 : index
    %c0_65 = arith.constant 0 : index
    %c0_66 = arith.constant 0 : index
    %117 = vector.load %arg2[%c0_64, %c0_65, %c0_66] : memref<1x8x1xi32, #tpu.memory_space<vmem>>, vector<1x8x1xi32>
    %118 = vector.shape_cast %117 : vector<1x8x1xi32> to vector<8x1xi32>
    %119 = vector.broadcast %118 : vector<8x1xi32> to vector<8x128xi32>
    %120 = arith.cmpi eq, %0, %119 : vector<8x128xi32>
    %121 = arith.extui %120 : vector<8x128xi1> to vector<8x128xi32>
    %122 = arith.sitofp %121 : vector<8x128xi32> to vector<8x128xf32>
    %123 = arith.truncf %122 : vector<8x128xf32> to vector<8x128xbf16>
    %cst_67 = arith.constant dense<0.000000e+00> : vector<8x64xf32>
    %124 = tpu.matmul %123, %1, %cst_67 {dimension_numbers = #tpu.dot_dimension_numbers<[1], [0], [0], [1], [0, 0, 1, 1], [], []>} : vector<8x128xbf16>, vector<128x64xbf16>, vector<8x64xf32> -> vector<8x64xf32>
    %125 = tpu.iota {dimensions = array<i32: 0>} : vector<8x8xi32>
    %126 = tpu.iota {dimensions = array<i32: 1>} : vector<8x8xi32>
    %127 = arith.cmpi sle, %126, %125 : vector<8x8xi32>
    %cst_68 = arith.constant 0.000000e+00 : f32
    %cst_69 = arith.constant -1.000000e+09 : f32
    %128 = vector.broadcast %cst_68 : f32 to vector<8x8xf32>
    %129 = vector.broadcast %cst_69 : f32 to vector<8x8xf32>
    %130 = arith.select %127, %128, %129 : vector<8x8xi1>, vector<8x8xf32>
    %c0_70 = arith.constant 0 : index
    %c0_71 = arith.constant 0 : index
    %131 = vector.load %arg18[%c0_70, %c0_71] : memref<32x8xf32, #tpu.memory_space<vmem>>, vector<32x8xf32>
    %132 = tpu.concatenate %130, %130, %130, %130 in 0 : vector<8x8xf32>, vector<8x8xf32>, vector<8x8xf32>, vector<8x8xf32> -> vector<32x8xf32>
    %133 = arith.addf %131, %132 : vector<32x8xf32>
    %c0_72 = arith.constant 0 : index
    %c0_73 = arith.constant 0 : index
    %134 = vector.load %arg15[%c0_72, %c0_73] : memref<1x64xf32, #tpu.memory_space<vmem>>, vector<1x64xf32>
    %135 = arith.mulf %124, %124 : vector<8x64xf32>
    %cst_74 = arith.constant dense<0.000000e+00> : vector<8xf32>
    %136 = vector.multi_reduction <add>, %135, %cst_74 [1] : vector<8x64xf32> to vector<8xf32>
    %137 = vector.shape_cast %136 : vector<8xf32> to vector<8x1xf32>
    %cst_75 = arith.constant 6.400000e+01 : f32
    %138 = vector.broadcast %cst_75 : f32 to vector<8x1xf32>
    %139 = arith.divf %137, %138 : vector<8x1xf32>
    %cst_76 = arith.constant 9.99999997E-7 : f32
    %140 = vector.broadcast %cst_76 : f32 to vector<8x1xf32>
    %141 = arith.addf %139, %140 : vector<8x1xf32>
    %142 = math.rsqrt %141 : vector<8x1xf32>
    %143 = vector.broadcast %142 : vector<8x1xf32> to vector<8x64xf32>
    %144 = arith.mulf %124, %143 : vector<8x64xf32>
    %145 = vector.broadcast %134 : vector<1x64xf32> to vector<8x64xf32>
    %146 = arith.mulf %144, %145 : vector<8x64xf32>
    %c0_77 = arith.constant 0 : index
    %c0_78 = arith.constant 0 : index
    %147 = vector.load %arg16[%c0_77, %c0_78] : memref<64x192xbf16, #tpu.memory_space<vmem>>, vector<64x192xbf16>
    %148 = arith.truncf %146 : vector<8x64xf32> to vector<8x64xbf16>
    %cst_79 = arith.constant dense<0.000000e+00> : vector<8x192xf32>
    %149 = tpu.matmul %148, %147, %cst_79 {dimension_numbers = #tpu.dot_dimension_numbers<[1], [0], [0], [1], [0, 0, 1, 1], [], []>} : vector<8x64xbf16>, vector<64x192xbf16>, vector<8x192xf32> -> vector<8x192xf32>
    %150 = arith.truncf %149 : vector<8x192xf32> to vector<8x192xbf16>
    %c0_80 = arith.constant 0 : index
    %c0_81 = arith.constant 0 : index
    %151 = vector.load %arg29[%c0_80, %c0_81] : memref<8x192xbf16, #tpu.memory_space<vmem>>, vector<8x192xbf16>
    tpu.vector_store %arg29[%c0_80, %c0_81], %150 {strides = array<i32>} : memref<8x192xbf16, #tpu.memory_space<vmem>>, vector<8x192xbf16>,
    %c0_82 = arith.constant 0 : index
    %c0_83 = arith.constant 0 : index
    %152 = vector.load %arg29[%c0_82, %c0_83] : memref<8x192xbf16, #tpu.memory_space<vmem>>, vector<8x16xbf16>
    %c0_84 = arith.constant 0 : index
    %c64_85 = arith.constant 64 : index
    %153 = vector.load %arg29[%c0_84, %c64_85] : memref<8x192xbf16, #tpu.memory_space<vmem>>, vector<8x16xbf16>
    "tpu.trace_start"() <{level = 10 : i32, message = "qd,kd->qk"}> : () -> ()
    %cst_86 = arith.constant dense<0.000000e+00> : vector<8x8xf32>
    %154 = tpu.matmul %152, %153, %cst_86 {dimension_numbers = #tpu.dot_dimension_numbers<[1], [1], [0], [0], [0, 0, 1, 0], [], []>} : vector<8x16xbf16>, vector<8x16xbf16>, vector<8x8xf32> -> vector<8x8xf32>
    "tpu.trace_stop"() : () -> ()
    %c0_87 = arith.constant 0 : index
    %c16_88 = arith.constant 16 : index
    %155 = vector.load %arg29[%c0_87, %c16_88] : memref<8x192xbf16, #tpu.memory_space<vmem>>, vector<8x16xbf16>
    %c0_89 = arith.constant 0 : index
    %c80_90 = arith.constant 80 : index
    %156 = vector.load %arg29[%c0_89, %c80_90] : memref<8x192xbf16, #tpu.memory_space<vmem>>, vector<8x16xbf16>
    "tpu.trace_start"() <{level = 10 : i32, message = "qd,kd->qk"}> : () -> ()
    %cst_91 = arith.constant dense<0.000000e+00> : vector<8x8xf32>
    %157 = tpu.matmul %155, %156, %cst_91 {dimension_numbers = #tpu.dot_dimension_numbers<[1], [1], [0], [0], [0, 0, 1, 0], [], []>} : vector<8x16xbf16>, vector<8x16xbf16>, vector<8x8xf32> -> vector<8x8xf32>
    "tpu.trace_stop"() : () -> ()
    %c0_92 = arith.constant 0 : index
    %c32_93 = arith.constant 32 : index
    %158 = vector.load %arg29[%c0_92, %c32_93] : memref<8x192xbf16, #tpu.memory_space<vmem>>, vector<8x16xbf16>
    %c0_94 = arith.constant 0 : index
    %c96_95 = arith.constant 96 : index
    %159 = vector.load %arg29[%c0_94, %c96_95] : memref<8x192xbf16, #tpu.memory_space<vmem>>, vector<8x16xbf16>
    "tpu.trace_start"() <{level = 10 : i32, message = "qd,kd->qk"}> : () -> ()
    %cst_96 = arith.constant dense<0.000000e+00> : vector<8x8xf32>
    %160 = tpu.matmul %158, %159, %cst_96 {dimension_numbers = #tpu.dot_dimension_numbers<[1], [1], [0], [0], [0, 0, 1, 0], [], []>} : vector<8x16xbf16>, vector<8x16xbf16>, vector<8x8xf32> -> vector<8x8xf32>
    "tpu.trace_stop"() : () -> ()
    %c0_97 = arith.constant 0 : index
    %c48_98 = arith.constant 48 : index
    %161 = vector.load %arg29[%c0_97, %c48_98] : memref<8x192xbf16, #tpu.memory_space<vmem>>, vector<8x16xbf16>
    %c0_99 = arith.constant 0 : index
    %c112_100 = arith.constant 112 : index
    %162 = vector.load %arg29[%c0_99, %c112_100] : memref<8x192xbf16, #tpu.memory_space<vmem>>, vector<8x16xbf16>
    "tpu.trace_start"() <{level = 10 : i32, message = "qd,kd->qk"}> : () -> ()
    %cst_101 = arith.constant dense<0.000000e+00> : vector<8x8xf32>
    %163 = tpu.matmul %161, %162, %cst_101 {dimension_numbers = #tpu.dot_dimension_numbers<[1], [1], [0], [0], [0, 0, 1, 0], [], []>} : vector<8x16xbf16>, vector<8x16xbf16>, vector<8x8xf32> -> vector<8x8xf32>
    "tpu.trace_stop"() : () -> ()
    %164 = tpu.concatenate %154, %157, %160, %163 in 0 : vector<8x8xf32>, vector<8x8xf32>, vector<8x8xf32>, vector<8x8xf32> -> vector<32x8xf32>
    %165 = arith.addf %164, %133 : vector<32x8xf32>
    %cst_102 = arith.constant dense<0xFF800000> : vector<32xf32>
    %166 = vector.multi_reduction <maximumf>, %165, %cst_102 [1] : vector<32x8xf32> to vector<32xf32>
    %167 = vector.shape_cast %166 : vector<32xf32> to vector<32x1xf32>
    %168 = vector.broadcast %167 : vector<32x1xf32> to vector<32x8xf32>
    %169 = arith.subf %165, %168 : vector<32x8xf32>
    %170 = math.exp %169 : vector<32x8xf32>
    %cst_103 = arith.constant dense<0.000000e+00> : vector<32xf32>
    %171 = vector.multi_reduction <add>, %170, %cst_103 [1] : vector<32x8xf32> to vector<32xf32>
    %172 = vector.shape_cast %171 : vector<32xf32> to vector<32x1xf32>
    %173 = tpu.reciprocal %172 {approx = true} : vector<32x1xf32> -> vector<32x1xf32>
    %174 = vector.broadcast %173 : vector<32x1xf32> to vector<32x8xf32>
    %175 = arith.mulf %170, %174 : vector<32x8xf32>
    %c0_104 = arith.constant 0 : index
    %c128_105 = arith.constant 128 : index
    %176 = vector.load %arg29[%c0_104, %c128_105] : memref<8x192xbf16, #tpu.memory_space<vmem>>, vector<8x16xbf16>
    %177 = vector.extract_strided_slice %175 {offsets = [0, 0], sizes = [8, 8], strides = [1, 1]} : vector<32x8xf32> to vector<8x8xf32>
    %178 = arith.truncf %177 : vector<8x8xf32> to vector<8x8xbf16>
    %cst_106 = arith.constant dense<0.000000e+00> : vector<8x16xf32>
    %179 = tpu.matmul %178, %176, %cst_106 {dimension_numbers = #tpu.dot_dimension_numbers<[1], [0], [0], [1], [0, 0, 1, 1], [], []>} : vector<8x8xbf16>, vector<8x16xbf16>, vector<8x16xf32> -> vector<8x16xf32>
    %c0_107 = arith.constant 0 : index
    %c144_108 = arith.constant 144 : index
    %180 = vector.load %arg29[%c0_107, %c144_108] : memref<8x192xbf16, #tpu.memory_space<vmem>>, vector<8x16xbf16>
    %181 = vector.extract_strided_slice %175 {offsets = [8, 0], sizes = [8, 8], strides = [1, 1]} : vector<32x8xf32> to vector<8x8xf32>
    %182 = arith.truncf %181 : vector<8x8xf32> to vector<8x8xbf16>
    %cst_109 = arith.constant dense<0.000000e+00> : vector<8x16xf32>
    %183 = tpu.matmul %182, %180, %cst_109 {dimension_numbers = #tpu.dot_dimension_numbers<[1], [0], [0], [1], [0, 0, 1, 1], [], []>} : vector<8x8xbf16>, vector<8x16xbf16>, vector<8x16xf32> -> vector<8x16xf32>
    %c0_110 = arith.constant 0 : index
    %c160_111 = arith.constant 160 : index
    %184 = vector.load %arg29[%c0_110, %c160_111] : memref<8x192xbf16, #tpu.memory_space<vmem>>, vector<8x16xbf16>
    %185 = vector.extract_strided_slice %175 {offsets = [16, 0], sizes = [8, 8], strides = [1, 1]} : vector<32x8xf32> to vector<8x8xf32>
    %186 = arith.truncf %185 : vector<8x8xf32> to vector<8x8xbf16>
    %cst_112 = arith.constant dense<0.000000e+00> : vector<8x16xf32>
    %187 = tpu.matmul %186, %184, %cst_112 {dimension_numbers = #tpu.dot_dimension_numbers<[1], [0], [0], [1], [0, 0, 1, 1], [], []>} : vector<8x8xbf16>, vector<8x16xbf16>, vector<8x16xf32> -> vector<8x16xf32>
    %c0_113 = arith.constant 0 : index
    %c176_114 = arith.constant 176 : index
    %188 = vector.load %arg29[%c0_113, %c176_114] : memref<8x192xbf16, #tpu.memory_space<vmem>>, vector<8x16xbf16>
    %189 = vector.extract_strided_slice %175 {offsets = [24, 0], sizes = [8, 8], strides = [1, 1]} : vector<32x8xf32> to vector<8x8xf32>
    %190 = arith.truncf %189 : vector<8x8xf32> to vector<8x8xbf16>
    %cst_115 = arith.constant dense<0.000000e+00> : vector<8x16xf32>
    %191 = tpu.matmul %190, %188, %cst_115 {dimension_numbers = #tpu.dot_dimension_numbers<[1], [0], [0], [1], [0, 0, 1, 1], [], []>} : vector<8x8xbf16>, vector<8x16xbf16>, vector<8x16xf32> -> vector<8x16xf32>
    %192 = tpu.concatenate %179, %183, %187, %191 in 1 : vector<8x16xf32>, vector<8x16xf32>, vector<8x16xf32>, vector<8x16xf32> -> vector<8x64xf32>
    %c0_116 = arith.constant 0 : index
    %c0_117 = arith.constant 0 : index
    %193 = vector.load %arg17[%c0_116, %c0_117] : memref<64x64xbf16, #tpu.memory_space<vmem>>, vector<64x64xbf16>
    %194 = arith.truncf %192 : vector<8x64xf32> to vector<8x64xbf16>
    %cst_118 = arith.constant dense<0.000000e+00> : vector<8x64xf32>
    %195 = tpu.matmul %194, %193, %cst_118 {dimension_numbers = #tpu.dot_dimension_numbers<[1], [0], [0], [1], [0, 0, 1, 1], [], []>} : vector<8x64xbf16>, vector<64x64xbf16>, vector<8x64xf32> -> vector<8x64xf32>
    %196 = arith.addf %124, %195 : vector<8x64xf32>
    %c0_119 = arith.constant 0 : index
    %c0_120 = arith.constant 0 : index
    %197 = vector.load %arg19[%c0_119, %c0_120] : memref<1x64xf32, #tpu.memory_space<vmem>>, vector<1x64xf32>
    %198 = arith.mulf %196, %196 : vector<8x64xf32>
    %cst_121 = arith.constant dense<0.000000e+00> : vector<8xf32>
    %199 = vector.multi_reduction <add>, %198, %cst_121 [1] : vector<8x64xf32> to vector<8xf32>
    %200 = vector.shape_cast %199 : vector<8xf32> to vector<8x1xf32>
    %cst_122 = arith.constant 6.400000e+01 : f32
    %201 = vector.broadcast %cst_122 : f32 to vector<8x1xf32>
    %202 = arith.divf %200, %201 : vector<8x1xf32>
    %cst_123 = arith.constant 9.99999997E-7 : f32
    %203 = vector.broadcast %cst_123 : f32 to vector<8x1xf32>
    %204 = arith.addf %202, %203 : vector<8x1xf32>
    %205 = math.rsqrt %204 : vector<8x1xf32>
    %206 = vector.broadcast %205 : vector<8x1xf32> to vector<8x64xf32>
    %207 = arith.mulf %196, %206 : vector<8x64xf32>
    %208 = vector.broadcast %197 : vector<1x64xf32> to vector<8x64xf32>
    %209 = arith.mulf %207, %208 : vector<8x64xf32>
    %c0_124 = arith.constant 0 : index
    %c0_125 = arith.constant 0 : index
    %210 = vector.load %arg20[%c0_124, %c0_125] : memref<64x64xbf16, #tpu.memory_space<vmem>>, vector<64x64xbf16>
    %211 = arith.truncf %209 : vector<8x64xf32> to vector<8x64xbf16>
    %cst_126 = arith.constant dense<0.000000e+00> : vector<8x64xf32>
    %212 = tpu.matmul %211, %210, %cst_126 {dimension_numbers = #tpu.dot_dimension_numbers<[1], [0], [0], [1], [0, 0, 1, 1], [], []>} : vector<8x64xbf16>, vector<64x64xbf16>, vector<8x64xf32> -> vector<8x64xf32>
    %213 = arith.truncf %212 : vector<8x64xf32> to vector<8x64xbf16>
    %c0_127 = arith.constant 0 : index
    %c0_128 = arith.constant 0 : index
    %214 = vector.load %arg29[%c0_127, %c0_128] : memref<8x192xbf16, #tpu.memory_space<vmem>>, vector<8x64xbf16>
    tpu.vector_store %arg29[%c0_127, %c0_128], %213 {strides = array<i32>} : memref<8x192xbf16, #tpu.memory_space<vmem>>, vector<8x64xbf16>,
    %c0_129 = arith.constant 0 : index
    %c0_130 = arith.constant 0 : index
    %215 = vector.load %arg21[%c0_129, %c0_130] : memref<64x128xbf16, #tpu.memory_space<vmem>>, vector<64x128xbf16>
    %216 = arith.truncf %116 : vector<8x64xf32> to vector<8x64xbf16>
    %cst_131 = arith.constant dense<0.000000e+00> : vector<8x128xf32>
    %217 = tpu.matmul %216, %215, %cst_131 {dimension_numbers = #tpu.dot_dimension_numbers<[1], [0], [0], [1], [0, 0, 1, 1], [], []>} : vector<8x64xbf16>, vector<64x128xbf16>, vector<8x128xf32> -> vector<8x128xf32>
    %218 = arith.truncf %217 : vector<8x128xf32> to vector<8x128xbf16>
    %c0_132 = arith.constant 0 : index
    %c64_133 = arith.constant 64 : index
    %219 = vector.load %arg29[%c0_132, %c64_133] : memref<8x192xbf16, #tpu.memory_space<vmem>>, vector<8x128xbf16>
    tpu.vector_store %arg29[%c0_132, %c64_133], %218 {strides = array<i32>} : memref<8x192xbf16, #tpu.memory_space<vmem>>, vector<8x128xbf16>,
    %c0_134 = arith.constant 0 : index
    %c0_135 = arith.constant 0 : index
    %220 = vector.load %arg29[%c0_134, %c0_135] : memref<8x192xbf16, #tpu.memory_space<vmem>>, vector<8x16xbf16>
    %c0_136 = arith.constant 0 : index
    %c64_137 = arith.constant 64 : index
    %221 = vector.load %arg29[%c0_136, %c64_137] : memref<8x192xbf16, #tpu.memory_space<vmem>>, vector<8x16xbf16>
    "tpu.trace_start"() <{level = 10 : i32, message = "qd,kd->qk"}> : () -> ()
    %cst_138 = arith.constant dense<0.000000e+00> : vector<8x8xf32>
    %222 = tpu.matmul %220, %221, %cst_138 {dimension_numbers = #tpu.dot_dimension_numbers<[1], [1], [0], [0], [0, 0, 1, 0], [], []>} : vector<8x16xbf16>, vector<8x16xbf16>, vector<8x8xf32> -> vector<8x8xf32>
    "tpu.trace_stop"() : () -> ()
    %c0_139 = arith.constant 0 : index
    %c16_140 = arith.constant 16 : index
    %223 = vector.load %arg29[%c0_139, %c16_140] : memref<8x192xbf16, #tpu.memory_space<vmem>>, vector<8x16xbf16>
    %c0_141 = arith.constant 0 : index
    %c80_142 = arith.constant 80 : index
    %224 = vector.load %arg29[%c0_141, %c80_142] : memref<8x192xbf16, #tpu.memory_space<vmem>>, vector<8x16xbf16>
    "tpu.trace_start"() <{level = 10 : i32, message = "qd,kd->qk"}> : () -> ()
    %cst_143 = arith.constant dense<0.000000e+00> : vector<8x8xf32>
    %225 = tpu.matmul %223, %224, %cst_143 {dimension_numbers = #tpu.dot_dimension_numbers<[1], [1], [0], [0], [0, 0, 1, 0], [], []>} : vector<8x16xbf16>, vector<8x16xbf16>, vector<8x8xf32> -> vector<8x8xf32>
    "tpu.trace_stop"() : () -> ()
    %c0_144 = arith.constant 0 : index
    %c32_145 = arith.constant 32 : index
    %226 = vector.load %arg29[%c0_144, %c32_145] : memref<8x192xbf16, #tpu.memory_space<vmem>>, vector<8x16xbf16>
    %c0_146 = arith.constant 0 : index
    %c96_147 = arith.constant 96 : index
    %227 = vector.load %arg29[%c0_146, %c96_147] : memref<8x192xbf16, #tpu.memory_space<vmem>>, vector<8x16xbf16>
    "tpu.trace_start"() <{level = 10 : i32, message = "qd,kd->qk"}> : () -> ()
    %cst_148 = arith.constant dense<0.000000e+00> : vector<8x8xf32>
    %228 = tpu.matmul %226, %227, %cst_148 {dimension_numbers = #tpu.dot_dimension_numbers<[1], [1], [0], [0], [0, 0, 1, 0], [], []>} : vector<8x16xbf16>, vector<8x16xbf16>, vector<8x8xf32> -> vector<8x8xf32>
    "tpu.trace_stop"() : () -> ()
    %c0_149 = arith.constant 0 : index
    %c48_150 = arith.constant 48 : index
    %229 = vector.load %arg29[%c0_149, %c48_150] : memref<8x192xbf16, #tpu.memory_space<vmem>>, vector<8x16xbf16>
    %c0_151 = arith.constant 0 : index
    %c112_152 = arith.constant 112 : index
    %230 = vector.load %arg29[%c0_151, %c112_152] : memref<8x192xbf16, #tpu.memory_space<vmem>>, vector<8x16xbf16>
    "tpu.trace_start"() <{level = 10 : i32, message = "qd,kd->qk"}> : () -> ()
    %cst_153 = arith.constant dense<0.000000e+00> : vector<8x8xf32>
    %231 = tpu.matmul %229, %230, %cst_153 {dimension_numbers = #tpu.dot_dimension_numbers<[1], [1], [0], [0], [0, 0, 1, 0], [], []>} : vector<8x16xbf16>, vector<8x16xbf16>, vector<8x8xf32> -> vector<8x8xf32>
    "tpu.trace_stop"() : () -> ()
    %232 = tpu.concatenate %222, %225, %228, %231 in 0 : vector<8x8xf32>, vector<8x8xf32>, vector<8x8xf32>, vector<8x8xf32> -> vector<32x8xf32>
    %233 = vector.broadcast %7 : vector<1x8xf32> to vector<32x8xf32>
    %234 = arith.addf %232, %233 : vector<32x8xf32>
    %cst_154 = arith.constant dense<0xFF800000> : vector<32xf32>
    %235 = vector.multi_reduction <maximumf>, %234, %cst_154 [1] : vector<32x8xf32> to vector<32xf32>
    %236 = vector.shape_cast %235 : vector<32xf32> to vector<32x1xf32>
    %237 = vector.broadcast %236 : vector<32x1xf32> to vector<32x8xf32>
    %238 = arith.subf %234, %237 : vector<32x8xf32>
    %239 = math.exp %238 : vector<32x8xf32>
    %cst_155 = arith.constant dense<0.000000e+00> : vector<32xf32>
    %240 = vector.multi_reduction <add>, %239, %cst_155 [1] : vector<32x8xf32> to vector<32xf32>
    %241 = vector.shape_cast %240 : vector<32xf32> to vector<32x1xf32>
    %242 = tpu.reciprocal %241 {approx = true} : vector<32x1xf32> -> vector<32x1xf32>
    %243 = vector.broadcast %242 : vector<32x1xf32> to vector<32x8xf32>
    %244 = arith.mulf %239, %243 : vector<32x8xf32>
    %c0_156 = arith.constant 0 : index
    %c128_157 = arith.constant 128 : index
    %245 = vector.load %arg29[%c0_156, %c128_157] : memref<8x192xbf16, #tpu.memory_space<vmem>>, vector<8x16xbf16>
    %246 = vector.extract_strided_slice %244 {offsets = [0, 0], sizes = [8, 8], strides = [1, 1]} : vector<32x8xf32> to vector<8x8xf32>
    %247 = arith.truncf %246 : vector<8x8xf32> to vector<8x8xbf16>
    %cst_158 = arith.constant dense<0.000000e+00> : vector<8x16xf32>
    %248 = tpu.matmul %247, %245, %cst_158 {dimension_numbers = #tpu.dot_dimension_numbers<[1], [0], [0], [1], [0, 0, 1, 1], [], []>} : vector<8x8xbf16>, vector<8x16xbf16>, vector<8x16xf32> -> vector<8x16xf32>
    %c0_159 = arith.constant 0 : index
    %c144_160 = arith.constant 144 : index
    %249 = vector.load %arg29[%c0_159, %c144_160] : memref<8x192xbf16, #tpu.memory_space<vmem>>, vector<8x16xbf16>
    %250 = vector.extract_strided_slice %244 {offsets = [8, 0], sizes = [8, 8], strides = [1, 1]} : vector<32x8xf32> to vector<8x8xf32>
    %251 = arith.truncf %250 : vector<8x8xf32> to vector<8x8xbf16>
    %cst_161 = arith.constant dense<0.000000e+00> : vector<8x16xf32>
    %252 = tpu.matmul %251, %249, %cst_161 {dimension_numbers = #tpu.dot_dimension_numbers<[1], [0], [0], [1], [0, 0, 1, 1], [], []>} : vector<8x8xbf16>, vector<8x16xbf16>, vector<8x16xf32> -> vector<8x16xf32>
    %c0_162 = arith.constant 0 : index
    %c160_163 = arith.constant 160 : index
    %253 = vector.load %arg29[%c0_162, %c160_163] : memref<8x192xbf16, #tpu.memory_space<vmem>>, vector<8x16xbf16>
    %254 = vector.extract_strided_slice %244 {offsets = [16, 0], sizes = [8, 8], strides = [1, 1]} : vector<32x8xf32> to vector<8x8xf32>
    %255 = arith.truncf %254 : vector<8x8xf32> to vector<8x8xbf16>
    %cst_164 = arith.constant dense<0.000000e+00> : vector<8x16xf32>
    %256 = tpu.matmul %255, %253, %cst_164 {dimension_numbers = #tpu.dot_dimension_numbers<[1], [0], [0], [1], [0, 0, 1, 1], [], []>} : vector<8x8xbf16>, vector<8x16xbf16>, vector<8x16xf32> -> vector<8x16xf32>
    %c0_165 = arith.constant 0 : index
    %c176_166 = arith.constant 176 : index
    %257 = vector.load %arg29[%c0_165, %c176_166] : memref<8x192xbf16, #tpu.memory_space<vmem>>, vector<8x16xbf16>
    %258 = vector.extract_strided_slice %244 {offsets = [24, 0], sizes = [8, 8], strides = [1, 1]} : vector<32x8xf32> to vector<8x8xf32>
    %259 = arith.truncf %258 : vector<8x8xf32> to vector<8x8xbf16>
    %cst_167 = arith.constant dense<0.000000e+00> : vector<8x16xf32>
    %260 = tpu.matmul %259, %257, %cst_167 {dimension_numbers = #tpu.dot_dimension_numbers<[1], [0], [0], [1], [0, 0, 1, 1], [], []>} : vector<8x8xbf16>, vector<8x16xbf16>, vector<8x16xf32> -> vector<8x16xf32>
    %261 = tpu.concatenate %248, %252, %256, %260 in 1 : vector<8x16xf32>, vector<8x16xf32>, vector<8x16xf32>, vector<8x16xf32> -> vector<8x64xf32>
    %c0_168 = arith.constant 0 : index
    %c0_169 = arith.constant 0 : index
    %262 = vector.load %arg22[%c0_168, %c0_169] : memref<64x64xbf16, #tpu.memory_space<vmem>>, vector<64x64xbf16>
    %263 = arith.truncf %261 : vector<8x64xf32> to vector<8x64xbf16>
    %cst_170 = arith.constant dense<0.000000e+00> : vector<8x64xf32>
    %264 = tpu.matmul %263, %262, %cst_170 {dimension_numbers = #tpu.dot_dimension_numbers<[1], [0], [0], [1], [0, 0, 1, 1], [], []>} : vector<8x64xbf16>, vector<64x64xbf16>, vector<8x64xf32> -> vector<8x64xf32>
    %265 = arith.addf %196, %264 : vector<8x64xf32>
    %c0_171 = arith.constant 0 : index
    %c0_172 = arith.constant 0 : index
    %266 = vector.load %arg23[%c0_171, %c0_172] : memref<1x64xf32, #tpu.memory_space<vmem>>, vector<1x64xf32>
    %267 = arith.mulf %265, %265 : vector<8x64xf32>
    %cst_173 = arith.constant dense<0.000000e+00> : vector<8xf32>
    %268 = vector.multi_reduction <add>, %267, %cst_173 [1] : vector<8x64xf32> to vector<8xf32>
    %269 = vector.shape_cast %268 : vector<8xf32> to vector<8x1xf32>
    %cst_174 = arith.constant 6.400000e+01 : f32
    %270 = vector.broadcast %cst_174 : f32 to vector<8x1xf32>
    %271 = arith.divf %269, %270 : vector<8x1xf32>
    %cst_175 = arith.constant 9.99999997E-7 : f32
    %272 = vector.broadcast %cst_175 : f32 to vector<8x1xf32>
    %273 = arith.addf %271, %272 : vector<8x1xf32>
    %274 = math.rsqrt %273 : vector<8x1xf32>
    %275 = vector.broadcast %274 : vector<8x1xf32> to vector<8x64xf32>
    %276 = arith.mulf %265, %275 : vector<8x64xf32>
    %277 = vector.broadcast %266 : vector<1x64xf32> to vector<8x64xf32>
    %278 = arith.mulf %276, %277 : vector<8x64xf32>
    %c0_176 = arith.constant 0 : index
    %c0_177 = arith.constant 0 : index
    %279 = vector.load %arg24[%c0_176, %c0_177] : memref<64x128xbf16, #tpu.memory_space<vmem>>, vector<64x128xbf16>
    %280 = arith.truncf %278 : vector<8x64xf32> to vector<8x64xbf16>
    %cst_178 = arith.constant dense<0.000000e+00> : vector<8x128xf32>
    %281 = tpu.matmul %280, %279, %cst_178 {dimension_numbers = #tpu.dot_dimension_numbers<[1], [0], [0], [1], [0, 0, 1, 1], [], []>} : vector<8x64xbf16>, vector<64x128xbf16>, vector<8x128xf32> -> vector<8x128xf32>
    %cst_179 = arith.constant 0.000000e+00 : f32
    %282 = vector.broadcast %cst_179 : f32 to vector<8x128xf32>
    %283 = arith.maximumf %281, %282 : vector<8x128xf32>
    %c0_180 = arith.constant 0 : index
    %c0_181 = arith.constant 0 : index
    %284 = vector.load %arg25[%c0_180, %c0_181] : memref<128x64xbf16, #tpu.memory_space<vmem>>, vector<128x64xbf16>
    %285 = arith.truncf %283 : vector<8x128xf32> to vector<8x128xbf16>
    %cst_182 = arith.constant dense<0.000000e+00> : vector<8x64xf32>
    %286 = tpu.matmul %285, %284, %cst_182 {dimension_numbers = #tpu.dot_dimension_numbers<[1], [0], [0], [1], [0, 0, 1, 1], [], []>} : vector<8x128xbf16>, vector<128x64xbf16>, vector<8x64xf32> -> vector<8x64xf32>
    %287 = arith.addf %265, %286 : vector<8x64xf32>
    %c0_183 = arith.constant 0 : index
    %c0_184 = arith.constant 0 : index
    %288 = vector.load %arg26[%c0_183, %c0_184] : memref<1x64xf32, #tpu.memory_space<vmem>>, vector<1x64xf32>
    %289 = arith.mulf %287, %287 : vector<8x64xf32>
    %cst_185 = arith.constant dense<0.000000e+00> : vector<8xf32>
    %290 = vector.multi_reduction <add>, %289, %cst_185 [1] : vector<8x64xf32> to vector<8xf32>
    %291 = vector.shape_cast %290 : vector<8xf32> to vector<8x1xf32>
    %cst_186 = arith.constant 6.400000e+01 : f32
    %292 = vector.broadcast %cst_186 : f32 to vector<8x1xf32>
    %293 = arith.divf %291, %292 : vector<8x1xf32>
    %cst_187 = arith.constant 9.99999997E-7 : f32
    %294 = vector.broadcast %cst_187 : f32 to vector<8x1xf32>
    %295 = arith.addf %293, %294 : vector<8x1xf32>
    %296 = math.rsqrt %295 : vector<8x1xf32>
    %297 = vector.broadcast %296 : vector<8x1xf32> to vector<8x64xf32>
    %298 = arith.mulf %287, %297 : vector<8x64xf32>
    %299 = vector.broadcast %288 : vector<1x64xf32> to vector<8x64xf32>
    %300 = arith.mulf %298, %299 : vector<8x64xf32>
    %cst_188 = arith.constant 1.250000e-01 : f32
    %301 = vector.broadcast %cst_188 : f32 to vector<8x64xf32>
    %302 = arith.mulf %300, %301 : vector<8x64xf32>
    %c0_189 = arith.constant 0 : index
    %c0_190 = arith.constant 0 : index
    %303 = vector.load %arg6[%c0_189, %c0_190] : memref<64x128xbf16, #tpu.memory_space<vmem>>, vector<64x128xbf16>
    %304 = arith.truncf %302 : vector<8x64xf32> to vector<8x64xbf16>
    %cst_191 = arith.constant dense<0.000000e+00> : vector<8x128xf32>
    %305 = tpu.matmul %304, %303, %cst_191 {dimension_numbers = #tpu.dot_dimension_numbers<[1], [0], [0], [1], [0, 0, 1, 1], [], []>} : vector<8x64xbf16>, vector<64x128xbf16>, vector<8x128xf32> -> vector<8x128xf32>
    %c0_192 = arith.constant 0 : index
    %c0_193 = arith.constant 0 : index
    %c0_194 = arith.constant 0 : index
    %306 = vector.load %arg27[%c0_192, %c0_193, %c0_194] : memref<1x8x128xf32, #tpu.memory_space<vmem>>, vector<1x8x128xf32>
    %307 = vector.shape_cast %306 : vector<1x8x128xf32> to vector<8x128xf32>
    %308 = vector.shape_cast %305 : vector<8x128xf32> to vector<1x8x128xf32>
    tpu.vector_store %arg27[%c0_192, %c0_193, %c0_194], %308 {strides = array<i32>} : memref<1x8x128xf32, #tpu.memory_space<vmem>>, vector<1x8x128xf32>,
    %c0_195 = arith.constant 0 : index
    %c0_196 = arith.constant 0 : index
    %c0_197 = arith.constant 0 : index
    %309 = vector.load %arg3[%c0_195, %c0_196, %c0_197] : memref<1x8x1xi32, #tpu.memory_space<vmem>>, vector<1x8x1xi32>
    %310 = vector.shape_cast %309 : vector<1x8x1xi32> to vector<8x1xi32>
    %311 = vector.broadcast %310 : vector<8x1xi32> to vector<8x128xi32>
    %312 = arith.cmpi eq, %0, %311 : vector<8x128xi32>
    %313 = arith.extui %312 : vector<8x128xi1> to vector<8x128xi32>
    %314 = arith.sitofp %313 : vector<8x128xi32> to vector<8x128xf32>
    %cst_198 = arith.constant dense<0xFF800000> : vector<8xf32>
    %315 = vector.multi_reduction <maximumf>, %305, %cst_198 [1] : vector<8x128xf32> to vector<8xf32>
    %316 = vector.shape_cast %315 : vector<8xf32> to vector<8x1xf32>
    %317 = vector.broadcast %316 : vector<8x1xf32> to vector<8x128xf32>
    %318 = arith.subf %305, %317 : vector<8x128xf32>
    %319 = math.exp %318 : vector<8x128xf32>
    %cst_199 = arith.constant dense<0.000000e+00> : vector<8xf32>
    %320 = vector.multi_reduction <add>, %319, %cst_199 [1] : vector<8x128xf32> to vector<8xf32>
    %321 = vector.shape_cast %320 : vector<8xf32> to vector<8x1xf32>
    %322 = math.log %321 : vector<8x1xf32>
    %323 = arith.addf %322, %316 : vector<8x1xf32>
    %324 = arith.mulf %305, %314 : vector<8x128xf32>
    %cst_200 = arith.constant dense<0.000000e+00> : vector<8xf32>
    %325 = vector.multi_reduction <add>, %324, %cst_200 [1] : vector<8x128xf32> to vector<8xf32>
    %326 = vector.shape_cast %325 : vector<8xf32> to vector<8x1xf32>
    %327 = arith.subf %323, %326 : vector<8x1xf32>
    %328 = vector.shape_cast %327 : vector<8x1xf32> to vector<1x8x1xf32>
    %cst_201 = arith.constant dense<0.000000e+00> : vector<1xf32>
    %329 = vector.multi_reduction <add>, %328, %cst_201 [1, 2] : vector<1x8x1xf32> to vector<1xf32>
    %330 = vector.shape_cast %329 : vector<1xf32> to vector<1x1x1xf32>
    %331 = vector.extract %330[0, 0, 0] : f32 from vector<1x1x1xf32>
    %332 = vector.broadcast %331 : f32 to vector<1x1xf32>
    %c0_202 = arith.constant 0 : index
    %c0_203 = arith.constant 0 : index
    %c0_204 = arith.constant 0 : index
    %333 = vector.load %arg28[%c0_202, %c0_203, %c0_204] : memref<1x1x1xf32, #tpu.memory_space<vmem>>, vector<1x1x1xf32>
    %334 = vector.shape_cast %333 : vector<1x1x1xf32> to vector<1x1xf32>
    %335 = vector.shape_cast %332 : vector<1x1xf32> to vector<1x1x1xf32>
    tpu.vector_store %arg28[%c0_202, %c0_203, %c0_204], %335 {strides = array<i32>} : memref<1x1x1xf32, #tpu.memory_space<vmem>>, vector<1x1x1xf32>,
    return
  }
  func.func @transform_0(%arg0: i32) -> (i32, i32, i32) {
    %c0_i32 = arith.constant 0 : i32
    %c0_i32_0 = arith.constant 0 : i32
    %c0_i32_1 = arith.constant 0 : i32
    return %arg0, %c0_i32, %c0_i32_0 : i32, i32, i32
  }
  func.func @transform_1(%arg0: i32) -> (i32, i32, i32) {
    %c0_i32 = arith.constant 0 : i32
    %c0_i32_0 = arith.constant 0 : i32
    %c0_i32_1 = arith.constant 0 : i32
    return %arg0, %c0_i32, %c0_i32_0 : i32, i32, i32
  }
  func.func @transform_2(%arg0: i32) -> (i32, i32, i32) {
    %c0_i32 = arith.constant 0 : i32
    %c0_i32_0 = arith.constant 0 : i32
    %c0_i32_1 = arith.constant 0 : i32
    return %arg0, %c0_i32, %c0_i32_0 : i32, i32, i32
  }
  func.func @transform_3(%arg0: i32) -> (i32, i32, i32) {
    %c0_i32 = arith.constant 0 : i32
    %c0_i32_0 = arith.constant 0 : i32
    %c0_i32_1 = arith.constant 0 : i32
    return %arg0, %c0_i32, %c0_i32_0 : i32, i32, i32
  }
  func.func @transform_4(%arg0: i32) -> (i32, i32) {
    %c0_i32 = arith.constant 0 : i32
    %c0_i32_0 = arith.constant 0 : i32
    %c0_i32_1 = arith.constant 0 : i32
    return %c0_i32, %c0_i32_0 : i32, i32
  }
  func.func @transform_5(%arg0: i32) -> (i32, i32) {
    %c0_i32 = arith.constant 0 : i32
    %c0_i32_0 = arith.constant 0 : i32
    %c0_i32_1 = arith.constant 0 : i32
    return %c0_i32, %c0_i32_0 : i32, i32
  }
  func.func @transform_6(%arg0: i32) -> (i32, i32) {
    %c0_i32 = arith.constant 0 : i32
    %c0_i32_0 = arith.constant 0 : i32
    %c0_i32_1 = arith.constant 0 : i32
    return %c0_i32, %c0_i32_0 : i32, i32
  }
  func.func @transform_7(%arg0: i32) -> (i32, i32) {
    %c0_i32 = arith.constant 0 : i32
    %c0_i32_0 = arith.constant 0 : i32
    %c0_i32_1 = arith.constant 0 : i32
    return %c0_i32, %c0_i32_0 : i32, i32
  }
  func.func @transform_8(%arg0: i32) -> (i32, i32) {
    %c0_i32 = arith.constant 0 : i32
    %c0_i32_0 = arith.constant 0 : i32
    %c0_i32_1 = arith.constant 0 : i32
    return %c0_i32, %c0_i32_0 : i32, i32
  }
  func.func @transform_9(%arg0: i32) -> (i32, i32) {
    %c0_i32 = arith.constant 0 : i32
    %c0_i32_0 = arith.constant 0 : i32
    %c0_i32_1 = arith.constant 0 : i32
    return %c0_i32, %c0_i32_0 : i32, i32
  }
  func.func @transform_10(%arg0: i32) -> (i32, i32) {
    %c0_i32 = arith.constant 0 : i32
    %c0_i32_0 = arith.constant 0 : i32
    %c0_i32_1 = arith.constant 0 : i32
    return %c0_i32, %c0_i32_0 : i32, i32
  }
  func.func @transform_11(%arg0: i32) -> (i32, i32) {
    %c0_i32 = arith.constant 0 : i32
    %c0_i32_0 = arith.constant 0 : i32
    %c0_i32_1 = arith.constant 0 : i32
    return %c0_i32, %c0_i32_0 : i32, i32
  }
  func.func @transform_12(%arg0: i32) -> (i32, i32) {
    %c0_i32 = arith.constant 0 : i32
    %c0_i32_0 = arith.constant 0 : i32
    %c0_i32_1 = arith.constant 0 : i32
    return %c0_i32, %c0_i32_0 : i32, i32
  }
  func.func @transform_13(%arg0: i32) -> (i32, i32) {
    %c0_i32 = arith.constant 0 : i32
    %c0_i32_0 = arith.constant 0 : i32
    %c0_i32_1 = arith.constant 0 : i32
    return %c0_i32, %c0_i32_0 : i32, i32
  }
  func.func @transform_14(%arg0: i32) -> (i32, i32) {
    %c0_i32 = arith.constant 0 : i32
    %c0_i32_0 = arith.constant 0 : i32
    %c0_i32_1 = arith.constant 0 : i32
    return %c0_i32, %c0_i32_0 : i32, i32
  }
  func.func @transform_15(%arg0: i32) -> (i32, i32) {
    %c0_i32 = arith.constant 0 : i32
    %c0_i32_0 = arith.constant 0 : i32
    %c0_i32_1 = arith.constant 0 : i32
    return %c0_i32, %c0_i32_0 : i32, i32
  }
  func.func @transform_16(%arg0: i32) -> (i32, i32) {
    %c0_i32 = arith.constant 0 : i32
    %c0_i32_0 = arith.constant 0 : i32
    %c0_i32_1 = arith.constant 0 : i32
    return %c0_i32, %c0_i32_0 : i32, i32
  }
  func.func @transform_17(%arg0: i32) -> (i32, i32) {
    %c0_i32 = arith.constant 0 : i32
    %c0_i32_0 = arith.constant 0 : i32
    %c0_i32_1 = arith.constant 0 : i32
    return %c0_i32, %c0_i32_0 : i32, i32
  }
  func.func @transform_18(%arg0: i32) -> (i32, i32) {
    %c0_i32 = arith.constant 0 : i32
    %c0_i32_0 = arith.constant 0 : i32
    %c0_i32_1 = arith.constant 0 : i32
    return %c0_i32, %c0_i32_0 : i32, i32
  }
  func.func @transform_19(%arg0: i32) -> (i32, i32) {
    %c0_i32 = arith.constant 0 : i32
    %c0_i32_0 = arith.constant 0 : i32
    %c0_i32_1 = arith.constant 0 : i32
    return %c0_i32, %c0_i32_0 : i32, i32
  }
  func.func @transform_20(%arg0: i32) -> (i32, i32) {
    %c0_i32 = arith.constant 0 : i32
    %c0_i32_0 = arith.constant 0 : i32
    %c0_i32_1 = arith.constant 0 : i32
    return %c0_i32, %c0_i32_0 : i32, i32
  }
  func.func @transform_21(%arg0: i32) -> (i32, i32) {
    %c0_i32 = arith.constant 0 : i32
    %c0_i32_0 = arith.constant 0 : i32
    %c0_i32_1 = arith.constant 0 : i32
    return %c0_i32, %c0_i32_0 : i32, i32
  }
  func.func @transform_22(%arg0: i32) -> (i32, i32) {
    %c0_i32 = arith.constant 0 : i32
    %c0_i32_0 = arith.constant 0 : i32
    %c0_i32_1 = arith.constant 0 : i32
    return %c0_i32, %c0_i32_0 : i32, i32
  }
  func.func @transform_23(%arg0: i32) -> (i32, i32) {
    %c0_i32 = arith.constant 0 : i32
    %c0_i32_0 = arith.constant 0 : i32
    %c0_i32_1 = arith.constant 0 : i32
    return %c0_i32, %c0_i32_0 : i32, i32
  }
  func.func @transform_24(%arg0: i32) -> (i32, i32) {
    %c0_i32 = arith.constant 0 : i32
    %c0_i32_0 = arith.constant 0 : i32
    %c0_i32_1 = arith.constant 0 : i32
    return %c0_i32, %c0_i32_0 : i32, i32
  }
  func.func @transform_25(%arg0: i32) -> (i32, i32) {
    %c0_i32 = arith.constant 0 : i32
    %c0_i32_0 = arith.constant 0 : i32
    %c0_i32_1 = arith.constant 0 : i32
    return %c0_i32, %c0_i32_0 : i32, i32
  }
  func.func @transform_26(%arg0: i32) -> (i32, i32, i32) {
    %c0_i32 = arith.constant 0 : i32
    %c0_i32_0 = arith.constant 0 : i32
    %c0_i32_1 = arith.constant 0 : i32
    return %arg0, %c0_i32, %c0_i32_0 : i32, i32, i32
  }
  func.func @transform_27(%arg0: i32) -> (i32, i32, i32) {
    %c0_i32 = arith.constant 0 : i32
    %c0_i32_0 = arith.constant 0 : i32
    %c0_i32_1 = arith.constant 0 : i32
    return %arg0, %c0_i32, %c0_i32_0 : i32, i32, i32
  }
}

</mosaic_0001>

<llo_original>
// kernel: t5_forward.1
$region0: #{t5_forward.1}
  #allocation0 [shape = 'u32[]', space=smem, size = 0x4, offset = 0x4, fixed_abs, tag = 'smem constant byte address 0x4 - core index']
  #allocation1 [shape = 'u32[72,128]{1,0:T(1,128)}', space=vmem, size = 0x9000, scoped, tag = 'internal scratch']
  #allocation2 [shape = 'bf16[8,192]{1,0:T(8,128)(2,1)}', space=vmem, size = 0x1000, scoped, tag = 'scratch operand']
  %s0 = inlined_call_operand.vmem [shape: s32[2,8,1], index: 0, kind: input, shape index: {}]
  %s1 = inlined_call_operand.vmem [shape: s32[2,8,1], index: 1, kind: input, shape index: {}]
  %s2 = inlined_call_operand.vmem [shape: s32[2,8,1], index: 2, kind: input, shape index: {}]
  %s3 = inlined_call_operand.vmem [shape: f32[2,1,8], index: 3, kind: input, shape index: {}]
  %s4 = inlined_call_operand.hbm [shape: bf16[128,64], index: 4, kind: input, shape index: {}]
  %s5 = inlined_call_operand.hbm [shape: bf16[64,128], index: 5, kind: input, shape index: {}]
  %s6 = inlined_call_operand.vmem [shape: f32[1,64], index: 6, kind: input, shape index: {}, may-alias: {6,10,13,14,18,22,25}]
  %s7 = inlined_call_operand.hbm [shape: bf16[64,192], index: 7, kind: input, shape index: {}]
  %s8 = inlined_call_operand.hbm [shape: bf16[64,64], index: 8, kind: input, shape index: {}]
  %s9 = inlined_call_operand.hbm [shape: f32[32,8], index: 9, kind: input, shape index: {}]
  %s10 = inlined_call_operand.vmem [shape: f32[1,64], index: 10, kind: input, shape index: {}, may-alias: {6,10,13,14,18,22,25}]
  %s11 = inlined_call_operand.hbm [shape: bf16[64,128], index: 11, kind: input, shape index: {}]
  %s12 = inlined_call_operand.hbm [shape: bf16[128,64], index: 12, kind: input, shape index: {}]
  %s13 = inlined_call_operand.vmem [shape: f32[1,64], index: 13, kind: input, shape index: {}, may-alias: {6,10,13,14,18,22,25}]
  %s14 = inlined_call_operand.vmem [shape: f32[1,64], index: 14, kind: input, shape index: {}, may-alias: {6,10,13,14,18,22,25}]
  %s15 = inlined_call_operand.hbm [shape: bf16[64,192], index: 15, kind: input, shape index: {}]
  %s16 = inlined_call_operand.hbm [shape: bf16[64,64], index: 16, kind: input, shape index: {}]
  %s17 = inlined_call_operand.hbm [shape: f32[32,8], index: 17, kind: input, shape index: {}]
  %s18 = inlined_call_operand.vmem [shape: f32[1,64], index: 18, kind: input, shape index: {}, may-alias: {6,10,13,14,18,22,25}]
  %s19 = inlined_call_operand.hbm [shape: bf16[64,64], index: 19, kind: input, shape index: {}]
  %s20 = inlined_call_operand.hbm [shape: bf16[64,128], index: 20, kind: input, shape index: {}]
  %s21 = inlined_call_operand.hbm [shape: bf16[64,64], index: 21, kind: input, shape index: {}]
  %s22 = inlined_call_operand.vmem [shape: f32[1,64], index: 22, kind: input, shape index: {}, may-alias: {6,10,13,14,18,22,25}]
  %s23 = inlined_call_operand.vmem [shape: bf16[64,128], index: 23, kind: input, shape index: {}]
  %s24 = inlined_call_operand.hbm [shape: bf16[128,64], index: 24, kind: input, shape index: {}]
  %s25 = inlined_call_operand.vmem [shape: f32[1,64], index: 25, kind: input, shape index: {}, may-alias: {6,10,13,14,18,22,25}]
  %s26 = inlined_call_operand.hbm [shape: f32[2,8,128], index: 26, kind: output, shape index: {0}]
  %s27 = inlined_call_operand.vmem [shape: f32[2,1,1], index: 27, kind: output, shape index: {1}]
  %28 = xla_tuple %s26, %s27
  %s29 = sld [smem:[#allocation0]]
  $region201: #{t5_forward.1} parent=0
    _
  %s31 = ssub.s32 1, %s29
  %s32 = scalar_select 0, %s31, %s29
  $region1: #{t5_forward.1} parent=0
    #allocation3 [shape = 'u8[32768]{0}', space=vmem, size = 0x8000, scoped, tag = 'input window, operand 4, single buffered']
    #allocation4 [shape = 's32[2]{0}', space=sflag, size = 0x8, scoped, tag = 'scoped memory for t5_forward.1']
    #allocation5 [shape = 's32[2]{0}', space=sflag, size = 0x8, scoped, tag = 'scoped memory for t5_forward.1']
    #allocation6 [shape = 'u8[16384]{0}', space=vmem, size = 0x4000, scoped, tag = 'input window, operand 5, single buffered']
    #allocation7 [shape = 's32[1]{0}', space=sflag, size = 0x4, scoped, tag = 'scoped memory for t5_forward.1']
    #allocation8 [shape = 'u8[32768]{0}', space=vmem, size = 0x8000, scoped, tag = 'input window, operand 7, single buffered']
    #allocation9 [shape = 'u8[16384]{0}', space=vmem, size = 0x4000, scoped, tag = 'input window, operand 8, single buffered']
    #allocation10 [shape = 's32[1]{0}', space=sflag, size = 0x4, scoped, tag = 'scoped memory for t5_forward.1']
    #allocation11 [shape = 'u8[16384]{0}', space=vmem, size = 0x4000, scoped, tag = 'input window, operand 9, single buffered']
    #allocation12 [shape = 'u8[16384]{0}', space=vmem, size = 0x4000, scoped, tag = 'input window, operand 11, single buffered']
    #allocation13 [shape = 's32[1]{0}', space=sflag, size = 0x4, scoped, tag = 'scoped memory for t5_forward.1']
    #allocation14 [shape = 'u8[32768]{0}', space=vmem, size = 0x8000, scoped, tag = 'input window, operand 12, single buffered']
    #allocation15 [shape = 'u8[32768]{0}', space=vmem, size = 0x8000, scoped, tag = 'input window, operand 15, single buffered']
    #allocation16 [shape = 's32[1]{0}', space=sflag, size = 0x4, scoped, tag = 'scoped memory for t5_forward.1']
    #allocation17 [shape = 'u8[16384]{0}', space=vmem, size = 0x4000, scoped, tag = 'input window, operand 16, single buffered']
    #allocation18 [shape = 'u8[16384]{0}', space=vmem, size = 0x4000, scoped, tag = 'input window, operand 17, single buffered']
    #allocation19 [shape = 's32[1]{0}', space=sflag, size = 0x4, scoped, tag = 'scoped memory for t5_forward.1']
    #allocation20 [shape = 'u8[16384]{0}', space=vmem, size = 0x4000, scoped, tag = 'input window, operand 19, single buffered']
    #allocation21 [shape = 'u8[16384]{0}', space=vmem, size = 0x4000, scoped, tag = 'input window, operand 20, single buffered']
    #allocation22 [shape = 's32[1]{0}', space=sflag, size = 0x4, scoped, tag = 'scoped memory for t5_forward.1']
    #allocation23 [shape = 'u8[16384]{0}', space=vmem, size = 0x4000, scoped, tag = 'input window, operand 21, single buffered']
    #allocation24 [shape = 'u8[32768]{0}', space=vmem, size = 0x8000, scoped, tag = 'input window, operand 24, single buffered']
    #allocation25 [shape = 's32[1]{0}', space=sflag, size = 0x4, scoped, tag = 'scoped memory for t5_forward.1']
    #allocation26 [shape = 'u8[8192]{0}', space=vmem, size = 0x2000, scoped, tag = 'output window, operand 0']
    %33 = vsyncpa [#allocation4], 0
    %34 = vsyncpa [#allocation7], 0
    %35 = vsyncpa [#allocation10], 0
    %36 = vsyncpa [#allocation13], 0
    %37 = vsyncpa [#allocation16], 0
    %38 = vsyncpa [#allocation19], 0
    %39 = vsyncpa [#allocation22], 0
    %40 = vsyncpa [#allocation25], 0
    %41 = vsyncpa [#allocation5], 0
    %s42 = scalar_lea.sflag [#allocation5], 1
    %43 = vsyncpa %s42, 0
    loop: start=0, step=1, limit=4
    $region2: #{t5_forward.1} parent=1 // loop_pre_header
      _
    $region3: #{t5_forward.1} parent=1 // loop_header
      %s45 = sphi 0, %s49
      %p46 = scmp.ge.s32.totalorder %s45, 4
      %s55 = sphi 0, %s57
      %s58 = sphi 0, %s55
      %s59 = sphi 0, %s58
      %s75 = sphi 0, %s59
      %s81 = sphi 0, %s83
      %s84 = sphi 0, %s81
      %s85 = sphi 0, %s84
      %s101 = sphi 0, %s85
      %s107 = sphi 0, %s109
      %s110 = sphi 0, %s107
      %s111 = sphi 0, %s110
      %s127 = sphi 0, %s111
      %s133 = sphi 0, %s135
      %s136 = sphi 0, %s133
      %s137 = sphi 0, %s136
      %s153 = sphi 0, %s137
      %s157 = sphi 0, %s157
      %s159 = sphi 0, %s157
      %s160 = sphi 0, %s159
      %s174 = sphi 0, %s160
      %s178 = sphi 0, %s178
      %s180 = sphi 0, %s178
      %s181 = sphi 0, %s180
      %s195 = sphi 0, %s181
      %s199 = sphi 0, %s199
      %s201 = sphi 0, %s199
      %s202 = sphi 0, %s201
      %s216 = sphi 0, %s202
      %s220 = sphi 0, %s220
      %s222 = sphi 0, %s220
      %s223 = sphi 0, %s222
      %s237 = sphi 0, %s223
      %s241 = sphi 0, %s241
      %s243 = sphi 0, %s241
      %s244 = sphi 0, %s243
      %s258 = sphi 0, %s244
      %s262 = sphi 0, %s262
      %s264 = sphi 0, %s262
      %s265 = sphi 0, %s264
      %s279 = sphi 0, %s265
      %s283 = sphi 0, %s283
      %s285 = sphi 0, %s283
      %s286 = sphi 0, %s285
      %s300 = sphi 0, %s286
      %s304 = sphi 0, %s304
      %s306 = sphi 0, %s304
      %s307 = sphi 0, %s306
      %s321 = sphi 0, %s307
      %s325 = sphi 0, %s325
      %s327 = sphi 0, %s325
      %s328 = sphi 0, %s327
      %s342 = sphi 0, %s328
      %s346 = sphi 0, %s346
      %s348 = sphi 0, %s346
      %s349 = sphi 0, %s348
      %s363 = sphi 0, %s349
      %s367 = sphi 0, %s367
      %s369 = sphi 0, %s367
      %s370 = sphi 0, %s369
      %s384 = sphi 0, %s370
      %s388 = sphi 0, %s388
      %s390 = sphi 0, %s388
      %s391 = sphi 0, %s390
      %s405 = sphi 0, %s391
      %s409 = sphi 0, %s409
      %s411 = sphi 0, %s409
      %s412 = sphi 0, %s411
      %s426 = sphi 0, %s412
      %s430 = sphi 0, %s430
      %s432 = sphi 0, %s430
      %s433 = sphi 0, %s432
      %s447 = sphi 0, %s433
      %s451 = sphi 0, %s451
      %s453 = sphi 0, %s451
      %s454 = sphi 0, %s453
      %s468 = sphi 0, %s454
      %s472 = sphi 0, %s472
      %s474 = sphi 0, %s472
      %s475 = sphi 0, %s474
      %s489 = sphi 0, %s475
      %s493 = sphi 0, %s493
      %s495 = sphi 0, %s493
      %s496 = sphi 0, %s495
      %s510 = sphi 0, %s496
      %s514 = sphi 0, %s514
      %s516 = sphi 0, %s514
      %s517 = sphi 0, %s516
      %s531 = sphi 0, %s517
      %s535 = sphi 0, %s535
      %s537 = sphi 0, %s535
      %s538 = sphi 0, %s537
      %s552 = sphi 0, %s538
      %s556 = sphi 0, %s556
      %s558 = sphi 0, %s556
      %s559 = sphi 0, %s558
      %s573 = sphi 0, %s559
      %s577 = sphi 0, %s577
      %s579 = sphi 0, %s577
      %s580 = sphi 0, %s579
      %s594 = sphi 0, %s580
      %s598 = sphi 0, %s598
      %s600 = sphi 0, %s598
      %s601 = sphi 0, %s600
      %s615 = sphi 0, %s601
      %s621 = sphi 0, %s623
      %s624 = sphi 0, %s621
      %s625 = sphi 0, %s624
      %s641 = sphi 0, %s625
      %s647 = sphi 0, %s649
      %s650 = sphi 0, %s647
      %s651 = sphi 0, %s650
      %s667 = sphi 0, %s651
    $region4: #{t5_forward.1} parent=1 // loop_header_branch
      %48 = sbr.rel (%p46) target = $region8
    $region5: #{t5_forward.1} parent=1 // loop_body
      %s50 = ssub.s32 %s45, 1
      %s51 = ssub.s32 %s45, 2
      %s52 = sadd.s32 %s45, 1
      %s53 = ssub.s32 %s45, %s52
      %p54 = scmp.eq.s32.totalorder %s53, 0
      %s56 = sadd.s32 %s55, 1
      %s57 = scalar_select %p54, %s55, %s56
      %p60 = pneg %p54
      %p61 = scmp.eq.s32.totalorder %s45, 1
      %p62 = por %p60, %p61
      %p63 = scmp.ne.s32.totalorder %s55, %s58
      %p64 = scmp.eq.s32.totalorder %s45, 0
      %p65 = por %p63, %p64
      %p66 = scmp.ne.s32.totalorder %s55, %s58
      %p67 = scmp.eq.s32.totalorder %s50, 1
      %p68 = por %p66, %p67
      %p69 = scmp.ne.s32.totalorder %s58, %s59
      %p70 = scmp.eq.s32.totalorder %s50, 0
      %p71 = por %p69, %p70
      %p72 = scmp.ne.s32.totalorder %s58, %s59
      %p73 = scmp.eq.s32.totalorder %s51, 1
      %p74 = por %p72, %p73
      %p76 = scmp.ne.s32.totalorder %s59, %s75
      %p77 = scmp.eq.s32.totalorder %s51, 0
      %p78 = por %p76, %p77
      %s79 = ssub.s32 %s45, %s52
      %p80 = scmp.eq.s32.totalorder %s79, 0
      %s82 = sadd.s32 %s81, 1
      %s83 = scalar_select %p80, %s81, %s82
      %p86 = pneg %p80
      %p87 = scmp.eq.s32.totalorder %s45, 1
      %p88 = por %p86, %p87
      %p89 = scmp.ne.s32.totalorder %s81, %s84
      %p90 = scmp.eq.s32.totalorder %s45, 0
      %p91 = por %p89, %p90
      %p92 = scmp.ne.s32.totalorder %s81, %s84
      %p93 = scmp.eq.s32.totalorder %s50, 1
      %p94 = por %p92, %p93
      %p95 = scmp.ne.s32.totalorder %s84, %s85
      %p96 = scmp.eq.s32.totalorder %s50, 0
      %p97 = por %p95, %p96
      %p98 = scmp.ne.s32.totalorder %s84, %s85
      %p99 = scmp.eq.s32.totalorder %s51, 1
      %p100 = por %p98, %p99
      %p102 = scmp.ne.s32.totalorder %s85, %s101
      %p103 = scmp.eq.s32.totalorder %s51, 0
      %p104 = por %p102, %p103
      %s105 = ssub.s32 %s45, %s52
      %p106 = scmp.eq.s32.totalorder %s105, 0
      %s108 = sadd.s32 %s107, 1
      %s109 = scalar_select %p106, %s107, %s108
      %p112 = pneg %p106
      %p113 = scmp.eq.s32.totalorder %s45, 1
      %p114 = por %p112, %p113
      %p115 = scmp.ne.s32.totalorder %s107, %s110
      %p116 = scmp.eq.s32.totalorder %s45, 0
      %p117 = por %p115, %p116
      %p118 = scmp.ne.s32.totalorder %s107, %s110
      %p119 = scmp.eq.s32.totalorder %s50, 1
      %p120 = por %p118, %p119
      %p121 = scmp.ne.s32.totalorder %s110, %s111
      %p122 = scmp.eq.s32.totalorder %s50, 0
      %p123 = por %p121, %p122
      %p124 = scmp.ne.s32.totalorder %s110, %s111
      %p125 = scmp.eq.s32.totalorder %s51, 1
      %p126 = por %p124, %p125
      %p128 = scmp.ne.s32.totalorder %s111, %s127
      %p129 = scmp.eq.s32.totalorder %s51, 0
      %p130 = por %p128, %p129
      %s131 = ssub.s32 %s45, %s52
      %p132 = scmp.eq.s32.totalorder %s131, 0
      %s134 = sadd.s32 %s133, 1
      %s135 = scalar_select %p132, %s133, %s134
      %p138 = pneg %p132
      %p139 = scmp.eq.s32.totalorder %s45, 1
      %p140 = por %p138, %p139
      %p141 = scmp.ne.s32.totalorder %s133, %s136
      %p142 = scmp.eq.s32.totalorder %s45, 0
      %p143 = por %p141, %p142
      %p144 = scmp.ne.s32.totalorder %s133, %s136
      %p145 = scmp.eq.s32.totalorder %s50, 1
      %p146 = por %p144, %p145
      %p147 = scmp.ne.s32.totalorder %s136, %s137
      %p148 = scmp.eq.s32.totalorder %s50, 0
      %p149 = por %p147, %p148
      %p150 = scmp.ne.s32.totalorder %s136, %s137
      %p151 = scmp.eq.s32.totalorder %s51, 1
      %p152 = por %p150, %p151
      %p154 = scmp.ne.s32.totalorder %s137, %s153
      %p155 = scmp.eq.s32.totalorder %s51, 0
      %p156 = por %p154, %p155
      %s158 = sadd.s32 %s157, 1
      %p161 = scmp.eq.s32.totalorder %s45, 1
      %p162 = scmp.ne.s32.totalorder %s157, %s159
      %p163 = scmp.eq.s32.totalorder %s45, 0
      %p164 = por %p162, %p163
      %p165 = scmp.ne.s32.totalorder %s157, %s159
      %p166 = scmp.eq.s32.totalorder %s50, 1
      %p167 = por %p165, %p166
      %p168 = scmp.ne.s32.totalorder %s159, %s160
      %p169 = scmp.eq.s32.totalorder %s50, 0
      %p170 = por %p168, %p169
      %p171 = scmp.ne.s32.totalorder %s159, %s160
      %p172 = scmp.eq.s32.totalorder %s51, 1
      %p173 = por %p171, %p172
      %p175 = scmp.ne.s32.totalorder %s160, %s174
      %p176 = scmp.eq.s32.totalorder %s51, 0
      %p177 = por %p175, %p176
      %s179 = sadd.s32 %s178, 1
      %p182 = scmp.eq.s32.totalorder %s45, 1
      %p183 = scmp.ne.s32.totalorder %s178, %s180
      %p184 = scmp.eq.s32.totalorder %s45, 0
      %p185 = por %p183, %p184
      %p186 = scmp.ne.s32.totalorder %s178, %s180
      %p187 = scmp.eq.s32.totalorder %s50, 1
      %p188 = por %p186, %p187
      %p189 = scmp.ne.s32.totalorder %s180, %s181
      %p190 = scmp.eq.s32.totalorder %s50, 0
      %p191 = por %p189, %p190
      %p192 = scmp.ne.s32.totalorder %s180, %s181
      %p193 = scmp.eq.s32.totalorder %s51, 1
      %p194 = por %p192, %p193
      %p196 = scmp.ne.s32.totalorder %s181, %s195
      %p197 = scmp.eq.s32.totalorder %s51, 0
      %p198 = por %p196, %p197
      %s200 = sadd.s32 %s199, 1
      %p203 = scmp.eq.s32.totalorder %s45, 1
      %p204 = scmp.ne.s32.totalorder %s199, %s201
      %p205 = scmp.eq.s32.totalorder %s45, 0
      %p206 = por %p204, %p205
      %p207 = scmp.ne.s32.totalorder %s199, %s201
      %p208 = scmp.eq.s32.totalorder %s50, 1
      %p209 = por %p207, %p208
      %p210 = scmp.ne.s32.totalorder %s201, %s202
      %p211 = scmp.eq.s32.totalorder %s50, 0
      %p212 = por %p210, %p211
      %p213 = scmp.ne.s32.totalorder %s201, %s202
      %p214 = scmp.eq.s32.totalorder %s51, 1
      %p215 = por %p213, %p214
      %p217 = scmp.ne.s32.totalorder %s202, %s216
      %p218 = scmp.eq.s32.totalorder %s51, 0
      %p219 = por %p217, %p218
      %s221 = sadd.s32 %s220, 1
      %p224 = scmp.eq.s32.totalorder %s45, 1
      %p225 = scmp.ne.s32.totalorder %s220, %s222
      %p226 = scmp.eq.s32.totalorder %s45, 0
      %p227 = por %p225, %p226
      %p228 = scmp.ne.s32.totalorder %s220, %s222
      %p229 = scmp.eq.s32.totalorder %s50, 1
      %p230 = por %p228, %p229
      %p231 = scmp.ne.s32.totalorder %s222, %s223
      %p232 = scmp.eq.s32.totalorder %s50, 0
      %p233 = por %p231, %p232
      %p234 = scmp.ne.s32.totalorder %s222, %s223
      %p235 = scmp.eq.s32.totalorder %s51, 1
      %p236 = por %p234, %p235
      %p238 = scmp.ne.s32.totalorder %s223, %s237
      %p239 = scmp.eq.s32.totalorder %s51, 0
      %p240 = por %p238, %p239
      %s242 = sadd.s32 %s241, 1
      %p245 = scmp.eq.s32.totalorder %s45, 1
      %p246 = scmp.ne.s32.totalorder %s241, %s243
      %p247 = scmp.eq.s32.totalorder %s45, 0
      %p248 = por %p246, %p247
      %p249 = scmp.ne.s32.totalorder %s241, %s243
      %p250 = scmp.eq.s32.totalorder %s50, 1
      %p251 = por %p249, %p250
      %p252 = scmp.ne.s32.totalorder %s243, %s244
      %p253 = scmp.eq.s32.totalorder %s50, 0
      %p254 = por %p252, %p253
      %p255 = scmp.ne.s32.totalorder %s243, %s244
      %p256 = scmp.eq.s32.totalorder %s51, 1
      %p257 = por %p255, %p256
      %p259 = scmp.ne.s32.totalorder %s244, %s258
      %p260 = scmp.eq.s32.totalorder %s51, 0
      %p261 = por %p259, %p260
      %s263 = sadd.s32 %s262, 1
      %p266 = scmp.eq.s32.totalorder %s45, 1
      %p267 = scmp.ne.s32.totalorder %s262, %s264
      %p268 = scmp.eq.s32.totalorder %s45, 0
      %p269 = por %p267, %p268
      %p270 = scmp.ne.s32.totalorder %s262, %s264
      %p271 = scmp.eq.s32.totalorder %s50, 1
      %p272 = por %p270, %p271
      %p273 = scmp.ne.s32.totalorder %s264, %s265
      %p274 = scmp.eq.s32.totalorder %s50, 0
      %p275 = por %p273, %p274
      %p276 = scmp.ne.s32.totalorder %s264, %s265
      %p277 = scmp.eq.s32.totalorder %s51, 1
      %p278 = por %p276, %p277
      %p280 = scmp.ne.s32.totalorder %s265, %s279
      %p281 = scmp.eq.s32.totalorder %s51, 0
      %p282 = por %p280, %p281
      %s284 = sadd.s32 %s283, 1
      %p287 = scmp.eq.s32.totalorder %s45, 1
      %p288 = scmp.ne.s32.totalorder %s283, %s285
      %p289 = scmp.eq.s32.totalorder %s45, 0
      %p290 = por %p288, %p289
      %p291 = scmp.ne.s32.totalorder %s283, %s285
      %p292 = scmp.eq.s32.totalorder %s50, 1
      %p293 = por %p291, %p292
      %p294 = scmp.ne.s32.totalorder %s285, %s286
      %p295 = scmp.eq.s32.totalorder %s50, 0
      %p296 = por %p294, %p295
      %p297 = scmp.ne.s32.totalorder %s285, %s286
      %p298 = scmp.eq.s32.totalorder %s51, 1
      %p299 = por %p297, %p298
      %p301 = scmp.ne.s32.totalorder %s286, %s300
      %p302 = scmp.eq.s32.totalorder %s51, 0
      %p303 = por %p301, %p302
      %s305 = sadd.s32 %s304, 1
      %p308 = scmp.eq.s32.totalorder %s45, 1
      %p309 = scmp.ne.s32.totalorder %s304, %s306
      %p310 = scmp.eq.s32.totalorder %s45, 0
      %p311 = por %p309, %p310
      %p312 = scmp.ne.s32.totalorder %s304, %s306
      %p313 = scmp.eq.s32.totalorder %s50, 1
      %p314 = por %p312, %p313
      %p315 = scmp.ne.s32.totalorder %s306, %s307
      %p316 = scmp.eq.s32.totalorder %s50, 0
      %p317 = por %p315, %p316
      %p318 = scmp.ne.s32.totalorder %s306, %s307
      %p319 = scmp.eq.s32.totalorder %s51, 1
      %p320 = por %p318, %p319
      %p322 = scmp.ne.s32.totalorder %s307, %s321
      %p323 = scmp.eq.s32.totalorder %s51, 0
      %p324 = por %p322, %p323
      %s326 = sadd.s32 %s325, 1
      %p329 = scmp.eq.s32.totalorder %s45, 1
      %p330 = scmp.ne.s32.totalorder %s325, %s327
      %p331 = scmp.eq.s32.totalorder %s45, 0
      %p332 = por %p330, %p331
      %p333 = scmp.ne.s32.totalorder %s325, %s327
      %p334 = scmp.eq.s32.totalorder %s50, 1
      %p335 = por %p333, %p334
      %p336 = scmp.ne.s32.totalorder %s327, %s328
      %p337 = scmp.eq.s32.totalorder %s50, 0
      %p338 = por %p336, %p337
      %p339 = scmp.ne.s32.totalorder %s327, %s328
      %p340 = scmp.eq.s32.totalorder %s51, 1
      %p341 = por %p339, %p340
      %p343 = scmp.ne.s32.totalorder %s328, %s342
      %p344 = scmp.eq.s32.totalorder %s51, 0
      %p345 = por %p343, %p344
      %s347 = sadd.s32 %s346, 1
      %p350 = scmp.eq.s32.totalorder %s45, 1
      %p351 = scmp.ne.s32.totalorder %s346, %s348
      %p352 = scmp.eq.s32.totalorder %s45, 0
      %p353 = por %p351, %p352
      %p354 = scmp.ne.s32.totalorder %s346, %s348
      %p355 = scmp.eq.s32.totalorder %s50, 1
      %p356 = por %p354, %p355
      %p357 = scmp.ne.s32.totalorder %s348, %s349
      %p358 = scmp.eq.s32.totalorder %s50, 0
      %p359 = por %p357, %p358
      %p360 = scmp.ne.s32.totalorder %s348, %s349
      %p361 = scmp.eq.s32.totalorder %s51, 1
      %p362 = por %p360, %p361
      %p364 = scmp.ne.s32.totalorder %s349, %s363
      %p365 = scmp.eq.s32.totalorder %s51, 0
      %p366 = por %p364, %p365
      %s368 = sadd.s32 %s367, 1
      %p371 = scmp.eq.s32.totalorder %s45, 1
      %p372 = scmp.ne.s32.totalorder %s367, %s369
      %p373 = scmp.eq.s32.totalorder %s45, 0
      %p374 = por %p372, %p373
      %p375 = scmp.ne.s32.totalorder %s367, %s369
      %p376 = scmp.eq.s32.totalorder %s50, 1
      %p377 = por %p375, %p376
      %p378 = scmp.ne.s32.totalorder %s369, %s370
      %p379 = scmp.eq.s32.totalorder %s50, 0
      %p380 = por %p378, %p379
      %p381 = scmp.ne.s32.totalorder %s369, %s370
      %p382 = scmp.eq.s32.totalorder %s51, 1
      %p383 = por %p381, %p382
      %p385 = scmp.ne.s32.totalorder %s370, %s384
      %p386 = scmp.eq.s32.totalorder %s51, 0
      %p387 = por %p385, %p386
      %s389 = sadd.s32 %s388, 1
      %p392 = scmp.eq.s32.totalorder %s45, 1
      %p393 = scmp.ne.s32.totalorder %s388, %s390
      %p394 = scmp.eq.s32.totalorder %s45, 0
      %p395 = por %p393, %p394
      %p396 = scmp.ne.s32.totalorder %s388, %s390
      %p397 = scmp.eq.s32.totalorder %s50, 1
      %p398 = por %p396, %p397
      %p399 = scmp.ne.s32.totalorder %s390, %s391
      %p400 = scmp.eq.s32.totalorder %s50, 0
      %p401 = por %p399, %p400
      %p402 = scmp.ne.s32.totalorder %s390, %s391
      %p403 = scmp.eq.s32.totalorder %s51, 1
      %p404 = por %p402, %p403
      %p406 = scmp.ne.s32.totalorder %s391, %s405
      %p407 = scmp.eq.s32.totalorder %s51, 0
      %p408 = por %p406, %p407
      %s410 = sadd.s32 %s409, 1
      %p413 = scmp.eq.s32.totalorder %s45, 1
      %p414 = scmp.ne.s32.totalorder %s409, %s411
      %p415 = scmp.eq.s32.totalorder %s45, 0
      %p416 = por %p414, %p415
      %p417 = scmp.ne.s32.totalorder %s409, %s411
      %p418 = scmp.eq.s32.totalorder %s50, 1
      %p419 = por %p417, %p418
      %p420 = scmp.ne.s32.totalorder %s411, %s412
      %p421 = scmp.eq.s32.totalorder %s50, 0
      %p422 = por %p420, %p421
      %p423 = scmp.ne.s32.totalorder %s411, %s412
      %p424 = scmp.eq.s32.totalorder %s51, 1
      %p425 = por %p423, %p424
      %p427 = scmp.ne.s32.totalorder %s412, %s426
      %p428 = scmp.eq.s32.totalorder %s51, 0
      %p429 = por %p427, %p428
      %s431 = sadd.s32 %s430, 1
      %p434 = scmp.eq.s32.totalorder %s45, 1
      %p435 = scmp.ne.s32.totalorder %s430, %s432
      %p436 = scmp.eq.s32.totalorder %s45, 0
      %p437 = por %p435, %p436
      %p438 = scmp.ne.s32.totalorder %s430, %s432
      %p439 = scmp.eq.s32.totalorder %s50, 1
      %p440 = por %p438, %p439
      %p441 = scmp.ne.s32.totalorder %s432, %s433
      %p442 = scmp.eq.s32.totalorder %s50, 0
      %p443 = por %p441, %p442
      %p444 = scmp.ne.s32.totalorder %s432, %s433
      %p445 = scmp.eq.s32.totalorder %s51, 1
      %p446 = por %p444, %p445
      %p448 = scmp.ne.s32.totalorder %s433, %s447
      %p449 = scmp.eq.s32.totalorder %s51, 0
      %p450 = por %p448, %p449
      %s452 = sadd.s32 %s451, 1
      %p455 = scmp.eq.s32.totalorder %s45, 1
      %p456 = scmp.ne.s32.totalorder %s451, %s453
      %p457 = scmp.eq.s32.totalorder %s45, 0
      %p458 = por %p456, %p457
      %p459 = scmp.ne.s32.totalorder %s451, %s453
      %p460 = scmp.eq.s32.totalorder %s50, 1
      %p461 = por %p459, %p460
      %p462 = scmp.ne.s32.totalorder %s453, %s454
      %p463 = scmp.eq.s32.totalorder %s50, 0
      %p464 = por %p462, %p463
      %p465 = scmp.ne.s32.totalorder %s453, %s454
      %p466 = scmp.eq.s32.totalorder %s51, 1
      %p467 = por %p465, %p466
      %p469 = scmp.ne.s32.totalorder %s454, %s468
      %p470 = scmp.eq.s32.totalorder %s51, 0
      %p471 = por %p469, %p470
      %s473 = sadd.s32 %s472, 1
      %p476 = scmp.eq.s32.totalorder %s45, 1
      %p477 = scmp.ne.s32.totalorder %s472, %s474
      %p478 = scmp.eq.s32.totalorder %s45, 0
      %p479 = por %p477, %p478
      %p480 = scmp.ne.s32.totalorder %s472, %s474
      %p481 = scmp.eq.s32.totalorder %s50, 1
      %p482 = por %p480, %p481
      %p483 = scmp.ne.s32.totalorder %s474, %s475
      %p484 = scmp.eq.s32.totalorder %s50, 0
      %p485 = por %p483, %p484
      %p486 = scmp.ne.s32.totalorder %s474, %s475
      %p487 = scmp.eq.s32.totalorder %s51, 1
      %p488 = por %p486, %p487
      %p490 = scmp.ne.s32.totalorder %s475, %s489
      %p491 = scmp.eq.s32.totalorder %s51, 0
      %p492 = por %p490, %p491
      %s494 = sadd.s32 %s493, 1
      %p497 = scmp.eq.s32.totalorder %s45, 1
      %p498 = scmp.ne.s32.totalorder %s493, %s495
      %p499 = scmp.eq.s32.totalorder %s45, 0
      %p500 = por %p498, %p499
      %p501 = scmp.ne.s32.totalorder %s493, %s495
      %p502 = scmp.eq.s32.totalorder %s50, 1
      %p503 = por %p501, %p502
      %p504 = scmp.ne.s32.totalorder %s495, %s496
      %p505 = scmp.eq.s32.totalorder %s50, 0
      %p506 = por %p504, %p505
      %p507 = scmp.ne.s32.totalorder %s495, %s496
      %p508 = scmp.eq.s32.totalorder %s51, 1
      %p509 = por %p507, %p508
      %p511 = scmp.ne.s32.totalorder %s496, %s510
      %p512 = scmp.eq.s32.totalorder %s51, 0
      %p513 = por %p511, %p512
      %s515 = sadd.s32 %s514, 1
      %p518 = scmp.eq.s32.totalorder %s45, 1
      %p519 = scmp.ne.s32.totalorder %s514, %s516
      %p520 = scmp.eq.s32.totalorder %s45, 0
      %p521 = por %p519, %p520
      %p522 = scmp.ne.s32.totalorder %s514, %s516
      %p523 = scmp.eq.s32.totalorder %s50, 1
      %p524 = por %p522, %p523
      %p525 = scmp.ne.s32.totalorder %s516, %s517
      %p526 = scmp.eq.s32.totalorder %s50, 0
      %p527 = por %p525, %p526
      %p528 = scmp.ne.s32.totalorder %s516, %s517
      %p529 = scmp.eq.s32.totalorder %s51, 1
      %p530 = por %p528, %p529
      %p532 = scmp.ne.s32.totalorder %s517, %s531
      %p533 = scmp.eq.s32.totalorder %s51, 0
      %p534 = por %p532, %p533
      %s536 = sadd.s32 %s535, 1
      %p539 = scmp.eq.s32.totalorder %s45, 1
      %p540 = scmp.ne.s32.totalorder %s535, %s537
      %p541 = scmp.eq.s32.totalorder %s45, 0
      %p542 = por %p540, %p541
      %p543 = scmp.ne.s32.totalorder %s535, %s537
      %p544 = scmp.eq.s32.totalorder %s50, 1
      %p545 = por %p543, %p544
      %p546 = scmp.ne.s32.totalorder %s537, %s538
      %p547 = scmp.eq.s32.totalorder %s50, 0
      %p548 = por %p546, %p547
      %p549 = scmp.ne.s32.totalorder %s537, %s538
      %p550 = scmp.eq.s32.totalorder %s51, 1
      %p551 = por %p549, %p550
      %p553 = scmp.ne.s32.totalorder %s538, %s552
      %p554 = scmp.eq.s32.totalorder %s51, 0
      %p555 = por %p553, %p554
      %s557 = sadd.s32 %s556, 1
      %p560 = scmp.eq.s32.totalorder %s45, 1
      %p561 = scmp.ne.s32.totalorder %s556, %s558
      %p562 = scmp.eq.s32.totalorder %s45, 0
      %p563 = por %p561, %p562
      %p564 = scmp.ne.s32.totalorder %s556, %s558
      %p565 = scmp.eq.s32.totalorder %s50, 1
      %p566 = por %p564, %p565
      %p567 = scmp.ne.s32.totalorder %s558, %s559
      %p568 = scmp.eq.s32.totalorder %s50, 0
      %p569 = por %p567, %p568
      %p570 = scmp.ne.s32.totalorder %s558, %s559
      %p571 = scmp.eq.s32.totalorder %s51, 1
      %p572 = por %p570, %p571
      %p574 = scmp.ne.s32.totalorder %s559, %s573
      %p575 = scmp.eq.s32.totalorder %s51, 0
      %p576 = por %p574, %p575
      %s578 = sadd.s32 %s577, 1
      %p581 = scmp.eq.s32.totalorder %s45, 1
      %p582 = scmp.ne.s32.totalorder %s577, %s579
      %p583 = scmp.eq.s32.totalorder %s45, 0
      %p584 = por %p582, %p583
      %p585 = scmp.ne.s32.totalorder %s577, %s579
      %p586 = scmp.eq.s32.totalorder %s50, 1
      %p587 = por %p585, %p586
      %p588 = scmp.ne.s32.totalorder %s579, %s580
      %p589 = scmp.eq.s32.totalorder %s50, 0
      %p590 = por %p588, %p589
      %p591 = scmp.ne.s32.totalorder %s579, %s580
      %p592 = scmp.eq.s32.totalorder %s51, 1
      %p593 = por %p591, %p592
      %p595 = scmp.ne.s32.totalorder %s580, %s594
      %p596 = scmp.eq.s32.totalorder %s51, 0
      %p597 = por %p595, %p596
      %s599 = sadd.s32 %s598, 1
      %p602 = scmp.eq.s32.totalorder %s45, 1
      %p603 = scmp.ne.s32.totalorder %s598, %s600
      %p604 = scmp.eq.s32.totalorder %s45, 0
      %p605 = por %p603, %p604
      %p606 = scmp.ne.s32.totalorder %s598, %s600
      %p607 = scmp.eq.s32.totalorder %s50, 1
      %p608 = por %p606, %p607
      %p609 = scmp.ne.s32.totalorder %s600, %s601
      %p610 = scmp.eq.s32.totalorder %s50, 0
      %p611 = por %p609, %p610
      %p612 = scmp.ne.s32.totalorder %s600, %s601
      %p613 = scmp.eq.s32.totalorder %s51, 1
      %p614 = por %p612, %p613
      %p616 = scmp.ne.s32.totalorder %s601, %s615
      %p617 = scmp.eq.s32.totalorder %s51, 0
      %p618 = por %p616, %p617
      %s619 = ssub.s32 %s45, %s52
      %p620 = scmp.eq.s32.totalorder %s619, 0
      %s622 = sadd.s32 %s621, 1
      %s623 = scalar_select %p620, %s621, %s622
      %p626 = pneg %p620
      %p627 = scmp.eq.s32.totalorder %s45, 1
      %p628 = por %p626, %p627
      %p629 = scmp.ne.s32.totalorder %s621, %s624
      %p630 = scmp.eq.s32.totalorder %s45, 0
      %p631 = por %p629, %p630
      %p632 = scmp.ne.s32.totalorder %s621, %s624
      %p633 = scmp.eq.s32.totalorder %s50, 1
      %p634 = por %p632, %p633
      %p635 = scmp.ne.s32.totalorder %s624, %s625
      %p636 = scmp.eq.s32.totalorder %s50, 0
      %p637 = por %p635, %p636
      %p638 = scmp.ne.s32.totalorder %s624, %s625
      %p639 = scmp.eq.s32.totalorder %s51, 1
      %p640 = por %p638, %p639
      %p642 = scmp.ne.s32.totalorder %s625, %s641
      %p643 = scmp.eq.s32.totalorder %s51, 0
      %p644 = por %p642, %p643
      %s645 = ssub.s32 %s45, %s52
      %p646 = scmp.eq.s32.totalorder %s645, 0
      %s648 = sadd.s32 %s647, 1
      %s649 = scalar_select %p646, %s647, %s648
      %p652 = pneg %p646
      %p653 = scmp.eq.s32.totalorder %s45, 1
      %p654 = por %p652, %p653
      %p655 = scmp.ne.s32.totalorder %s647, %s650
      %p656 = scmp.eq.s32.totalorder %s45, 0
      %p657 = por %p655, %p656
      %p658 = scmp.ne.s32.totalorder %s647, %s650
      %p659 = scmp.eq.s32.totalorder %s50, 1
      %p660 = por %p658, %p659
      %p661 = scmp.ne.s32.totalorder %s650, %s651
      %p662 = scmp.eq.s32.totalorder %s50, 0
      %p663 = por %p661, %p662
      %p664 = scmp.ne.s32.totalorder %s650, %s651
      %p665 = scmp.eq.s32.totalorder %s51, 1
      %p666 = por %p664, %p665
      %p668 = scmp.ne.s32.totalorder %s651, %s667
      %p669 = scmp.eq.s32.totalorder %s51, 0
      %p670 = por %p668, %p669
      %p671 = scmp.le.s32.totalorder 1, %s45
      %p672 = scmp.lt.s32.totalorder %s45, 3
      %p673 = pnand %p671, %p672
      %p674 = pneg %p673
      // Predicated region
      $region9: #{t5_forward.1} parent=5 // pred_check
        _
      $region10: #{t5_forward.1} parent=5 // pred_check_branch
        %676 = sbr.rel (%p673) target = $region12
      $region11: #{t5_forward.1} parent=5 // pred_region
        %s677 = ssub.s32 %s45, 1
        // Predicated region
        $region13: #{t5_forward.1} parent=11 // pred_check
          %p678 = pneg %p170
        $region14: #{t5_forward.1} parent=11 // pred_check_branch
          %680 = sbr.rel (%p678) target = $region16
        $region15: #{t5_forward.1} parent=11 // pred_region
          %682 = vsyncadd [#allocation4], 0
          %s683 = sshll.u32 %s4, 4
          %s684 = int_to_ptr.hbm [resolvable:$true] %s683
          %s685 = sshll.u32 [#allocation3], 4
          %s686 = int_to_ptr.vmem [resolvable:$true] %s685
          %691 = dma.hbm_to_vmem [thread:$0]  %s684, 1024, %s686, [#allocation4], 64, 64, 4
        $region16: #{t5_forward.1} parent=11 // pred_fallthru
          _
        // Predicated region
        $region17: #{t5_forward.1} parent=11 // pred_check
          %p692 = pneg %p191
        $region18: #{t5_forward.1} parent=11 // pred_check_branch
          %694 = sbr.rel (%p692) target = $region20
        $region19: #{t5_forward.1} parent=11 // pred_region
          %696 = vsyncadd [#allocation7], 0
          %s697 = sshll.u32 %s5, 4
          %s698 = int_to_ptr.hbm [resolvable:$true] %s697
          %s699 = sshll.u32 [#allocation6], 4
          %s700 = int_to_ptr.vmem [resolvable:$true] %s699
          %705 = dma.hbm_to_vmem [thread:$0]  %s698, 512, %s700, [#allocation7], 64, 64, 4
        $region20: #{t5_forward.1} parent=11 // pred_fallthru
          _
        // Predicated region
        $region21: #{t5_forward.1} parent=11 // pred_check
          %p706 = pneg %p212
        $region22: #{t5_forward.1} parent=11 // pred_check_branch
          %708 = sbr.rel (%p706) target = $region24
        $region23: #{t5_forward.1} parent=11 // pred_region
          _
        $region24: #{t5_forward.1} parent=11 // pred_fallthru
          _
        // Predicated region
        $region25: #{t5_forward.1} parent=11 // pred_check
          %p709 = pneg %p233
        $region26: #{t5_forward.1} parent=11 // pred_check_branch
          %711 = sbr.rel (%p709) target = $region28
        $region27: #{t5_forward.1} parent=11 // pred_region
          %713 = vsyncadd [#allocation7], 0
          %s714 = sshll.u32 %s7, 4
          %s715 = int_to_ptr.hbm [resolvable:$true] %s714
          %s716 = sshll.u32 [#allocation8], 4
          %s717 = int_to_ptr.vmem [resolvable:$true] %s716
          %722 = dma.hbm_to_vmem [thread:$0]  %s715, 1024, %s717, [#allocation7], 128, 128, 8
        $region28: #{t5_forward.1} parent=11 // pred_fallthru
          _
        // Predicated region
        $region29: #{t5_forward.1} parent=11 // pred_check
          %p723 = pneg %p254
        $region30: #{t5_forward.1} parent=11 // pred_check_branch
          %725 = sbr.rel (%p723) target = $region32
        $region31: #{t5_forward.1} parent=11 // pred_region
          %727 = vsyncadd [#allocation10], 0
          %s728 = sshll.u32 %s8, 4
          %s729 = int_to_ptr.hbm [resolvable:$true] %s728
          %s730 = sshll.u32 [#allocation9], 4
          %s731 = int_to_ptr.vmem [resolvable:$true] %s730
          %736 = dma.hbm_to_vmem [thread:$0]  %s729, 512, %s731, [#allocation10], 64, 64, 4
        $region32: #{t5_forward.1} parent=11 // pred_fallthru
          _
        // Predicated region
        $region33: #{t5_forward.1} parent=11 // pred_check
          %p737 = pneg %p275
        $region34: #{t5_forward.1} parent=11 // pred_check_branch
          %739 = sbr.rel (%p737) target = $region36
        $region35: #{t5_forward.1} parent=11 // pred_region
          %741 = vsyncadd [#allocation10], 0
          %s742 = sshll.u32 %s9, 4
          %s743 = int_to_ptr.hbm [resolvable:$true] %s742
          %s744 = sshll.u32 [#allocation11], 4
          %s745 = int_to_ptr.vmem [resolvable:$true] %s744
          %750 = dma.hbm_to_vmem [thread:$0]  %s743, 512, %s745, [#allocation10], 128, 128, 8
        $region36: #{t5_forward.1} parent=11 // pred_fallthru
          _
        // Predicated region
        $region37: #{t5_forward.1} parent=11 // pred_check
          %p751 = pneg %p296
        $region38: #{t5_forward.1} parent=11 // pred_check_branch
          %753 = sbr.rel (%p751) target = $region40
        $region39: #{t5_forward.1} parent=11 // pred_region
          _
        $region40: #{t5_forward.1} parent=11 // pred_fallthru
          _
        // Predicated region
        $region41: #{t5_forward.1} parent=11 // pred_check
          %p754 = pneg %p317
        $region42: #{t5_forward.1} parent=11 // pred_check_branch
          %756 = sbr.rel (%p754) target = $region44
        $region43: #{t5_forward.1} parent=11 // pred_region
          %758 = vsyncadd [#allocation13], 0
          %s759 = sshll.u32 %s11, 4
          %s760 = int_to_ptr.hbm [resolvable:$true] %s759
          %s761 = sshll.u32 [#allocation12], 4
          %s762 = int_to_ptr.vmem [resolvable:$true] %s761
          %767 = dma.hbm_to_vmem [thread:$0]  %s760, 512, %s762, [#allocation13], 64, 64, 4
        $region44: #{t5_forward.1} parent=11 // pred_fallthru
          _
        // Predicated region
        $region45: #{t5_forward.1} parent=11 // pred_check
          %p768 = pneg %p338
        $region46: #{t5_forward.1} parent=11 // pred_check_branch
          %770 = sbr.rel (%p768) target = $region48
        $region47: #{t5_forward.1} parent=11 // pred_region
          %772 = vsyncadd [#allocation13], 0
          %s773 = sshll.u32 %s12, 4
          %s774 = int_to_ptr.hbm [resolvable:$true] %s773
          %s775 = sshll.u32 [#allocation14], 4
          %s776 = int_to_ptr.vmem [resolvable:$true] %s775
          %781 = dma.hbm_to_vmem [thread:$0]  %s774, 1024, %s776, [#allocation13], 64, 64, 4
        $region48: #{t5_forward.1} parent=11 // pred_fallthru
          _
        // Predicated region
        $region49: #{t5_forward.1} parent=11 // pred_check
          %p782 = pneg %p359
        $region50: #{t5_forward.1} parent=11 // pred_check_branch
          %784 = sbr.rel (%p782) target = $region52
        $region51: #{t5_forward.1} parent=11 // pred_region
          _
        $region52: #{t5_forward.1} parent=11 // pred_fallthru
          _
        // Predicated region
        $region53: #{t5_forward.1} parent=11 // pred_check
          %p785 = pneg %p380
        $region54: #{t5_forward.1} parent=11 // pred_check_branch
          %787 = sbr.rel (%p785) target = $region56
        $region55: #{t5_forward.1} parent=11 // pred_region
          _
        $region56: #{t5_forward.1} parent=11 // pred_fallthru
          _
        // Predicated region
        $region57: #{t5_forward.1} parent=11 // pred_check
          %p788 = pneg %p401
        $region58: #{t5_forward.1} parent=11 // pred_check_branch
          %790 = sbr.rel (%p788) target = $region60
        $region59: #{t5_forward.1} parent=11 // pred_region
          %792 = vsyncadd [#allocation16], 0
          %s793 = sshll.u32 %s15, 4
          %s794 = int_to_ptr.hbm [resolvable:$true] %s793
          %s795 = sshll.u32 [#allocation15], 4
          %s796 = int_to_ptr.vmem [resolvable:$true] %s795
          %801 = dma.hbm_to_vmem [thread:$0]  %s794, 1024, %s796, [#allocation16], 128, 128, 8
        $region60: #{t5_forward.1} parent=11 // pred_fallthru
          _
        // Predicated region
        $region61: #{t5_forward.1} parent=11 // pred_check
          %p802 = pneg %p422
        $region62: #{t5_forward.1} parent=11 // pred_check_branch
          %804 = sbr.rel (%p802) target = $region64
        $region63: #{t5_forward.1} parent=11 // pred_region
          %806 = vsyncadd [#allocation16], 0
          %s807 = sshll.u32 %s16, 4
          %s808 = int_to_ptr.hbm [resolvable:$true] %s807
          %s809 = sshll.u32 [#allocation17], 4
          %s810 = int_to_ptr.vmem [resolvable:$true] %s809
          %815 = dma.hbm_to_vmem [thread:$0]  %s808, 512, %s810, [#allocation16], 64, 64, 4
        $region64: #{t5_forward.1} parent=11 // pred_fallthru
          _
        // Predicated region
        $region65: #{t5_forward.1} parent=11 // pred_check
          %p816 = pneg %p443
        $region66: #{t5_forward.1} parent=11 // pred_check_branch
          %818 = sbr.rel (%p816) target = $region68
        $region67: #{t5_forward.1} parent=11 // pred_region
          %820 = vsyncadd [#allocation19], 0
          %s821 = sshll.u32 %s17, 4
          %s822 = int_to_ptr.hbm [resolvable:$true] %s821
          %s823 = sshll.u32 [#allocation18], 4
          %s824 = int_to_ptr.vmem [resolvable:$true] %s823
          %829 = dma.hbm_to_vmem [thread:$0]  %s822, 512, %s824, [#allocation19], 128, 128, 8
        $region68: #{t5_forward.1} parent=11 // pred_fallthru
          _
        // Predicated region
        $region69: #{t5_forward.1} parent=11 // pred_check
          %p830 = pneg %p464
        $region70: #{t5_forward.1} parent=11 // pred_check_branch
          %832 = sbr.rel (%p830) target = $region72
        $region71: #{t5_forward.1} parent=11 // pred_region
          _
        $region72: #{t5_forward.1} parent=11 // pred_fallthru
          _
        // Predicated region
        $region73: #{t5_forward.1} parent=11 // pred_check
          %p833 = pneg %p485
        $region74: #{t5_forward.1} parent=11 // pred_check_branch
          %835 = sbr.rel (%p833) target = $region76
        $region75: #{t5_forward.1} parent=11 // pred_region
          %837 = vsyncadd [#allocation19], 0
          %s838 = sshll.u32 %s19, 4
          %s839 = int_to_ptr.hbm [resolvable:$true] %s838
          %s840 = sshll.u32 [#allocation20], 4
          %s841 = int_to_ptr.vmem [resolvable:$true] %s840
          %846 = dma.hbm_to_vmem [thread:$0]  %s839, 512, %s841, [#allocation19], 64, 64, 4
        $region76: #{t5_forward.1} parent=11 // pred_fallthru
          _
        // Predicated region
        $region77: #{t5_forward.1} parent=11 // pred_check
          %p847 = pneg %p506
        $region78: #{t5_forward.1} parent=11 // pred_check_branch
          %849 = sbr.rel (%p847) target = $region80
        $region79: #{t5_forward.1} parent=11 // pred_region
          %851 = vsyncadd [#allocation22], 0
          %s852 = sshll.u32 %s20, 4
          %s853 = int_to_ptr.hbm [resolvable:$true] %s852
          %s854 = sshll.u32 [#allocation21], 4
          %s855 = int_to_ptr.vmem [resolvable:$true] %s854
          %860 = dma.hbm_to_vmem [thread:$0]  %s853, 512, %s855, [#allocation22], 64, 64, 4
        $region80: #{t5_forward.1} parent=11 // pred_fallthru
          _
        // Predicated region
        $region81: #{t5_forward.1} parent=11 // pred_check
          %p861 = pneg %p527
        $region82: #{t5_forward.1} parent=11 // pred_check_branch
          %863 = sbr.rel (%p861) target = $region84
        $region83: #{t5_forward.1} parent=11 // pred_region
          %865 = vsyncadd [#allocation22], 0
          %s866 = sshll.u32 %s21, 4
          %s867 = int_to_ptr.hbm [resolvable:$true] %s866
          %s868 = sshll.u32 [#allocation23], 4
          %s869 = int_to_ptr.vmem [resolvable:$true] %s868
          %874 = dma.hbm_to_vmem [thread:$0]  %s867, 512, %s869, [#allocation22], 64, 64, 4
        $region84: #{t5_forward.1} parent=11 // pred_fallthru
          _
        // Predicated region
        $region85: #{t5_forward.1} parent=11 // pred_check
          %p875 = pneg %p548
        $region86: #{t5_forward.1} parent=11 // pred_check_branch
          %877 = sbr.rel (%p875) target = $region88
        $region87: #{t5_forward.1} parent=11 // pred_region
          _
        $region88: #{t5_forward.1} parent=11 // pred_fallthru
          _
        // Predicated region
        $region89: #{t5_forward.1} parent=11 // pred_check
          %p878 = pneg %p569
        $region90: #{t5_forward.1} parent=11 // pred_check_branch
          %880 = sbr.rel (%p878) target = $region92
        $region91: #{t5_forward.1} parent=11 // pred_region
          _
        $region92: #{t5_forward.1} parent=11 // pred_fallthru
          _
        // Predicated region
        $region93: #{t5_forward.1} parent=11 // pred_check
          %p881 = pneg %p590
        $region94: #{t5_forward.1} parent=11 // pred_check_branch
          %883 = sbr.rel (%p881) target = $region96
        $region95: #{t5_forward.1} parent=11 // pred_region
          %885 = vsyncadd [#allocation25], 0
          %s886 = sshll.u32 %s24, 4
          %s887 = int_to_ptr.hbm [resolvable:$true] %s886
          %s888 = sshll.u32 [#allocation24], 4
          %s889 = int_to_ptr.vmem [resolvable:$true] %s888
          %894 = dma.hbm_to_vmem [thread:$0]  %s887, 1024, %s889, [#allocation25], 64, 64, 4
        $region96: #{t5_forward.1} parent=11 // pred_fallthru
          _
        // Predicated region
        $region97: #{t5_forward.1} parent=11 // pred_check
          %p895 = pneg %p611
        $region98: #{t5_forward.1} parent=11 // pred_check_branch
          %897 = sbr.rel (%p895) target = $region100
        $region99: #{t5_forward.1} parent=11 // pred_region
          _
        $region100: #{t5_forward.1} parent=11 // pred_fallthru
          _
      $region12: #{t5_forward.1} parent=5 // pred_fallthru
        _
      %p898 = scmp.lt.s32.totalorder %s45, 2
      // Predicated region
      $region101: #{t5_forward.1} parent=5 // pred_check
        %p899 = pneg %p898
      $region102: #{t5_forward.1} parent=5 // pred_check_branch
        %901 = sbr.rel (%p899) target = $region104
      $region103: #{t5_forward.1} parent=5 // pred_region
        // Predicated region
        $region105: #{t5_forward.1} parent=103 // pred_check
          %p902 = pneg %p65
        $region106: #{t5_forward.1} parent=103 // pred_check_branch
          %904 = sbr.rel (%p902) target = $region108
        $region107: #{t5_forward.1} parent=103 // pred_region
          %p905 = scmp.lt.s32.totalorder %s45, 1
          %s906 = scalar_select %p905, %s45, 1
          %s907 = smul.addr %s906, 8
          %s908 = scalar_lea.vmem %s0, %s907
        $region108: #{t5_forward.1} parent=103 // pred_fallthru
          _
        // Predicated region
        $region109: #{t5_forward.1} parent=103 // pred_check
          %p909 = pneg %p91
        $region110: #{t5_forward.1} parent=103 // pred_check_branch
          %911 = sbr.rel (%p909) target = $region112
        $region111: #{t5_forward.1} parent=103 // pred_region
          %p912 = scmp.lt.s32.totalorder %s45, 1
          %s913 = scalar_select %p912, %s45, 1
          %s914 = smul.addr %s913, 8
          %s915 = scalar_lea.vmem %s1, %s914
        $region112: #{t5_forward.1} parent=103 // pred_fallthru
          _
        // Predicated region
        $region113: #{t5_forward.1} parent=103 // pred_check
          %p916 = pneg %p117
        $region114: #{t5_forward.1} parent=103 // pred_check_branch
          %918 = sbr.rel (%p916) target = $region116
        $region115: #{t5_forward.1} parent=103 // pred_region
          %p919 = scmp.lt.s32.totalorder %s45, 1
          %s920 = scalar_select %p919, %s45, 1
          %s921 = smul.addr %s920, 8
          %s922 = scalar_lea.vmem %s2, %s921
        $region116: #{t5_forward.1} parent=103 // pred_fallthru
          _
        // Predicated region
        $region117: #{t5_forward.1} parent=103 // pred_check
          %p923 = pneg %p143
        $region118: #{t5_forward.1} parent=103 // pred_check_branch
          %925 = sbr.rel (%p923) target = $region120
        $region119: #{t5_forward.1} parent=103 // pred_region
          %p926 = scmp.lt.s32.totalorder %s45, 1
          %s927 = scalar_select %p926, %s45, 1
          %s928 = scalar_lea.vmem %s3, %s927
        $region120: #{t5_forward.1} parent=103 // pred_fallthru
          _
      $region104: #{t5_forward.1} parent=5 // pred_fallthru
        _
      %p929 = scmp.le.s32.totalorder 1, %s45
      %p930 = scmp.lt.s32.totalorder %s45, 3
      %p931 = pnand %p929, %p930
      %p932 = pneg %p931
      // Predicated region
      $region121: #{t5_forward.1} parent=5 // pred_check
        _
      $region122: #{t5_forward.1} parent=5 // pred_check_branch
        %934 = sbr.rel (%p931) target = $region124
      $region123: #{t5_forward.1} parent=5 // pred_region
        %s935 = ssub.s32 %s45, 1
        // Predicated region
        $region125: #{t5_forward.1} parent=123 // pred_check
          %p936 = pneg %p170
        $region126: #{t5_forward.1} parent=123 // pred_check_branch
          %938 = sbr.rel (%p936) target = $region128
        $region127: #{t5_forward.1} parent=123 // pred_region
          %940 = dma.done [#allocation4], 1024
        $region128: #{t5_forward.1} parent=123 // pred_fallthru
          _
        // Predicated region
        $region129: #{t5_forward.1} parent=123 // pred_check
          %p941 = pneg %p191
        $region130: #{t5_forward.1} parent=123 // pred_check_branch
          %943 = sbr.rel (%p941) target = $region132
        $region131: #{t5_forward.1} parent=123 // pred_region
          %945 = dma.done [#allocation7], 512
        $region132: #{t5_forward.1} parent=123 // pred_fallthru
          _
        // Predicated region
        $region133: #{t5_forward.1} parent=123 // pred_check
          %p946 = pneg %p233
        $region134: #{t5_forward.1} parent=123 // pred_check_branch
          %948 = sbr.rel (%p946) target = $region136
        $region135: #{t5_forward.1} parent=123 // pred_region
          %950 = dma.done [#allocation7], 1024
        $region136: #{t5_forward.1} parent=123 // pred_fallthru
          _
        // Predicated region
        $region137: #{t5_forward.1} parent=123 // pred_check
          %p951 = pneg %p254
        $region138: #{t5_forward.1} parent=123 // pred_check_branch
          %953 = sbr.rel (%p951) target = $region140
        $region139: #{t5_forward.1} parent=123 // pred_region
          %955 = dma.done [#allocation10], 512
        $region140: #{t5_forward.1} parent=123 // pred_fallthru
          _
        // Predicated region
        $region141: #{t5_forward.1} parent=123 // pred_check
          %p956 = pneg %p275
        $region142: #{t5_forward.1} parent=123 // pred_check_branch
          %958 = sbr.rel (%p956) target = $region144
        $region143: #{t5_forward.1} parent=123 // pred_region
          %960 = dma.done [#allocation10], 512
        $region144: #{t5_forward.1} parent=123 // pred_fallthru
          _
        // Predicated region
        $region145: #{t5_forward.1} parent=123 // pred_check
          %p961 = pneg %p317
        $region146: #{t5_forward.1} parent=123 // pred_check_branch
          %963 = sbr.rel (%p961) target = $region148
        $region147: #{t5_forward.1} parent=123 // pred_region
          %965 = dma.done [#allocation13], 512
        $region148: #{t5_forward.1} parent=123 // pred_fallthru
          _
        // Predicated region
        $region149: #{t5_forward.1} parent=123 // pred_check
          %p966 = pneg %p338
        $region150: #{t5_forward.1} parent=123 // pred_check_branch
          %968 = sbr.rel (%p966) target = $region152
        $region151: #{t5_forward.1} parent=123 // pred_region
          %970 = dma.done [#allocation13], 1024
        $region152: #{t5_forward.1} parent=123 // pred_fallthru
          _
        // Predicated region
        $region153: #{t5_forward.1} parent=123 // pred_check
          %p971 = pneg %p401
        $region154: #{t5_forward.1} parent=123 // pred_check_branch
          %973 = sbr.rel (%p971) target = $region156
        $region155: #{t5_forward.1} parent=123 // pred_region
          %975 = dma.done [#allocation16], 1024
        $region156: #{t5_forward.1} parent=123 // pred_fallthru
          _
        // Predicated region
        $region157: #{t5_forward.1} parent=123 // pred_check
          %p976 = pneg %p422
        $region158: #{t5_forward.1} parent=123 // pred_check_branch
          %978 = sbr.rel (%p976) target = $region160
        $region159: #{t5_forward.1} parent=123 // pred_region
          %980 = dma.done [#allocation16], 512
        $region160: #{t5_forward.1} parent=123 // pred_fallthru
          _
        // Predicated region
        $region161: #{t5_forward.1} parent=123 // pred_check
          %p981 = pneg %p443
        $region162: #{t5_forward.1} parent=123 // pred_check_branch
          %983 = sbr.rel (%p981) target = $region164
        $region163: #{t5_forward.1} parent=123 // pred_region
          %985 = dma.done [#allocation19], 512
        $region164: #{t5_forward.1} parent=123 // pred_fallthru
          _
        // Predicated region
        $region165: #{t5_forward.1} parent=123 // pred_check
          %p986 = pneg %p485
        $region166: #{t5_forward.1} parent=123 // pred_check_branch
          %988 = sbr.rel (%p986) target = $region168
        $region167: #{t5_forward.1} parent=123 // pred_region
          %990 = dma.done [#allocation19], 512
        $region168: #{t5_forward.1} parent=123 // pred_fallthru
          _
        // Predicated region
        $region169: #{t5_forward.1} parent=123 // pred_check
          %p991 = pneg %p506
        $region170: #{t5_forward.1} parent=123 // pred_check_branch
          %993 = sbr.rel (%p991) target = $region172
        $region171: #{t5_forward.1} parent=123 // pred_region
          %995 = dma.done [#allocation22], 512
        $region172: #{t5_forward.1} parent=123 // pred_fallthru
          _
        // Predicated region
        $region173: #{t5_forward.1} parent=123 // pred_check
          %p996 = pneg %p527
        $region174: #{t5_forward.1} parent=123 // pred_check_branch
          %998 = sbr.rel (%p996) target = $region176
        $region175: #{t5_forward.1} parent=123 // pred_region
          %1000 = dma.done [#allocation22], 512
        $region176: #{t5_forward.1} parent=123 // pred_fallthru
          _
        // Predicated region
        $region177: #{t5_forward.1} parent=123 // pred_check
          %p1001 = pneg %p590
        $region178: #{t5_forward.1} parent=123 // pred_check_branch
          %1003 = sbr.rel (%p1001) target = $region180
        $region179: #{t5_forward.1} parent=123 // pred_region
          %1005 = dma.done [#allocation25], 1024
        $region180: #{t5_forward.1} parent=123 // pred_fallthru
          _
        %p1006 = scmp.lt.s32.totalorder %s50, 1
        %s1007 = scalar_select %p1006, %s50, 1
        %s1008 = smul.addr %s1007, 8
        %s1009 = scalar_lea.vmem %s0, %s1008
        %p1010 = pneg %p71
        %p1011 = pneg %p68
        %p1012 = scmp.lt.s32.totalorder %s50, 1
        %s1013 = scalar_select %p1012, %s50, 1
        %s1014 = smul.addr %s1013, 8
        %s1015 = scalar_lea.vmem %s1, %s1014
        %p1016 = pneg %p97
        %p1017 = pneg %p94
        %p1018 = scmp.lt.s32.totalorder %s50, 1
        %s1019 = scalar_select %p1018, %s50, 1
        %s1020 = smul.addr %s1019, 8
        %s1021 = scalar_lea.vmem %s2, %s1020
        %p1022 = pneg %p123
        %p1023 = pneg %p120
        %p1024 = scmp.lt.s32.totalorder %s50, 1
        %s1025 = scalar_select %p1024, %s50, 1
        %s1026 = scalar_lea.vmem %s3, %s1025
        %p1027 = pneg %p149
        %p1028 = pneg %p146
        %p1029 = pneg %p170
        %p1030 = pneg %p167
        %p1031 = pneg %p191
        %p1032 = pneg %p188
        %p1033 = pneg %p212
        %p1034 = pneg %p209
        %p1035 = pneg %p233
        %p1036 = pneg %p230
        %p1037 = pneg %p254
        %p1038 = pneg %p251
        %p1039 = pneg %p275
        %p1040 = pneg %p272
        %p1041 = pneg %p296
        %p1042 = pneg %p293
        %p1043 = pneg %p317
        %p1044 = pneg %p314
        %p1045 = pneg %p338
        %p1046 = pneg %p335
        %p1047 = pneg %p359
        %p1048 = pneg %p356
        %p1049 = pneg %p380
        %p1050 = pneg %p377
        %p1051 = pneg %p401
        %p1052 = pneg %p398
        %p1053 = pneg %p422
        %p1054 = pneg %p419
        %p1055 = pneg %p443
        %p1056 = pneg %p440
        %p1057 = pneg %p464
        %p1058 = pneg %p461
        %p1059 = pneg %p485
        %p1060 = pneg %p482
        %p1061 = pneg %p506
        %p1062 = pneg %p503
        %p1063 = pneg %p527
        %p1064 = pneg %p524
        %p1065 = pneg %p548
        %p1066 = pneg %p545
        %p1067 = pneg %p569
        %p1068 = pneg %p566
        %p1069 = pneg %p590
        %p1070 = pneg %p587
        %p1071 = pneg %p611
        %p1072 = pneg %p608
        %p1073 = pneg %p637
        %p1074 = pneg %p634
        %s1075 = sand.u32 %s624, 1
        %s1076 = scalar_lea.sflag [#allocation5], %s1075
        %s1077 = sand.u32 %s624, 1
        %s1078 = smul.addr %s1077, 8
        %s1079 = scalar_lea.vmem [#allocation26], %s1078
        %p1080 = pneg %p663
        %p1081 = pneg %p660
        %p1082 = scmp.lt.s32.totalorder %s50, 1
        %s1083 = scalar_select %p1082, %s50, 1
        %s1084 = scalar_lea.vmem %s27, %s1083
        %p1085 = scmp.lt.s32.totalorder %s50, 1
        %s1086 = scalar_select %p1085, %s50, 1
        %s1087 = smul.addr %s1086, 8
        %s1088 = scalar_lea.vmem %s0, %s1087
        %p1089 = scmp.lt.s32.totalorder %s50, 1
        %s1090 = scalar_select %p1089, %s50, 1
        %s1091 = smul.addr %s1090, 8
        %s1092 = scalar_lea.vmem %s1, %s1091
        %p1093 = scmp.lt.s32.totalorder %s50, 1
        %s1094 = scalar_select %p1093, %s50, 1
        %s1095 = smul.addr %s1094, 8
        %s1096 = scalar_lea.vmem %s2, %s1095
        %p1097 = scmp.lt.s32.totalorder %s50, 1
        %s1098 = scalar_select %p1097, %s50, 1
        %s1099 = scalar_lea.vmem %s3, %s1098
        %p1100 = scmp.lt.s32.totalorder %s50, 1
        %s1101 = scalar_select %p1100, %s50, 1
        %s1102 = scalar_lea.vmem %s27, %s1101
        %v1104 = vlaneseq
        %v1105 = vand.u32 %v1104, 127
        %v1106 = vld [vmem:[#allocation3] sm:$0xf]
        %v1107 = vld [vmem:[#allocation3 + $0x4] sm:$0xf]
        %v1108 = vld [vmem:[#allocation3 + $0x8] sm:$0xf]
        %v1109 = vld [vmem:[#allocation3 + $0xc] sm:$0xf]
        %v1110 = vld [vmem:[#allocation3 + $0x10] sm:$0xf]
        %v1111 = vld [vmem:[#allocation3 + $0x14] sm:$0xf]
        %v1112 = vld [vmem:[#allocation3 + $0x18] sm:$0xf]
        %v1113 = vld [vmem:[#allocation3 + $0x1c] sm:$0xf]
        %v1114 = vld [vmem:[#allocation3 + $0x20] sm:$0xf]
        %v1115 = vld [vmem:[#allocation3 + $0x24] sm:$0xf]
        %v1116 = vld [vmem:[#allocation3 + $0x28] sm:$0xf]
        %v1117 = vld [vmem:[#allocation3 + $0x2c] sm:$0xf]
        %v1118 = vld [vmem:[#allocation3 + $0x30] sm:$0xf]
        %v1119 = vld [vmem:[#allocation3 + $0x34] sm:$0xf]
        %v1120 = vld [vmem:[#allocation3 + $0x38] sm:$0xf]
        %v1121 = vld [vmem:[#allocation3 + $0x3c] sm:$0xf]
        %v1122 = vld [vmem:[%s1099] sm:$0x1]
        %v1123 = vsub.f32 1.0, %v1122
        %v1124 = vmul.f32 %v1123, -1e+09
        %v1125 = vld [vmem:[%s1088] sm:$0xff]
        %1126 = vset.pattern.permute.xlu0 0
        %1127 = vperm.xlu0 %1126, %v1125
        %v1128 = vpop.permute.xlu0 %1127
        %vm1129 = vcmp.eq.s32.totalorder %v1105, %v1128
        %v1130 = vsel %vm1129, 1, 0
        %v1131 = vcvt.s32.f32 %v1130
        %v1132 = vpack.c.bf16 %v1131, %v1131
        %v1149 = vunpack.c.l.b16 %v1106
        %v1150 = vunpack.c.l.b16 %v1107
        %v1151 = vunpack.c.l.b16 %v1108
        %v1152 = vunpack.c.l.b16 %v1109
        %v1153 = vunpack.c.l.b16 %v1110
        %v1154 = vunpack.c.l.b16 %v1111
        %v1155 = vunpack.c.l.b16 %v1112
        %v1156 = vunpack.c.l.b16 %v1113
        %v1157 = vunpack.c.l.b16 %v1114
        %v1158 = vunpack.c.l.b16 %v1115
        %v1159 = vunpack.c.l.b16 %v1116
        %v1160 = vunpack.c.l.b16 %v1117
        %v1161 = vunpack.c.l.b16 %v1118
        %v1162 = vunpack.c.l.b16 %v1119
        %v1163 = vunpack.c.l.b16 %v1120
        %v1164 = vunpack.c.l.b16 %v1121
        %v1165 = vpack.c.b16 %v1150, %v1149
        %v1166 = vpack.c.b16 %v1152, %v1151
        %v1167 = vpack.c.b16 %v1154, %v1153
        %v1168 = vpack.c.b16 %v1156, %v1155
        %v1169 = vpack.c.b16 %v1158, %v1157
        %v1170 = vpack.c.b16 %v1160, %v1159
        %v1171 = vpack.c.b16 %v1162, %v1161
        %v1172 = vpack.c.b16 %v1164, %v1163
        %1181 = vmatpush.bf16.msra.mxu0 %v1172
        %1182 = vmatpush.bf16.msra.mxu0 %v1171
        %1183 = vmatpush.bf16.msra.mxu0 %v1170
        %1184 = vmatpush.bf16.msra.mxu0 %v1169
        %1185 = vmatpush.bf16.msra.mxu0 %v1168
        %1186 = vmatpush.bf16.msra.mxu0 %v1167
        %1187 = vmatpush.bf16.msra.mxu0 %v1166
        %1188 = vmatpush.bf16.msra.mxu0 %v1165
        %1189 = vmatmul.bf16.gmra.mxu0 %v1132
        %v1190 = vpop.f32.mrf.mxu0
        %v1191 = vadd.f32 0.0, %v1190
        %v1192 = vpop.f32.mrf.mxu0
        %1193 = vdwg.mxu0
        %v1194 = vld [vmem:[#allocation11] sm:$0xff]
        %v1195 = vld [vmem:[#allocation11 + $0x8] sm:$0xff]
        %v1196 = vld [vmem:[#allocation11 + $0x10] sm:$0xff]
        %v1197 = vld [vmem:[#allocation11 + $0x18] sm:$0xff]
        %v1199 = vperm.slane %v1124, 0
        %v1201 = vadd.f32 %v1194, %v1199
        %v1202 = vadd.f32 %v1195, %v1199
        %v1203 = vadd.f32 %v1196, %v1199
        %v1204 = vadd.f32 %v1197, %v1199
        %v1205 = vld [vmem:[%s6] sm:$0x1]
        %v1206 = vmul.f32 %v1191, %v1191
        %vm1207 = vcmask 523264
        %v1208 = vsel %vm1207, %v1206, 0.0
        %1209 = vadd.xlane.f32.xlu0 %v1208
        %v1210 = vpop.xlane.xlu0 %1209
        %v1211 = vrcp.pop 64.0
        %v1212 = vmul.f32 64.0, %v1211
        %v1213 = vsub.f32 1.0, %v1212
        %v1214 = vmul.f32 %v1211, %v1213
        %v1215 = vadd.f32 %v1211, %v1214
        %vm1216 = vweird.f32 %v1211
        %v1217 = vsel %vm1216, %v1211, %v1215
        %v1218 = vmul.f32 %v1210, %v1217
        %v1219 = vadd.f32 %v1218, 1e-06
        %v1220 = vrsqrt.pop %v1219
        %v1221 = vmul.f32 %v1220, %v1219
        %v1222 = vmul.f32 %v1221, %v1220
        %v1223 = vmul.f32 0.5, %v1222
        %v1224 = vsub.f32 1.5, %v1223
        %v1225 = vmul.f32 %v1220, %v1224
        %vm1226 = vweird.f32 %v1219
        %vm1227 = vweird.f32 %v1220
        %vm1228 = vmor %vm1226, %vm1227
        %v1229 = vsel %vm1228, %v1220, %v1225
        %v1230 = vmul.f32 %v1191, %v1229
        %v1232 = vperm.slane %v1205, 0
        %v1234 = vmul.f32 %v1230, %v1232
        %v1235 = vld [vmem:[#allocation8] sm:$0xff]
        %v1236 = vld [vmem:[#allocation8 + $0x8] sm:$0xff]
        %v1237 = vld [vmem:[#allocation8 + $0x10] sm:$0xff]
        %v1238 = vld [vmem:[#allocation8 + $0x18] sm:$0xff]
        %v1239 = vld [vmem:[#allocation8 + $0x20] sm:$0xff]
        %v1240 = vld [vmem:[#allocation8 + $0x28] sm:$0xff]
        %v1241 = vld [vmem:[#allocation8 + $0x30] sm:$0xff]
        %v1242 = vld [vmem:[#allocation8 + $0x38] sm:$0xff]
        %v1243 = vpack.c.bf16 %v1234, %v1234
        %v1252 = vunpack.c.l.b16 %v1235
        %v1253 = vunpack.c.h.b16 %v1235
        %v1254 = vunpack.c.l.b16 %v1236
        %v1255 = vunpack.c.h.b16 %v1236
        %v1256 = vunpack.c.l.b16 %v1237
        %v1257 = vunpack.c.h.b16 %v1237
        %v1258 = vunpack.c.l.b16 %v1238
        %v1259 = vunpack.c.h.b16 %v1238
        %v1260 = vunpack.c.l.b16 %v1239
        %v1261 = vunpack.c.h.b16 %v1239
        %v1262 = vunpack.c.l.b16 %v1240
        %v1263 = vunpack.c.h.b16 %v1240
        %v1264 = vunpack.c.l.b16 %v1241
        %v1265 = vunpack.c.h.b16 %v1241
        %v1266 = vunpack.c.l.b16 %v1242
        %v1267 = vunpack.c.h.b16 %v1242
        %v1268 = vpack.c.b16 %v1254, %v1252
        %v1269 = vpack.c.b16 %v1255, %v1253
        %v1270 = vpack.c.b16 %v1258, %v1256
        %v1271 = vpack.c.b16 %v1259, %v1257
        %v1272 = vpack.c.b16 %v1262, %v1260
        %v1273 = vpack.c.b16 %v1263, %v1261
        %v1274 = vpack.c.b16 %v1266, %v1264
        %v1275 = vpack.c.b16 %v1267, %v1265
        %v1285 = vsel %vm1207, %v1243, 0
        %1287 = vmatpush.bf16.msra.mxu0 0
        %1288 = vmatpush.bf16.msra.mxu0 0
        %1289 = vmatpush.bf16.msra.mxu0 0
        %1290 = vmatpush.bf16.msra.mxu0 0
        %1291 = vmatpush.bf16.msra.mxu0 %v1274
        %1292 = vmatpush.bf16.msra.mxu0 %v1272
        %1293 = vmatpush.bf16.msra.mxu0 %v1270
        %1294 = vmatpush.bf16.msra.mxu0 %v1268
        %1295 = vmatmul.bf16.gmra.mxu0 %v1285
        %v1296 = vpop.f32.mrf.mxu0
        %v1297 = vadd.f32 0.0, %v1296
        %v1298 = vpop.f32.mrf.mxu0
        %1299 = vdwg.mxu0
        %1300 = vmatpush.bf16.msra.mxu0 0
        %1301 = vmatpush.bf16.msra.mxu0 0
        %1302 = vmatpush.bf16.msra.mxu0 0
        %1303 = vmatpush.bf16.msra.mxu0 0
        %1304 = vmatpush.bf16.msra.mxu0 %v1275
        %1305 = vmatpush.bf16.msra.mxu0 %v1273
        %1306 = vmatpush.bf16.msra.mxu0 %v1271
        %1307 = vmatpush.bf16.msra.mxu0 %v1269
        %1308 = vmatmul.bf16.gmra.mxu0 %v1285
        %v1309 = vpop.f32.mrf.mxu0
        %v1310 = vadd.f32 0.0, %v1309
        %v1311 = vpop.f32.mrf.mxu0
        %1312 = vdwg.mxu0
        %v1313 = vpack.c.bf16 %v1310, %v1297
        %vm1314 = vcmask 1043456
        %vm1315 = vcmask 523268
        %vm1316 = vmor %vm1315, %vm1314
        %1317 = vst.msk [vmem:[#allocation2] sm:$0xff] %vm1316, %v1313
        %v1318 = vld [vmem:[#allocation2] sm:$0xf]
        %v1320 = vunpack.c.l.b16 %v1318
        %v1321 = vpack.c.b16 %v1320, %v1320
        %1322 = vrot.lane.b32.xlu0 %v1321, 64
        %v1323 = vpop.permute.xlu0 %1322
        %vm1324 = vcmask 130048
        %v1326 = vsel %vm1324, %v1318, 0
        %v1329 = vsel %vm1324, %v1323, 0
        %1331 = vmatpush.bf16.xpose.msra.mxu0 0
        %1332 = vmatpush.bf16.xpose.msra.mxu0 0
        %1333 = vmatpush.bf16.xpose.msra.mxu0 0
        %1334 = vmatpush.bf16.xpose.msra.mxu0 0
        %1335 = vmatpush.bf16.xpose.msra.mxu0 0
        %1336 = vmatpush.bf16.xpose.msra.mxu0 0
        %1337 = vmatpush.bf16.xpose.msra.mxu0 0
        %1338 = vmatpush.bf16.xpose.msra.mxu0 %v1329
        %1339 = vmatmul.bf16.gmra.mxu0 %v1326
        %v1340 = vpop.f32.mrf.mxu0
        %v1341 = vadd.f32 0.0, %v1340
        %v1342 = vpop.f32.mrf.mxu0
        %1343 = vdwg.mxu0
        %v1344 = vld [vmem:[#allocation2] sm:$0xf]
        %v1346 = vunpack.c.l.b16 %v1344
        %v1347 = vpack.c.b16 %v1346, %v1346
        %1348 = vrot.lane.b32.xlu0 %v1347, 112
        %v1349 = vpop.permute.xlu0 %1348
        %1350 = vrot.lane.b32.xlu0 %v1347, 48
        %v1351 = vpop.permute.xlu0 %1350
        %v1353 = vsel %vm1324, %v1349, 0
        %v1356 = vsel %vm1324, %v1351, 0
        %1358 = vmatpush.bf16.xpose.msra.mxu0 0
        %1359 = vmatpush.bf16.xpose.msra.mxu0 0
        %1360 = vmatpush.bf16.xpose.msra.mxu0 0
        %1361 = vmatpush.bf16.xpose.msra.mxu0 0
        %1362 = vmatpush.bf16.xpose.msra.mxu0 0
        %1363 = vmatpush.bf16.xpose.msra.mxu0 0
        %1364 = vmatpush.bf16.xpose.msra.mxu0 0
        %1365 = vmatpush.bf16.xpose.msra.mxu0 %v1356
        %1366 = vmatmul.bf16.gmra.mxu0 %v1353
        %v1367 = vpop.f32.mrf.mxu0
        %v1368 = vadd.f32 0.0, %v1367
        %v1369 = vpop.f32.mrf.mxu0
        %1370 = vdwg.mxu0
        %v1371 = vld [vmem:[#allocation2] sm:$0xf]
        %v1373 = vunpack.c.l.b16 %v1371
        %v1374 = vpack.c.b16 %v1373, %v1373
        %1375 = vrot.lane.b32.xlu0 %v1374, 96
        %v1376 = vpop.permute.xlu0 %1375
        %1377 = vrot.lane.b32.xlu0 %v1374, 32
        %v1378 = vpop.permute.xlu0 %1377
        %v1380 = vsel %vm1324, %v1376, 0
        %v1383 = vsel %vm1324, %v1378, 0
        %1385 = vmatpush.bf16.xpose.msra.mxu0 0
        %1386 = vmatpush.bf16.xpose.msra.mxu0 0
        %1387 = vmatpush.bf16.xpose.msra.mxu0 0
        %1388 = vmatpush.bf16.xpose.msra.mxu0 0
        %1389 = vmatpush.bf16.xpose.msra.mxu0 0
        %1390 = vmatpush.bf16.xpose.msra.mxu0 0
        %1391 = vmatpush.bf16.xpose.msra.mxu0 0
        %1392 = vmatpush.bf16.xpose.msra.mxu0 %v1383
        %1393 = vmatmul.bf16.gmra.mxu0 %v1380
        %v1394 = vpop.f32.mrf.mxu0
        %v1395 = vadd.f32 0.0, %v1394
        %v1396 = vpop.f32.mrf.mxu0
        %1397 = vdwg.mxu0
        %v1398 = vld [vmem:[#allocation2] sm:$0xf]
        %v1400 = vunpack.c.l.b16 %v1398
        %v1401 = vpack.c.b16 %v1400, %v1400
        %1402 = vrot.lane.b32.xlu0 %v1401, 80
        %v1403 = vpop.permute.xlu0 %1402
        %1404 = vrot.lane.b32.xlu0 %v1401, 16
        %v1405 = vpop.permute.xlu0 %1404
        %v1407 = vsel %vm1324, %v1403, 0
        %v1410 = vsel %vm1324, %v1405, 0
        %1412 = vmatpush.bf16.xpose.msra.mxu0 0
        %1413 = vmatpush.bf16.xpose.msra.mxu0 0
        %1414 = vmatpush.bf16.xpose.msra.mxu0 0
        %1415 = vmatpush.bf16.xpose.msra.mxu0 0
        %1416 = vmatpush.bf16.xpose.msra.mxu0 0
        %1417 = vmatpush.bf16.xpose.msra.mxu0 0
        %1418 = vmatpush.bf16.xpose.msra.mxu0 0
        %1419 = vmatpush.bf16.xpose.msra.mxu0 %v1410
        %1420 = vmatmul.bf16.gmra.mxu0 %v1407
        %v1421 = vpop.f32.mrf.mxu0
        %v1422 = vadd.f32 0.0, %v1421
        %v1423 = vpop.f32.mrf.mxu0
        %1424 = vdwg.mxu0
        %v1425 = vadd.f32 %v1341, %v1201
        %v1426 = vadd.f32 %v1368, %v1202
        %v1427 = vadd.f32 %v1395, %v1203
        %v1428 = vadd.f32 %v1422, %v1204
        %vm1429 = vcmask 64512
        %v1430 = vsel %vm1429, %v1425, -inf
        %1431 = vmax.xlane.f32.xlu0 %v1430
        %v1432 = vpop.xlane.xlu0 %1431
        %v1433 = vsel %vm1429, %v1426, -inf
        %1434 = vmax.xlane.f32.xlu0 %v1433
        %v1435 = vpop.xlane.xlu0 %1434
        %v1436 = vsel %vm1429, %v1427, -inf
        %1437 = vmax.xlane.f32.xlu0 %v1436
        %v1438 = vpop.xlane.xlu0 %1437
        %v1439 = vsel %vm1429, %v1428, -inf
        %1440 = vmax.xlane.f32.xlu0 %v1439
        %v1441 = vpop.xlane.xlu0 %1440
        %v1442 = vsub.f32 %v1425, %v1432
        %v1443 = vsub.f32 %v1426, %v1435
        %v1444 = vsub.f32 %v1427, %v1438
        %v1445 = vsub.f32 %v1428, %v1441
        %v1446 = vmul.f32 %v1442, 1.442695
        %v1447 = vpow.pop %v1446
        %v1448 = vmul.f32 %v1443, 1.442695
        %v1449 = vpow.pop %v1448
        %v1450 = vmul.f32 %v1444, 1.442695
        %v1451 = vpow.pop %v1450
        %v1452 = vmul.f32 %v1445, 1.442695
        %v1453 = vpow.pop %v1452
        %v1454 = vsel %vm1429, %v1447, 0.0
        %1455 = vadd.xlane.f32.xlu0 %v1454
        %v1456 = vpop.xlane.xlu0 %1455
        %v1457 = vsel %vm1429, %v1449, 0.0
        %1458 = vadd.xlane.f32.xlu0 %v1457
        %v1459 = vpop.xlane.xlu0 %1458
        %v1460 = vsel %vm1429, %v1451, 0.0
        %1461 = vadd.xlane.f32.xlu0 %v1460
        %v1462 = vpop.xlane.xlu0 %1461
        %v1463 = vsel %vm1429, %v1453, 0.0
        %1464 = vadd.xlane.f32.xlu0 %v1463
        %v1465 = vpop.xlane.xlu0 %1464
        %v1466 = vrcp.pop %v1456
        %v1467 = vrcp.pop %v1459
        %v1468 = vrcp.pop %v1462
        %v1469 = vrcp.pop %v1465
        %v1470 = vmul.f32 %v1447, %v1466
        %v1471 = vmul.f32 %v1449, %v1467
        %v1472 = vmul.f32 %v1451, %v1468
        %v1473 = vmul.f32 %v1453, %v1469
        %v1474 = vld [vmem:[#allocation2 + $0x4] sm:$0xf]
        %v1475 = vpack.c.bf16 %v1470, %v1470
        %v1477 = vsel %vm1429, %v1475, 0
        %v1480 = vsel %vm1314, %v1474, 0
        %1482 = vmatpush.bf16.msra.mxu0 0
        %1483 = vmatpush.bf16.msra.mxu0 0
        %1484 = vmatpush.bf16.msra.mxu0 0
        %1485 = vmatpush.bf16.msra.mxu0 0
        %1486 = vmatpush.bf16.msra.mxu0 0
        %1487 = vmatpush.bf16.msra.mxu0 0
        %1488 = vmatpush.bf16.msra.mxu0 0
        %1489 = vmatpush.bf16.msra.mxu0 %v1480
        %1490 = vmatmul.bf16.gmra.mxu0 %v1477
        %v1491 = vpop.f32.mrf.mxu0
        %v1492 = vadd.f32 0.0, %v1491
        %v1493 = vpop.f32.mrf.mxu0
        %1494 = vdwg.mxu0
        %v1495 = vpack.c.bf16 %v1471, %v1471
        %v1497 = vunpack.c.l.b16 %v1474
        %v1498 = vpack.c.b16 %v1497, %v1497
        %1499 = vrot.lane.b32.xlu0 %v1498, 112
        %v1500 = vpop.permute.xlu0 %1499
        %v1502 = vsel %vm1429, %v1495, 0
        %v1505 = vsel %vm1314, %v1500, 0
        %1507 = vmatpush.bf16.msra.mxu0 0
        %1508 = vmatpush.bf16.msra.mxu0 0
        %1509 = vmatpush.bf16.msra.mxu0 0
        %1510 = vmatpush.bf16.msra.mxu0 0
        %1511 = vmatpush.bf16.msra.mxu0 0
        %1512 = vmatpush.bf16.msra.mxu0 0
        %1513 = vmatpush.bf16.msra.mxu0 0
        %1514 = vmatpush.bf16.msra.mxu0 %v1505
        %1515 = vmatmul.bf16.gmra.mxu0 %v1502
        %v1516 = vpop.f32.mrf.mxu0
        %v1517 = vadd.f32 0.0, %v1516
        %v1518 = vpop.f32.mrf.mxu0
        %1519 = vdwg.mxu0
        %v1520 = vpack.c.bf16 %v1472, %v1472
        %1521 = vrot.lane.b32.xlu0 %v1498, 96
        %v1522 = vpop.permute.xlu0 %1521
        %v1524 = vsel %vm1429, %v1520, 0
        %v1527 = vsel %vm1314, %v1522, 0
        %1529 = vmatpush.bf16.msra.mxu0 0
        %1530 = vmatpush.bf16.msra.mxu0 0
        %1531 = vmatpush.bf16.msra.mxu0 0
        %1532 = vmatpush.bf16.msra.mxu0 0
        %1533 = vmatpush.bf16.msra.mxu0 0
        %1534 = vmatpush.bf16.msra.mxu0 0
        %1535 = vmatpush.bf16.msra.mxu0 0
        %1536 = vmatpush.bf16.msra.mxu0 %v1527
        %1537 = vmatmul.bf16.gmra.mxu0 %v1524
        %v1538 = vpop.f32.mrf.mxu0
        %v1539 = vadd.f32 0.0, %v1538
        %v1540 = vpop.f32.mrf.mxu0
        %1541 = vdwg.mxu0
        %v1542 = vpack.c.bf16 %v1473, %v1473
        %1543 = vrot.lane.b32.xlu0 %v1498, 80
        %v1544 = vpop.permute.xlu0 %1543
        %v1546 = vsel %vm1429, %v1542, 0
        %v1549 = vsel %vm1314, %v1544, 0
        %1551 = vmatpush.bf16.msra.mxu0 0
        %1552 = vmatpush.bf16.msra.mxu0 0
        %1553 = vmatpush.bf16.msra.mxu0 0
        %1554 = vmatpush.bf16.msra.mxu0 0
        %1555 = vmatpush.bf16.msra.mxu0 0
        %1556 = vmatpush.bf16.msra.mxu0 0
        %1557 = vmatpush.bf16.msra.mxu0 0
        %1558 = vmatpush.bf16.msra.mxu0 %v1549
        %1559 = vmatmul.bf16.gmra.mxu0 %v1546
        %v1560 = vpop.f32.mrf.mxu0
        %v1561 = vadd.f32 0.0, %v1560
        %v1562 = vpop.f32.mrf.mxu0
        %1563 = vdwg.mxu0
        %1565 = vrot.lane.b32.xlu0 %v1517, 16
        %v1566 = vpop.permute.xlu0 %1565
        %1569 = vrot.lane.b32.xlu0 %v1539, 32
        %v1570 = vpop.permute.xlu0 %1569
        %1573 = vrot.lane.b32.xlu0 %v1561, 48
        %v1574 = vpop.permute.xlu0 %1573
        %v1576 = vsel %vm1324, %v1492, %v1566
        %vm1577 = vcmask 261120
        %v1578 = vsel %vm1577, %v1576, %v1570
        %vm1579 = vcmask 392192
        %v1580 = vsel %vm1579, %v1578, %v1574
        %v1581 = vld [vmem:[#allocation9] sm:$0xf]
        %v1582 = vld [vmem:[#allocation9 + $0x4] sm:$0xf]
        %v1583 = vld [vmem:[#allocation9 + $0x8] sm:$0xf]
        %v1584 = vld [vmem:[#allocation9 + $0xc] sm:$0xf]
        %v1585 = vld [vmem:[#allocation9 + $0x10] sm:$0xf]
        %v1586 = vld [vmem:[#allocation9 + $0x14] sm:$0xf]
        %v1587 = vld [vmem:[#allocation9 + $0x18] sm:$0xf]
        %v1588 = vld [vmem:[#allocation9 + $0x1c] sm:$0xf]
        %v1589 = vpack.c.bf16 %v1580, %v1580
        %v1598 = vunpack.c.l.b16 %v1581
        %v1599 = vunpack.c.l.b16 %v1582
        %v1600 = vunpack.c.l.b16 %v1583
        %v1601 = vunpack.c.l.b16 %v1584
        %v1602 = vunpack.c.l.b16 %v1585
        %v1603 = vunpack.c.l.b16 %v1586
        %v1604 = vunpack.c.l.b16 %v1587
        %v1605 = vunpack.c.l.b16 %v1588
        %v1606 = vpack.c.b16 %v1599, %v1598
        %v1607 = vpack.c.b16 %v1601, %v1600
        %v1608 = vpack.c.b16 %v1603, %v1602
        %v1609 = vpack.c.b16 %v1605, %v1604
        %v1615 = vsel %vm1207, %v1589, 0
        %1617 = vmatpush.bf16.msra.mxu0 0
        %1618 = vmatpush.bf16.msra.mxu0 0
        %1619 = vmatpush.bf16.msra.mxu0 0
        %1620 = vmatpush.bf16.msra.mxu0 0
        %1621 = vmatpush.bf16.msra.mxu0 %v1609
        %1622 = vmatpush.bf16.msra.mxu0 %v1608
        %1623 = vmatpush.bf16.msra.mxu0 %v1607
        %1624 = vmatpush.bf16.msra.mxu0 %v1606
        %1625 = vmatmul.bf16.gmra.mxu0 %v1615
        %v1626 = vpop.f32.mrf.mxu0
        %v1627 = vadd.f32 0.0, %v1626
        %v1628 = vpop.f32.mrf.mxu0
        %1629 = vdwg.mxu0
        %v1630 = vadd.f32 %v1191, %v1627
        %v1631 = vld [vmem:[%s10] sm:$0x1]
        %v1632 = vmul.f32 %v1630, %v1630
        %v1633 = vsel %vm1207, %v1632, 0.0
        %1634 = vadd.xlane.f32.xlu0 %v1633
        %v1635 = vpop.xlane.xlu0 %1634
        %v1636 = vmul.f32 %v1635, %v1217
        %v1637 = vadd.f32 %v1636, 1e-06
        %v1638 = vrsqrt.pop %v1637
        %v1639 = vmul.f32 %v1638, %v1637
        %v1640 = vmul.f32 %v1639, %v1638
        %v1641 = vmul.f32 0.5, %v1640
        %v1642 = vsub.f32 1.5, %v1641
        %v1643 = vmul.f32 %v1638, %v1642
        %vm1644 = vweird.f32 %v1637
        %vm1645 = vweird.f32 %v1638
        %vm1646 = vmor %vm1644, %vm1645
        %v1647 = vsel %vm1646, %v1638, %v1643
        %v1648 = vmul.f32 %v1630, %v1647
        %v1650 = vperm.slane %v1631, 0
        %v1652 = vmul.f32 %v1648, %v1650
        %v1653 = vld [vmem:[#allocation12] sm:$0xf]
        %v1654 = vld [vmem:[#allocation12 + $0x4] sm:$0xf]
        %v1655 = vld [vmem:[#allocation12 + $0x8] sm:$0xf]
        %v1656 = vld [vmem:[#allocation12 + $0xc] sm:$0xf]
        %v1657 = vld [vmem:[#allocation12 + $0x10] sm:$0xf]
        %v1658 = vld [vmem:[#allocation12 + $0x14] sm:$0xf]
        %v1659 = vld [vmem:[#allocation12 + $0x18] sm:$0xf]
        %v1660 = vld [vmem:[#allocation12 + $0x1c] sm:$0xf]
        %v1661 = vpack.c.bf16 %v1652, %v1652
        %v1670 = vunpack.c.l.b16 %v1653
        %v1671 = vunpack.c.l.b16 %v1654
        %v1672 = vunpack.c.l.b16 %v1655
        %v1673 = vunpack.c.l.b16 %v1656
        %v1674 = vunpack.c.l.b16 %v1657
        %v1675 = vunpack.c.l.b16 %v1658
        %v1676 = vunpack.c.l.b16 %v1659
        %v1677 = vunpack.c.l.b16 %v1660
        %v1678 = vpack.c.b16 %v1671, %v1670
        %v1679 = vpack.c.b16 %v1673, %v1672
        %v1680 = vpack.c.b16 %v1675, %v1674
        %v1681 = vpack.c.b16 %v1677, %v1676
        %v1687 = vsel %vm1207, %v1661, 0
        %1689 = vmatpush.bf16.msra.mxu0 0
        %1690 = vmatpush.bf16.msra.mxu0 0
        %1691 = vmatpush.bf16.msra.mxu0 0
        %1692 = vmatpush.bf16.msra.mxu0 0
        %1693 = vmatpush.bf16.msra.mxu0 %v1681
        %1694 = vmatpush.bf16.msra.mxu0 %v1680
        %1695 = vmatpush.bf16.msra.mxu0 %v1679
        %1696 = vmatpush.bf16.msra.mxu0 %v1678
        %1697 = vmatmul.bf16.gmra.mxu0 %v1687
        %v1698 = vpop.f32.mrf.mxu0
        %v1699 = vadd.f32 0.0, %v1698
        %v1700 = vpop.f32.mrf.mxu0
        %1701 = vdwg.mxu0
        %v1702 = vmax.f32 %v1699, 0.0
        %v1703 = vld [vmem:[#allocation14] sm:$0xf]
        %v1704 = vld [vmem:[#allocation14 + $0x4] sm:$0xf]
        %v1705 = vld [vmem:[#allocation14 + $0x8] sm:$0xf]
        %v1706 = vld [vmem:[#allocation14 + $0xc] sm:$0xf]
        %v1707 = vld [vmem:[#allocation14 + $0x10] sm:$0xf]
        %v1708 = vld [vmem:[#allocation14 + $0x14] sm:$0xf]
        %v1709 = vld [vmem:[#allocation14 + $0x18] sm:$0xf]
        %v1710 = vld [vmem:[#allocation14 + $0x1c] sm:$0xf]
        %v1711 = vld [vmem:[#allocation14 + $0x20] sm:$0xf]
        %v1712 = vld [vmem:[#allocation14 + $0x24] sm:$0xf]
        %v1713 = vld [vmem:[#allocation14 + $0x28] sm:$0xf]
        %v1714 = vld [vmem:[#allocation14 + $0x2c] sm:$0xf]
        %v1715 = vld [vmem:[#allocation14 + $0x30] sm:$0xf]
        %v1716 = vld [vmem:[#allocation14 + $0x34] sm:$0xf]
        %v1717 = vld [vmem:[#allocation14 + $0x38] sm:$0xf]
        %v1718 = vld [vmem:[#allocation14 + $0x3c] sm:$0xf]
        %v1719 = vpack.c.bf16 %v1702, %v1702
        %v1736 = vunpack.c.l.b16 %v1703
        %v1737 = vunpack.c.l.b16 %v1704
        %v1738 = vunpack.c.l.b16 %v1705
        %v1739 = vunpack.c.l.b16 %v1706
        %v1740 = vunpack.c.l.b16 %v1707
        %v1741 = vunpack.c.l.b16 %v1708
        %v1742 = vunpack.c.l.b16 %v1709
        %v1743 = vunpack.c.l.b16 %v1710
        %v1744 = vunpack.c.l.b16 %v1711
        %v1745 = vunpack.c.l.b16 %v1712
        %v1746 = vunpack.c.l.b16 %v1713
        %v1747 = vunpack.c.l.b16 %v1714
        %v1748 = vunpack.c.l.b16 %v1715
        %v1749 = vunpack.c.l.b16 %v1716
        %v1750 = vunpack.c.l.b16 %v1717
        %v1751 = vunpack.c.l.b16 %v1718
        %v1752 = vpack.c.b16 %v1737, %v1736
        %v1753 = vpack.c.b16 %v1739, %v1738
        %v1754 = vpack.c.b16 %v1741, %v1740
        %v1755 = vpack.c.b16 %v1743, %v1742
        %v1756 = vpack.c.b16 %v1745, %v1744
        %v1757 = vpack.c.b16 %v1747, %v1746
        %v1758 = vpack.c.b16 %v1749, %v1748
        %v1759 = vpack.c.b16 %v1751, %v1750
        %1768 = vmatpush.bf16.msra.mxu0 %v1759
        %1769 = vmatpush.bf16.msra.mxu0 %v1758
        %1770 = vmatpush.bf16.msra.mxu0 %v1757
        %1771 = vmatpush.bf16.msra.mxu0 %v1756
        %1772 = vmatpush.bf16.msra.mxu0 %v1755
        %1773 = vmatpush.bf16.msra.mxu0 %v1754
        %1774 = vmatpush.bf16.msra.mxu0 %v1753
        %1775 = vmatpush.bf16.msra.mxu0 %v1752
        %1776 = vmatmul.bf16.gmra.mxu0 %v1719
        %v1777 = vpop.f32.mrf.mxu0
        %v1778 = vadd.f32 0.0, %v1777
        %v1779 = vpop.f32.mrf.mxu0
        %1780 = vdwg.mxu0
        %v1781 = vadd.f32 %v1630, %v1778
        %v1782 = vld [vmem:[%s13] sm:$0x1]
        %v1783 = vmul.f32 %v1781, %v1781
        %v1784 = vsel %vm1207, %v1783, 0.0
        %1785 = vadd.xlane.f32.xlu0 %v1784
        %v1786 = vpop.xlane.xlu0 %1785
        %v1787 = vmul.f32 %v1786, %v1217
        %v1788 = vadd.f32 %v1787, 1e-06
        %v1789 = vrsqrt.pop %v1788
        %v1790 = vmul.f32 %v1789, %v1788
        %v1791 = vmul.f32 %v1790, %v1789
        %v1792 = vmul.f32 0.5, %v1791
        %v1793 = vsub.f32 1.5, %v1792
        %v1794 = vmul.f32 %v1789, %v1793
        %vm1795 = vweird.f32 %v1788
        %vm1796 = vweird.f32 %v1789
        %vm1797 = vmor %vm1795, %vm1796
        %v1798 = vsel %vm1797, %v1789, %v1794
        %v1799 = vmul.f32 %v1781, %v1798
        %v1801 = vperm.slane %v1782, 0
        %v1803 = vmul.f32 %v1799, %v1801
        %v1804 = vld [vmem:[%s1092] sm:$0xff]
        %1805 = vset.pattern.permute.xlu0 0
        %1806 = vperm.xlu0 %1805, %v1804
        %v1807 = vpop.permute.xlu0 %1806
        %vm1808 = vcmp.eq.s32.totalorder %v1105, %v1807
        %v1809 = vsel %vm1808, 1, 0
        %v1810 = vcvt.s32.f32 %v1809
        %v1811 = vpack.c.bf16 %v1810, %v1810
        %1812 = vmatpush.bf16.msra.mxu0 %v1172
        %1813 = vmatpush.bf16.msra.mxu0 %v1171
        %1814 = vmatpush.bf16.msra.mxu0 %v1170
        %1815 = vmatpush.bf16.msra.mxu0 %v1169
        %1816 = vmatpush.bf16.msra.mxu0 %v1168
        %1817 = vmatpush.bf16.msra.mxu0 %v1167
        %1818 = vmatpush.bf16.msra.mxu0 %v1166
        %1819 = vmatpush.bf16.msra.mxu0 %v1165
        %1820 = vmatmul.bf16.gmra.mxu0 %v1811
        %v1821 = vpop.f32.mrf.mxu0
        %v1822 = vadd.f32 0.0, %v1821
        %v1823 = vpop.f32.mrf.mxu0
        %1824 = vdwg.mxu0
        %v1825 = vlaneseq
        %v1826 = vshrl.u32 %v1825, 7
        %vm1827 = vcmp.le.s32.totalorder %v1105, %v1826
        %v1828 = vsel %vm1827, 0.0, -1e+09
        %v1829 = vld [vmem:[#allocation18] sm:$0xff]
        %v1830 = vld [vmem:[#allocation18 + $0x8] sm:$0xff]
        %v1831 = vld [vmem:[#allocation18 + $0x10] sm:$0xff]
        %v1832 = vld [vmem:[#allocation18 + $0x18] sm:$0xff]
        %v1833 = vadd.f32 %v1829, %v1828
        %v1834 = vadd.f32 %v1830, %v1828
        %v1835 = vadd.f32 %v1831, %v1828
        %v1836 = vadd.f32 %v1832, %v1828
        %v1837 = vld [vmem:[%s14] sm:$0x1]
        %v1838 = vmul.f32 %v1822, %v1822
        %v1839 = vsel %vm1207, %v1838, 0.0
        %1840 = vadd.xlane.f32.xlu0 %v1839
        %v1841 = vpop.xlane.xlu0 %1840
        %v1842 = vmul.f32 %v1841, %v1217
        %v1843 = vadd.f32 %v1842, 1e-06
        %v1844 = vrsqrt.pop %v1843
        %v1845 = vmul.f32 %v1844, %v1843
        %v1846 = vmul.f32 %v1845, %v1844
        %v1847 = vmul.f32 0.5, %v1846
        %v1848 = vsub.f32 1.5, %v1847
        %v1849 = vmul.f32 %v1844, %v1848
        %vm1850 = vweird.f32 %v1843
        %vm1851 = vweird.f32 %v1844
        %vm1852 = vmor %vm1850, %vm1851
        %v1853 = vsel %vm1852, %v1844, %v1849
        %v1854 = vmul.f32 %v1822, %v1853
        %v1856 = vperm.slane %v1837, 0
        %v1858 = vmul.f32 %v1854, %v1856
        %v1859 = vld [vmem:[#allocation15] sm:$0xff]
        %v1860 = vld [vmem:[#allocation15 + $0x8] sm:$0xff]
        %v1861 = vld [vmem:[#allocation15 + $0x10] sm:$0xff]
        %v1862 = vld [vmem:[#allocation15 + $0x18] sm:$0xff]
        %v1863 = vld [vmem:[#allocation15 + $0x20] sm:$0xff]
        %v1864 = vld [vmem:[#allocation15 + $0x28] sm:$0xff]
        %v1865 = vld [vmem:[#allocation15 + $0x30] sm:$0xff]
        %v1866 = vld [vmem:[#allocation15 + $0x38] sm:$0xff]
        %v1867 = vpack.c.bf16 %v1858, %v1858
        %v1876 = vunpack.c.l.b16 %v1859
        %v1877 = vunpack.c.h.b16 %v1859
        %v1878 = vunpack.c.l.b16 %v1860
        %v1879 = vunpack.c.h.b16 %v1860
        %v1880 = vunpack.c.l.b16 %v1861
        %v1881 = vunpack.c.h.b16 %v1861
        %v1882 = vunpack.c.l.b16 %v1862
        %v1883 = vunpack.c.h.b16 %v1862
        %v1884 = vunpack.c.l.b16 %v1863
        %v1885 = vunpack.c.h.b16 %v1863
        %v1886 = vunpack.c.l.b16 %v1864
        %v1887 = vunpack.c.h.b16 %v1864
        %v1888 = vunpack.c.l.b16 %v1865
        %v1889 = vunpack.c.h.b16 %v1865
        %v1890 = vunpack.c.l.b16 %v1866
        %v1891 = vunpack.c.h.b16 %v1866
        %v1892 = vpack.c.b16 %v1878, %v1876
        %v1893 = vpack.c.b16 %v1879, %v1877
        %v1894 = vpack.c.b16 %v1882, %v1880
        %v1895 = vpack.c.b16 %v1883, %v1881
        %v1896 = vpack.c.b16 %v1886, %v1884
        %v1897 = vpack.c.b16 %v1887, %v1885
        %v1898 = vpack.c.b16 %v1890, %v1888
        %v1899 = vpack.c.b16 %v1891, %v1889
        %v1909 = vsel %vm1207, %v1867, 0
        %1911 = vmatpush.bf16.msra.mxu0 0
        %1912 = vmatpush.bf16.msra.mxu0 0
        %1913 = vmatpush.bf16.msra.mxu0 0
        %1914 = vmatpush.bf16.msra.mxu0 0
        %1915 = vmatpush.bf16.msra.mxu0 %v1898
        %1916 = vmatpush.bf16.msra.mxu0 %v1896
        %1917 = vmatpush.bf16.msra.mxu0 %v1894
        %1918 = vmatpush.bf16.msra.mxu0 %v1892
        %1919 = vmatmul.bf16.gmra.mxu0 %v1909
        %v1920 = vpop.f32.mrf.mxu0
        %v1921 = vadd.f32 0.0, %v1920
        %v1922 = vpop.f32.mrf.mxu0
        %1923 = vdwg.mxu0
        %1924 = vmatpush.bf16.msra.mxu0 0
        %1925 = vmatpush.bf16.msra.mxu0 0
        %1926 = vmatpush.bf16.msra.mxu0 0
        %1927 = vmatpush.bf16.msra.mxu0 0
        %1928 = vmatpush.bf16.msra.mxu0 %v1899
        %1929 = vmatpush.bf16.msra.mxu0 %v1897
        %1930 = vmatpush.bf16.msra.mxu0 %v1895
        %1931 = vmatpush.bf16.msra.mxu0 %v1893
        %1932 = vmatmul.bf16.gmra.mxu0 %v1909
        %v1933 = vpop.f32.mrf.mxu0
        %v1934 = vadd.f32 0.0, %v1933
        %v1935 = vpop.f32.mrf.mxu0
        %1936 = vdwg.mxu0
        %v1937 = vpack.c.bf16 %v1934, %v1921
        %1938 = vst.msk [vmem:[#allocation2] sm:$0xff] %vm1316, %v1937
        %v1939 = vld [vmem:[#allocation2] sm:$0xf]
        %v1941 = vunpack.c.l.b16 %v1939
        %v1942 = vpack.c.b16 %v1941, %v1941
        %1943 = vrot.lane.b32.xlu0 %v1942, 64
        %v1944 = vpop.permute.xlu0 %1943
        %v1946 = vsel %vm1324, %v1939, 0
        %v1949 = vsel %vm1324, %v1944, 0
        %1951 = vmatpush.bf16.xpose.msra.mxu0 0
        %1952 = vmatpush.bf16.xpose.msra.mxu0 0
        %1953 = vmatpush.bf16.xpose.msra.mxu0 0
        %1954 = vmatpush.bf16.xpose.msra.mxu0 0
        %1955 = vmatpush.bf16.xpose.msra.mxu0 0
        %1956 = vmatpush.bf16.xpose.msra.mxu0 0
        %1957 = vmatpush.bf16.xpose.msra.mxu0 0
        %1958 = vmatpush.bf16.xpose.msra.mxu0 %v1949
        %1959 = vmatmul.bf16.gmra.mxu0 %v1946
        %v1960 = vpop.f32.mrf.mxu0
        %v1961 = vadd.f32 0.0, %v1960
        %v1962 = vpop.f32.mrf.mxu0
        %1963 = vdwg.mxu0
        %v1964 = vld [vmem:[#allocation2] sm:$0xf]
        %v1966 = vunpack.c.l.b16 %v1964
        %v1967 = vpack.c.b16 %v1966, %v1966
        %1968 = vrot.lane.b32.xlu0 %v1967, 112
        %v1969 = vpop.permute.xlu0 %1968
        %1970 = vrot.lane.b32.xlu0 %v1967, 48
        %v1971 = vpop.permute.xlu0 %1970
        %v1973 = vsel %vm1324, %v1969, 0
        %v1976 = vsel %vm1324, %v1971, 0
        %1978 = vmatpush.bf16.xpose.msra.mxu0 0
        %1979 = vmatpush.bf16.xpose.msra.mxu0 0
        %1980 = vmatpush.bf16.xpose.msra.mxu0 0
        %1981 = vmatpush.bf16.xpose.msra.mxu0 0
        %1982 = vmatpush.bf16.xpose.msra.mxu0 0
        %1983 = vmatpush.bf16.xpose.msra.mxu0 0
        %1984 = vmatpush.bf16.xpose.msra.mxu0 0
        %1985 = vmatpush.bf16.xpose.msra.mxu0 %v1976
        %1986 = vmatmul.bf16.gmra.mxu0 %v1973
        %v1987 = vpop.f32.mrf.mxu0
        %v1988 = vadd.f32 0.0, %v1987
        %v1989 = vpop.f32.mrf.mxu0
        %1990 = vdwg.mxu0
        %v1991 = vld [vmem:[#allocation2] sm:$0xf]
        %v1993 = vunpack.c.l.b16 %v1991
        %v1994 = vpack.c.b16 %v1993, %v1993
        %1995 = vrot.lane.b32.xlu0 %v1994, 96
        %v1996 = vpop.permute.xlu0 %1995
        %1997 = vrot.lane.b32.xlu0 %v1994, 32
        %v1998 = vpop.permute.xlu0 %1997
        %v2000 = vsel %vm1324, %v1996, 0
        %v2003 = vsel %vm1324, %v1998, 0
        %2005 = vmatpush.bf16.xpose.msra.mxu0 0
        %2006 = vmatpush.bf16.xpose.msra.mxu0 0
        %2007 = vmatpush.bf16.xpose.msra.mxu0 0
        %2008 = vmatpush.bf16.xpose.msra.mxu0 0
        %2009 = vmatpush.bf16.xpose.msra.mxu0 0
        %2010 = vmatpush.bf16.xpose.msra.mxu0 0
        %2011 = vmatpush.bf16.xpose.msra.mxu0 0
        %2012 = vmatpush.bf16.xpose.msra.mxu0 %v2003
        %2013 = vmatmul.bf16.gmra.mxu0 %v2000
        %v2014 = vpop.f32.mrf.mxu0
        %v2015 = vadd.f32 0.0, %v2014
        %v2016 = vpop.f32.mrf.mxu0
        %2017 = vdwg.mxu0
        %v2018 = vld [vmem:[#allocation2] sm:$0xf]
        %v2020 = vunpack.c.l.b16 %v2018
        %v2021 = vpack.c.b16 %v2020, %v2020
        %2022 = vrot.lane.b32.xlu0 %v2021, 80
        %v2023 = vpop.permute.xlu0 %2022
        %2024 = vrot.lane.b32.xlu0 %v2021, 16
        %v2025 = vpop.permute.xlu0 %2024
        %v2027 = vsel %vm1324, %v2023, 0
        %v2030 = vsel %vm1324, %v2025, 0
        %2032 = vmatpush.bf16.xpose.msra.mxu0 0
        %2033 = vmatpush.bf16.xpose.msra.mxu0 0
        %2034 = vmatpush.bf16.xpose.msra.mxu0 0
        %2035 = vmatpush.bf16.xpose.msra.mxu0 0
        %2036 = vmatpush.bf16.xpose.msra.mxu0 0
        %2037 = vmatpush.bf16.xpose.msra.mxu0 0
        %2038 = vmatpush.bf16.xpose.msra.mxu0 0
        %2039 = vmatpush.bf16.xpose.msra.mxu0 %v2030
        %2040 = vmatmul.bf16.gmra.mxu0 %v2027
        %v2041 = vpop.f32.mrf.mxu0
        %v2042 = vadd.f32 0.0, %v2041
        %v2043 = vpop.f32.mrf.mxu0
        %2044 = vdwg.mxu0
        %v2045 = vadd.f32 %v1961, %v1833
        %v2046 = vadd.f32 %v1988, %v1834
        %v2047 = vadd.f32 %v2015, %v1835
        %v2048 = vadd.f32 %v2042, %v1836
        %v2049 = vsel %vm1429, %v2045, -inf
        %2050 = vmax.xlane.f32.xlu0 %v2049
        %v2051 = vpop.xlane.xlu0 %2050
        %v2052 = vsel %vm1429, %v2046, -inf
        %2053 = vmax.xlane.f32.xlu0 %v2052
        %v2054 = vpop.xlane.xlu0 %2053
        %v2055 = vsel %vm1429, %v2047, -inf
        %2056 = vmax.xlane.f32.xlu0 %v2055
        %v2057 = vpop.xlane.xlu0 %2056
        %v2058 = vsel %vm1429, %v2048, -inf
        %2059 = vmax.xlane.f32.xlu0 %v2058
        %v2060 = vpop.xlane.xlu0 %2059
        %v2061 = vsub.f32 %v2045, %v2051
        %v2062 = vsub.f32 %v2046, %v2054
        %v2063 = vsub.f32 %v2047, %v2057
        %v2064 = vsub.f32 %v2048, %v2060
        %v2065 = vmul.f32 %v2061, 1.442695
        %v2066 = vpow.pop %v2065
        %v2067 = vmul.f32 %v2062, 1.442695
        %v2068 = vpow.pop %v2067
        %v2069 = vmul.f32 %v2063, 1.442695
        %v2070 = vpow.pop %v2069
        %v2071 = vmul.f32 %v2064, 1.442695
        %v2072 = vpow.pop %v2071
        %v2073 = vsel %vm1429, %v2066, 0.0
        %2074 = vadd.xlane.f32.xlu0 %v2073
        %v2075 = vpop.xlane.xlu0 %2074
        %v2076 = vsel %vm1429, %v2068, 0.0
        %2077 = vadd.xlane.f32.xlu0 %v2076
        %v2078 = vpop.xlane.xlu0 %2077
        %v2079 = vsel %vm1429, %v2070, 0.0
        %2080 = vadd.xlane.f32.xlu0 %v2079
        %v2081 = vpop.xlane.xlu0 %2080
        %v2082 = vsel %vm1429, %v2072, 0.0
        %2083 = vadd.xlane.f32.xlu0 %v2082
        %v2084 = vpop.xlane.xlu0 %2083
        %v2085 = vrcp.pop %v2075
        %v2086 = vrcp.pop %v2078
        %v2087 = vrcp.pop %v2081
        %v2088 = vrcp.pop %v2084
        %v2089 = vmul.f32 %v2066, %v2085
        %v2090 = vmul.f32 %v2068, %v2086
        %v2091 = vmul.f32 %v2070, %v2087
        %v2092 = vmul.f32 %v2072, %v2088
        %v2093 = vld [vmem:[#allocation2 + $0x4] sm:$0xf]
        %v2094 = vpack.c.bf16 %v2089, %v2089
        %v2096 = vsel %vm1429, %v2094, 0
        %v2099 = vsel %vm1314, %v2093, 0
        %2101 = vmatpush.bf16.msra.mxu0 0
        %2102 = vmatpush.bf16.msra.mxu0 0
        %2103 = vmatpush.bf16.msra.mxu0 0
        %2104 = vmatpush.bf16.msra.mxu0 0
        %2105 = vmatpush.bf16.msra.mxu0 0
        %2106 = vmatpush.bf16.msra.mxu0 0
        %2107 = vmatpush.bf16.msra.mxu0 0
        %2108 = vmatpush.bf16.msra.mxu0 %v2099
        %2109 = vmatmul.bf16.gmra.mxu0 %v2096
        %v2110 = vpop.f32.mrf.mxu0
        %v2111 = vadd.f32 0.0, %v2110
        %v2112 = vpop.f32.mrf.mxu0
        %2113 = vdwg.mxu0
        %v2114 = vpack.c.bf16 %v2090, %v2090
        %v2116 = vunpack.c.l.b16 %v2093
        %v2117 = vpack.c.b16 %v2116, %v2116
        %2118 = vrot.lane.b32.xlu0 %v2117, 112
        %v2119 = vpop.permute.xlu0 %2118
        %v2121 = vsel %vm1429, %v2114, 0
        %v2124 = vsel %vm1314, %v2119, 0
        %2126 = vmatpush.bf16.msra.mxu0 0
        %2127 = vmatpush.bf16.msra.mxu0 0
        %2128 = vmatpush.bf16.msra.mxu0 0
        %2129 = vmatpush.bf16.msra.mxu0 0
        %2130 = vmatpush.bf16.msra.mxu0 0
        %2131 = vmatpush.bf16.msra.mxu0 0
        %2132 = vmatpush.bf16.msra.mxu0 0
        %2133 = vmatpush.bf16.msra.mxu0 %v2124
        %2134 = vmatmul.bf16.gmra.mxu0 %v2121
        %v2135 = vpop.f32.mrf.mxu0
        %v2136 = vadd.f32 0.0, %v2135
        %v2137 = vpop.f32.mrf.mxu0
        %2138 = vdwg.mxu0
        %v2139 = vpack.c.bf16 %v2091, %v2091
        %2140 = vrot.lane.b32.xlu0 %v2117, 96
        %v2141 = vpop.permute.xlu0 %2140
        %v2143 = vsel %vm1429, %v2139, 0
        %v2146 = vsel %vm1314, %v2141, 0
        %2148 = vmatpush.bf16.msra.mxu0 0
        %2149 = vmatpush.bf16.msra.mxu0 0
        %2150 = vmatpush.bf16.msra.mxu0 0
        %2151 = vmatpush.bf16.msra.mxu0 0
        %2152 = vmatpush.bf16.msra.mxu0 0
        %2153 = vmatpush.bf16.msra.mxu0 0
        %2154 = vmatpush.bf16.msra.mxu0 0
        %2155 = vmatpush.bf16.msra.mxu0 %v2146
        %2156 = vmatmul.bf16.gmra.mxu0 %v2143
        %v2157 = vpop.f32.mrf.mxu0
        %v2158 = vadd.f32 0.0, %v2157
        %v2159 = vpop.f32.mrf.mxu0
        %2160 = vdwg.mxu0
        %v2161 = vpack.c.bf16 %v2092, %v2092
        %2162 = vrot.lane.b32.xlu0 %v2117, 80
        %v2163 = vpop.permute.xlu0 %2162
        %v2165 = vsel %vm1429, %v2161, 0
        %v2168 = vsel %vm1314, %v2163, 0
        %2170 = vmatpush.bf16.msra.mxu0 0
        %2171 = vmatpush.bf16.msra.mxu0 0
        %2172 = vmatpush.bf16.msra.mxu0 0
        %2173 = vmatpush.bf16.msra.mxu0 0
        %2174 = vmatpush.bf16.msra.mxu0 0
        %2175 = vmatpush.bf16.msra.mxu0 0
        %2176 = vmatpush.bf16.msra.mxu0 0
        %2177 = vmatpush.bf16.msra.mxu0 %v2168
        %2178 = vmatmul.bf16.gmra.mxu0 %v2165
        %v2179 = vpop.f32.mrf.mxu0
        %v2180 = vadd.f32 0.0, %v2179
        %v2181 = vpop.f32.mrf.mxu0
        %2182 = vdwg.mxu0
        %2184 = vrot.lane.b32.xlu0 %v2136, 16
        %v2185 = vpop.permute.xlu0 %2184
        %2188 = vrot.lane.b32.xlu0 %v2158, 32
        %v2189 = vpop.permute.xlu0 %2188
        %2192 = vrot.lane.b32.xlu0 %v2180, 48
        %v2193 = vpop.permute.xlu0 %2192
        %v2195 = vsel %vm1324, %v2111, %v2185
        %v2196 = vsel %vm1577, %v2195, %v2189
        %v2197 = vsel %vm1579, %v2196, %v2193
        %v2198 = vld [vmem:[#allocation17] sm:$0xf]
        %v2199 = vld [vmem:[#allocation17 + $0x4] sm:$0xf]
        %v2200 = vld [vmem:[#allocation17 + $0x8] sm:$0xf]
        %v2201 = vld [vmem:[#allocation17 + $0xc] sm:$0xf]
        %v2202 = vld [vmem:[#allocation17 + $0x10] sm:$0xf]
        %v2203 = vld [vmem:[#allocation17 + $0x14] sm:$0xf]
        %v2204 = vld [vmem:[#allocation17 + $0x18] sm:$0xf]
        %v2205 = vld [vmem:[#allocation17 + $0x1c] sm:$0xf]
        %v2206 = vpack.c.bf16 %v2197, %v2197
        %v2215 = vunpack.c.l.b16 %v2198
        %v2216 = vunpack.c.l.b16 %v2199
        %v2217 = vunpack.c.l.b16 %v2200
        %v2218 = vunpack.c.l.b16 %v2201
        %v2219 = vunpack.c.l.b16 %v2202
        %v2220 = vunpack.c.l.b16 %v2203
        %v2221 = vunpack.c.l.b16 %v2204
        %v2222 = vunpack.c.l.b16 %v2205
        %v2223 = vpack.c.b16 %v2216, %v2215
        %v2224 = vpack.c.b16 %v2218, %v2217
        %v2225 = vpack.c.b16 %v2220, %v2219
        %v2226 = vpack.c.b16 %v2222, %v2221
        %v2232 = vsel %vm1207, %v2206, 0
        %2234 = vmatpush.bf16.msra.mxu0 0
        %2235 = vmatpush.bf16.msra.mxu0 0
        %2236 = vmatpush.bf16.msra.mxu0 0
        %2237 = vmatpush.bf16.msra.mxu0 0
        %2238 = vmatpush.bf16.msra.mxu0 %v2226
        %2239 = vmatpush.bf16.msra.mxu0 %v2225
        %2240 = vmatpush.bf16.msra.mxu0 %v2224
        %2241 = vmatpush.bf16.msra.mxu0 %v2223
        %2242 = vmatmul.bf16.gmra.mxu0 %v2232
        %v2243 = vpop.f32.mrf.mxu0
        %v2244 = vadd.f32 0.0, %v2243
        %v2245 = vpop.f32.mrf.mxu0
        %2246 = vdwg.mxu0
        %v2247 = vadd.f32 %v1822, %v2244
        %v2248 = vld [vmem:[%s18] sm:$0x1]
        %v2249 = vmul.f32 %v2247, %v2247
        %v2250 = vsel %vm1207, %v2249, 0.0
        %2251 = vadd.xlane.f32.xlu0 %v2250
        %v2252 = vpop.xlane.xlu0 %2251
        %v2253 = vmul.f32 %v2252, %v1217
        %v2254 = vadd.f32 %v2253, 1e-06
        %v2255 = vrsqrt.pop %v2254
        %v2256 = vmul.f32 %v2255, %v2254
        %v2257 = vmul.f32 %v2256, %v2255
        %v2258 = vmul.f32 0.5, %v2257
        %v2259 = vsub.f32 1.5, %v2258
        %v2260 = vmul.f32 %v2255, %v2259
        %vm2261 = vweird.f32 %v2254
        %vm2262 = vweird.f32 %v2255
        %vm2263 = vmor %vm2261, %vm2262
        %v2264 = vsel %vm2263, %v2255, %v2260
        %v2265 = vmul.f32 %v2247, %v2264
        %v2267 = vperm.slane %v2248, 0
        %v2269 = vmul.f32 %v2265, %v2267
        %v2270 = vld [vmem:[#allocation20] sm:$0xf]
        %v2271 = vld [vmem:[#allocation20 + $0x4] sm:$0xf]
        %v2272 = vld [vmem:[#allocation20 + $0x8] sm:$0xf]
        %v2273 = vld [vmem:[#allocation20 + $0xc] sm:$0xf]
        %v2274 = vld [vmem:[#allocation20 + $0x10] sm:$0xf]
        %v2275 = vld [vmem:[#allocation20 + $0x14] sm:$0xf]
        %v2276 = vld [vmem:[#allocation20 + $0x18] sm:$0xf]
        %v2277 = vld [vmem:[#allocation20 + $0x1c] sm:$0xf]
        %v2278 = vpack.c.bf16 %v2269, %v2269
        %v2287 = vunpack.c.l.b16 %v2270
        %v2288 = vunpack.c.l.b16 %v2271
        %v2289 = vunpack.c.l.b16 %v2272
        %v2290 = vunpack.c.l.b16 %v2273
        %v2291 = vunpack.c.l.b16 %v2274
        %v2292 = vunpack.c.l.b16 %v2275
        %v2293 = vunpack.c.l.b16 %v2276
        %v2294 = vunpack.c.l.b16 %v2277
        %v2295 = vpack.c.b16 %v2288, %v2287
        %v2296 = vpack.c.b16 %v2290, %v2289
        %v2297 = vpack.c.b16 %v2292, %v2291
        %v2298 = vpack.c.b16 %v2294, %v2293
        %v2304 = vsel %vm1207, %v2278, 0
        %2306 = vmatpush.bf16.msra.mxu0 0
        %2307 = vmatpush.bf16.msra.mxu0 0
        %2308 = vmatpush.bf16.msra.mxu0 0
        %2309 = vmatpush.bf16.msra.mxu0 0
        %2310 = vmatpush.bf16.msra.mxu0 %v2298
        %2311 = vmatpush.bf16.msra.mxu0 %v2297
        %2312 = vmatpush.bf16.msra.mxu0 %v2296
        %2313 = vmatpush.bf16.msra.mxu0 %v2295
        %2314 = vmatmul.bf16.gmra.mxu0 %v2304
        %v2315 = vpop.f32.mrf.mxu0
        %v2316 = vadd.f32 0.0, %v2315
        %v2317 = vpop.f32.mrf.mxu0
        %2318 = vdwg.mxu0
        %v2319 = vpack.c.bf16 %v2316, %v2316
        %vm2320 = vcmask 519168
        %2321 = vst.msk [vmem:[#allocation2] sm:$0xf] %vm2320, %v2319
        %v2322 = vld [vmem:[#allocation21] sm:$0xf]
        %v2323 = vld [vmem:[#allocation21 + $0x4] sm:$0xf]
        %v2324 = vld [vmem:[#allocation21 + $0x8] sm:$0xf]
        %v2325 = vld [vmem:[#allocation21 + $0xc] sm:$0xf]
        %v2326 = vld [vmem:[#allocation21 + $0x10] sm:$0xf]
        %v2327 = vld [vmem:[#allocation21 + $0x14] sm:$0xf]
        %v2328 = vld [vmem:[#allocation21 + $0x18] sm:$0xf]
        %v2329 = vld [vmem:[#allocation21 + $0x1c] sm:$0xf]
        %v2330 = vpack.c.bf16 %v1803, %v1803
        %v2339 = vunpack.c.l.b16 %v2322
        %v2340 = vunpack.c.l.b16 %v2323
        %v2341 = vunpack.c.l.b16 %v2324
        %v2342 = vunpack.c.l.b16 %v2325
        %v2343 = vunpack.c.l.b16 %v2326
        %v2344 = vunpack.c.l.b16 %v2327
        %v2345 = vunpack.c.l.b16 %v2328
        %v2346 = vunpack.c.l.b16 %v2329
        %v2347 = vpack.c.b16 %v2340, %v2339
        %v2348 = vpack.c.b16 %v2342, %v2341
        %v2349 = vpack.c.b16 %v2344, %v2343
        %v2350 = vpack.c.b16 %v2346, %v2345
        %v2356 = vsel %vm1207, %v2330, 0
        %2358 = vmatpush.bf16.msra.mxu0 0
        %2359 = vmatpush.bf16.msra.mxu0 0
        %2360 = vmatpush.bf16.msra.mxu0 0
        %2361 = vmatpush.bf16.msra.mxu0 0
        %2362 = vmatpush.bf16.msra.mxu0 %v2350
        %2363 = vmatpush.bf16.msra.mxu0 %v2349
        %2364 = vmatpush.bf16.msra.mxu0 %v2348
        %2365 = vmatpush.bf16.msra.mxu0 %v2347
        %2366 = vmatmul.bf16.gmra.mxu0 %v2356
        %v2367 = vpop.f32.mrf.mxu0
        %v2368 = vadd.f32 0.0, %v2367
        %v2369 = vpop.f32.mrf.mxu0
        %2370 = vdwg.mxu0
        %v2371 = vpack.c.bf16 %v2368, %v2368
        %2373 = vrot.lane.b32.xlu0 %v2371, 64
        %v2374 = vpop.permute.xlu0 %2373
        %v2375 = vrot.slane %v2374, 4
        %vm2376 = vcmask 523264
        %v2377 = vsel %vm2376, %v2375, %v2374
        %vm2379 = vcmask 1043968
        %vm2380 = vmor %vm1315, %vm2379
        %2381 = vst.msk [vmem:[#allocation2] sm:$0xff] %vm2380, %v2377
        %v2382 = vld [vmem:[#allocation2] sm:$0xf]
        %v2384 = vunpack.c.l.b16 %v2382
        %v2385 = vpack.c.b16 %v2384, %v2384
        %2386 = vrot.lane.b32.xlu0 %v2385, 64
        %v2387 = vpop.permute.xlu0 %2386
        %v2389 = vsel %vm1324, %v2382, 0
        %v2392 = vsel %vm1324, %v2387, 0
        %2394 = vmatpush.bf16.xpose.msra.mxu0 0
        %2395 = vmatpush.bf16.xpose.msra.mxu0 0
        %2396 = vmatpush.bf16.xpose.msra.mxu0 0
        %2397 = vmatpush.bf16.xpose.msra.mxu0 0
        %2398 = vmatpush.bf16.xpose.msra.mxu0 0
        %2399 = vmatpush.bf16.xpose.msra.mxu0 0
        %2400 = vmatpush.bf16.xpose.msra.mxu0 0
        %2401 = vmatpush.bf16.xpose.msra.mxu0 %v2392
        %2402 = vmatmul.bf16.gmra.mxu0 %v2389
        %v2403 = vpop.f32.mrf.mxu0
        %v2404 = vadd.f32 0.0, %v2403
        %v2405 = vpop.f32.mrf.mxu0
        %2406 = vdwg.mxu0
        %v2407 = vld [vmem:[#allocation2] sm:$0xf]
        %v2409 = vunpack.c.l.b16 %v2407
        %v2410 = vpack.c.b16 %v2409, %v2409
        %2411 = vrot.lane.b32.xlu0 %v2410, 112
        %v2412 = vpop.permute.xlu0 %2411
        %2413 = vrot.lane.b32.xlu0 %v2410, 48
        %v2414 = vpop.permute.xlu0 %2413
        %v2416 = vsel %vm1324, %v2412, 0
        %v2419 = vsel %vm1324, %v2414, 0
        %2421 = vmatpush.bf16.xpose.msra.mxu0 0
        %2422 = vmatpush.bf16.xpose.msra.mxu0 0
        %2423 = vmatpush.bf16.xpose.msra.mxu0 0
        %2424 = vmatpush.bf16.xpose.msra.mxu0 0
        %2425 = vmatpush.bf16.xpose.msra.mxu0 0
        %2426 = vmatpush.bf16.xpose.msra.mxu0 0
        %2427 = vmatpush.bf16.xpose.msra.mxu0 0
        %2428 = vmatpush.bf16.xpose.msra.mxu0 %v2419
        %2429 = vmatmul.bf16.gmra.mxu0 %v2416
        %v2430 = vpop.f32.mrf.mxu0
        %v2431 = vadd.f32 0.0, %v2430
        %v2432 = vpop.f32.mrf.mxu0
        %2433 = vdwg.mxu0
        %v2434 = vld [vmem:[#allocation2] sm:$0xf]
        %v2436 = vunpack.c.l.b16 %v2434
        %v2437 = vpack.c.b16 %v2436, %v2436
        %2438 = vrot.lane.b32.xlu0 %v2437, 96
        %v2439 = vpop.permute.xlu0 %2438
        %2440 = vrot.lane.b32.xlu0 %v2437, 32
        %v2441 = vpop.permute.xlu0 %2440
        %v2443 = vsel %vm1324, %v2439, 0
        %v2446 = vsel %vm1324, %v2441, 0
        %2448 = vmatpush.bf16.xpose.msra.mxu0 0
        %2449 = vmatpush.bf16.xpose.msra.mxu0 0
        %2450 = vmatpush.bf16.xpose.msra.mxu0 0
        %2451 = vmatpush.bf16.xpose.msra.mxu0 0
        %2452 = vmatpush.bf16.xpose.msra.mxu0 0
        %2453 = vmatpush.bf16.xpose.msra.mxu0 0
        %2454 = vmatpush.bf16.xpose.msra.mxu0 0
        %2455 = vmatpush.bf16.xpose.msra.mxu0 %v2446
        %2456 = vmatmul.bf16.gmra.mxu0 %v2443
        %v2457 = vpop.f32.mrf.mxu0
        %v2458 = vadd.f32 0.0, %v2457
        %v2459 = vpop.f32.mrf.mxu0
        %2460 = vdwg.mxu0
        %v2461 = vld [vmem:[#allocation2] sm:$0xf]
        %v2463 = vunpack.c.l.b16 %v2461
        %v2464 = vpack.c.b16 %v2463, %v2463
        %2465 = vrot.lane.b32.xlu0 %v2464, 80
        %v2466 = vpop.permute.xlu0 %2465
        %2467 = vrot.lane.b32.xlu0 %v2464, 16
        %v2468 = vpop.permute.xlu0 %2467
        %v2470 = vsel %vm1324, %v2466, 0
        %v2473 = vsel %vm1324, %v2468, 0
        %2475 = vmatpush.bf16.xpose.msra.mxu0 0
        %2476 = vmatpush.bf16.xpose.msra.mxu0 0
        %2477 = vmatpush.bf16.xpose.msra.mxu0 0
        %2478 = vmatpush.bf16.xpose.msra.mxu0 0
        %2479 = vmatpush.bf16.xpose.msra.mxu0 0
        %2480 = vmatpush.bf16.xpose.msra.mxu0 0
        %2481 = vmatpush.bf16.xpose.msra.mxu0 0
        %2482 = vmatpush.bf16.xpose.msra.mxu0 %v2473
        %2483 = vmatmul.bf16.gmra.mxu0 %v2470
        %v2484 = vpop.f32.mrf.mxu0
        %v2485 = vadd.f32 0.0, %v2484
        %v2486 = vpop.f32.mrf.mxu0
        %2487 = vdwg.mxu0
        %v2488 = vadd.f32 %v2404, %v1199
        %v2489 = vadd.f32 %v2431, %v1199
        %v2490 = vadd.f32 %v2458, %v1199
        %v2491 = vadd.f32 %v2485, %v1199
        %v2492 = vsel %vm1429, %v2488, -inf
        %2493 = vmax.xlane.f32.xlu0 %v2492
        %v2494 = vpop.xlane.xlu0 %2493
        %v2495 = vsel %vm1429, %v2489, -inf
        %2496 = vmax.xlane.f32.xlu0 %v2495
        %v2497 = vpop.xlane.xlu0 %2496
        %v2498 = vsel %vm1429, %v2490, -inf
        %2499 = vmax.xlane.f32.xlu0 %v2498
        %v2500 = vpop.xlane.xlu0 %2499
        %v2501 = vsel %vm1429, %v2491, -inf
        %2502 = vmax.xlane.f32.xlu0 %v2501
        %v2503 = vpop.xlane.xlu0 %2502
        %v2504 = vsub.f32 %v2488, %v2494
        %v2505 = vsub.f32 %v2489, %v2497
        %v2506 = vsub.f32 %v2490, %v2500
        %v2507 = vsub.f32 %v2491, %v2503
        %v2508 = vmul.f32 %v2504, 1.442695
        %v2509 = vpow.pop %v2508
        %v2510 = vmul.f32 %v2505, 1.442695
        %v2511 = vpow.pop %v2510
        %v2512 = vmul.f32 %v2506, 1.442695
        %v2513 = vpow.pop %v2512
        %v2514 = vmul.f32 %v2507, 1.442695
        %v2515 = vpow.pop %v2514
        %v2516 = vsel %vm1429, %v2509, 0.0
        %2517 = vadd.xlane.f32.xlu0 %v2516
        %v2518 = vpop.xlane.xlu0 %2517
        %v2519 = vsel %vm1429, %v2511, 0.0
        %2520 = vadd.xlane.f32.xlu0 %v2519
        %v2521 = vpop.xlane.xlu0 %2520
        %v2522 = vsel %vm1429, %v2513, 0.0
        %2523 = vadd.xlane.f32.xlu0 %v2522
        %v2524 = vpop.xlane.xlu0 %2523
        %v2525 = vsel %vm1429, %v2515, 0.0
        %2526 = vadd.xlane.f32.xlu0 %v2525
        %v2527 = vpop.xlane.xlu0 %2526
        %v2528 = vrcp.pop %v2518
        %v2529 = vrcp.pop %v2521
        %v2530 = vrcp.pop %v2524
        %v2531 = vrcp.pop %v2527
        %v2532 = vmul.f32 %v2509, %v2528
        %v2533 = vmul.f32 %v2511, %v2529
        %v2534 = vmul.f32 %v2513, %v2530
        %v2535 = vmul.f32 %v2515, %v2531
        %v2536 = vld [vmem:[#allocation2 + $0x4] sm:$0xf]
        %v2537 = vpack.c.bf16 %v2532, %v2532
        %v2539 = vsel %vm1429, %v2537, 0
        %v2542 = vsel %vm1314, %v2536, 0
        %2544 = vmatpush.bf16.msra.mxu0 0
        %2545 = vmatpush.bf16.msra.mxu0 0
        %2546 = vmatpush.bf16.msra.mxu0 0
        %2547 = vmatpush.bf16.msra.mxu0 0
        %2548 = vmatpush.bf16.msra.mxu0 0
        %2549 = vmatpush.bf16.msra.mxu0 0
        %2550 = vmatpush.bf16.msra.mxu0 0
        %2551 = vmatpush.bf16.msra.mxu0 %v2542
        %2552 = vmatmul.bf16.gmra.mxu0 %v2539
        %v2553 = vpop.f32.mrf.mxu0
        %v2554 = vadd.f32 0.0, %v2553
        %v2555 = vpop.f32.mrf.mxu0
        %2556 = vdwg.mxu0
        %v2557 = vpack.c.bf16 %v2533, %v2533
        %v2559 = vunpack.c.l.b16 %v2536
        %v2560 = vpack.c.b16 %v2559, %v2559
        %2561 = vrot.lane.b32.xlu0 %v2560, 112
        %v2562 = vpop.permute.xlu0 %2561
        %v2564 = vsel %vm1429, %v2557, 0
        %v2567 = vsel %vm1314, %v2562, 0
        %2569 = vmatpush.bf16.msra.mxu0 0
        %2570 = vmatpush.bf16.msra.mxu0 0
        %2571 = vmatpush.bf16.msra.mxu0 0
        %2572 = vmatpush.bf16.msra.mxu0 0
        %2573 = vmatpush.bf16.msra.mxu0 0
        %2574 = vmatpush.bf16.msra.mxu0 0
        %2575 = vmatpush.bf16.msra.mxu0 0
        %2576 = vmatpush.bf16.msra.mxu0 %v2567
        %2577 = vmatmul.bf16.gmra.mxu0 %v2564
        %v2578 = vpop.f32.mrf.mxu0
        %v2579 = vadd.f32 0.0, %v2578
        %v2580 = vpop.f32.mrf.mxu0
        %2581 = vdwg.mxu0
        %v2582 = vpack.c.bf16 %v2534, %v2534
        %2583 = vrot.lane.b32.xlu0 %v2560, 96
        %v2584 = vpop.permute.xlu0 %2583
        %v2586 = vsel %vm1429, %v2582, 0
        %v2589 = vsel %vm1314, %v2584, 0
        %2591 = vmatpush.bf16.msra.mxu0 0
        %2592 = vmatpush.bf16.msra.mxu0 0
        %2593 = vmatpush.bf16.msra.mxu0 0
        %2594 = vmatpush.bf16.msra.mxu0 0
        %2595 = vmatpush.bf16.msra.mxu0 0
        %2596 = vmatpush.bf16.msra.mxu0 0
        %2597 = vmatpush.bf16.msra.mxu0 0
        %2598 = vmatpush.bf16.msra.mxu0 %v2589
        %2599 = vmatmul.bf16.gmra.mxu0 %v2586
        %v2600 = vpop.f32.mrf.mxu0
        %v2601 = vadd.f32 0.0, %v2600
        %v2602 = vpop.f32.mrf.mxu0
        %2603 = vdwg.mxu0
        %v2604 = vpack.c.bf16 %v2535, %v2535
        %2605 = vrot.lane.b32.xlu0 %v2560, 80
        %v2606 = vpop.permute.xlu0 %2605
        %v2608 = vsel %vm1429, %v2604, 0
        %v2611 = vsel %vm1314, %v2606, 0
        %2613 = vmatpush.bf16.msra.mxu0 0
        %2614 = vmatpush.bf16.msra.mxu0 0
        %2615 = vmatpush.bf16.msra.mxu0 0
        %2616 = vmatpush.bf16.msra.mxu0 0
        %2617 = vmatpush.bf16.msra.mxu0 0
        %2618 = vmatpush.bf16.msra.mxu0 0
        %2619 = vmatpush.bf16.msra.mxu0 0
        %2620 = vmatpush.bf16.msra.mxu0 %v2611
        %2621 = vmatmul.bf16.gmra.mxu0 %v2608
        %v2622 = vpop.f32.mrf.mxu0
        %v2623 = vadd.f32 0.0, %v2622
        %v2624 = vpop.f32.mrf.mxu0
        %2625 = vdwg.mxu0
        %2627 = vrot.lane.b32.xlu0 %v2579, 16
        %v2628 = vpop.permute.xlu0 %2627
        %2631 = vrot.lane.b32.xlu0 %v2601, 32
        %v2632 = vpop.permute.xlu0 %2631
        %2635 = vrot.lane.b32.xlu0 %v2623, 48
        %v2636 = vpop.permute.xlu0 %2635
        %v2638 = vsel %vm1324, %v2554, %v2628
        %v2639 = vsel %vm1577, %v2638, %v2632
        %v2640 = vsel %vm1579, %v2639, %v2636
        %v2641 = vld [vmem:[#allocation23] sm:$0xf]
        %v2642 = vld [vmem:[#allocation23 + $0x4] sm:$0xf]
        %v2643 = vld [vmem:[#allocation23 + $0x8] sm:$0xf]
        %v2644 = vld [vmem:[#allocation23 + $0xc] sm:$0xf]
        %v2645 = vld [vmem:[#allocation23 + $0x10] sm:$0xf]
        %v2646 = vld [vmem:[#allocation23 + $0x14] sm:$0xf]
        %v2647 = vld [vmem:[#allocation23 + $0x18] sm:$0xf]
        %v2648 = vld [vmem:[#allocation23 + $0x1c] sm:$0xf]
        %v2649 = vpack.c.bf16 %v2640, %v2640
        %v2658 = vunpack.c.l.b16 %v2641
        %v2659 = vunpack.c.l.b16 %v2642
        %v2660 = vunpack.c.l.b16 %v2643
        %v2661 = vunpack.c.l.b16 %v2644
        %v2662 = vunpack.c.l.b16 %v2645
        %v2663 = vunpack.c.l.b16 %v2646
        %v2664 = vunpack.c.l.b16 %v2647
        %v2665 = vunpack.c.l.b16 %v2648
        %v2666 = vpack.c.b16 %v2659, %v2658
        %v2667 = vpack.c.b16 %v2661, %v2660
        %v2668 = vpack.c.b16 %v2663, %v2662
        %v2669 = vpack.c.b16 %v2665, %v2664
        %v2675 = vsel %vm1207, %v2649, 0
        %2677 = vmatpush.bf16.msra.mxu0 0
        %2678 = vmatpush.bf16.msra.mxu0 0
        %2679 = vmatpush.bf16.msra.mxu0 0
        %2680 = vmatpush.bf16.msra.mxu0 0
        %2681 = vmatpush.bf16.msra.mxu0 %v2669
        %2682 = vmatpush.bf16.msra.mxu0 %v2668
        %2683 = vmatpush.bf16.msra.mxu0 %v2667
        %2684 = vmatpush.bf16.msra.mxu0 %v2666
        %2685 = vmatmul.bf16.gmra.mxu0 %v2675
        %v2686 = vpop.f32.mrf.mxu0
        %v2687 = vadd.f32 0.0, %v2686
        %v2688 = vpop.f32.mrf.mxu0
        %2689 = vdwg.mxu0
        %v2690 = vadd.f32 %v2247, %v2687
        %v2691 = vld [vmem:[%s22] sm:$0x1]
        %v2692 = vmul.f32 %v2690, %v2690
        %v2693 = vsel %vm1207, %v2692, 0.0
        %2694 = vadd.xlane.f32.xlu0 %v2693
        %v2695 = vpop.xlane.xlu0 %2694
        %v2696 = vmul.f32 %v2695, %v1217
        %v2697 = vadd.f32 %v2696, 1e-06
        %v2698 = vrsqrt.pop %v2697
        %v2699 = vmul.f32 %v2698, %v2697
        %v2700 = vmul.f32 %v2699, %v2698
        %v2701 = vmul.f32 0.5, %v2700
        %v2702 = vsub.f32 1.5, %v2701
        %v2703 = vmul.f32 %v2698, %v2702
        %vm2704 = vweird.f32 %v2697
        %vm2705 = vweird.f32 %v2698
        %vm2706 = vmor %vm2704, %vm2705
        %v2707 = vsel %vm2706, %v2698, %v2703
        %v2708 = vmul.f32 %v2690, %v2707
        %v2710 = vperm.slane %v2691, 0
        %v2712 = vmul.f32 %v2708, %v2710
        %v2713 = vld [vmem:[%s23] sm:$0xf]
        %v2714 = vld [vmem:[%s23 + $0x4] sm:$0xf]
        %v2715 = vld [vmem:[%s23 + $0x8] sm:$0xf]
        %v2716 = vld [vmem:[%s23 + $0xc] sm:$0xf]
        %v2717 = vld [vmem:[%s23 + $0x10] sm:$0xf]
        %v2718 = vld [vmem:[%s23 + $0x14] sm:$0xf]
        %v2719 = vld [vmem:[%s23 + $0x18] sm:$0xf]
        %v2720 = vld [vmem:[%s23 + $0x1c] sm:$0xf]
        %v2721 = vpack.c.bf16 %v2712, %v2712
        %v2730 = vunpack.c.l.b16 %v2713
        %v2731 = vunpack.c.l.b16 %v2714
        %v2732 = vunpack.c.l.b16 %v2715
        %v2733 = vunpack.c.l.b16 %v2716
        %v2734 = vunpack.c.l.b16 %v2717
        %v2735 = vunpack.c.l.b16 %v2718
        %v2736 = vunpack.c.l.b16 %v2719
        %v2737 = vunpack.c.l.b16 %v2720
        %v2738 = vpack.c.b16 %v2731, %v2730
        %v2739 = vpack.c.b16 %v2733, %v2732
        %v2740 = vpack.c.b16 %v2735, %v2734
        %v2741 = vpack.c.b16 %v2737, %v2736
        %v2747 = vsel %vm1207, %v2721, 0
        %2749 = vmatpush.bf16.msra.mxu0 0
        %2750 = vmatpush.bf16.msra.mxu0 0
        %2751 = vmatpush.bf16.msra.mxu0 0
        %2752 = vmatpush.bf16.msra.mxu0 0
        %2753 = vmatpush.bf16.msra.mxu0 %v2741
        %2754 = vmatpush.bf16.msra.mxu0 %v2740
        %2755 = vmatpush.bf16.msra.mxu0 %v2739
        %2756 = vmatpush.bf16.msra.mxu0 %v2738
        %2757 = vmatmul.bf16.gmra.mxu0 %v2747
        %v2758 = vpop.f32.mrf.mxu0
        %v2759 = vadd.f32 0.0, %v2758
        %v2760 = vpop.f32.mrf.mxu0
        %2761 = vdwg.mxu0
        %v2762 = vmax.f32 %v2759, 0.0
        %v2763 = vld [vmem:[#allocation24] sm:$0xf]
        %v2764 = vld [vmem:[#allocation24 + $0x4] sm:$0xf]
        %v2765 = vld [vmem:[#allocation24 + $0x8] sm:$0xf]
        %v2766 = vld [vmem:[#allocation24 + $0xc] sm:$0xf]
        %v2767 = vld [vmem:[#allocation24 + $0x10] sm:$0xf]
        %v2768 = vld [vmem:[#allocation24 + $0x14] sm:$0xf]
        %v2769 = vld [vmem:[#allocation24 + $0x18] sm:$0xf]
        %v2770 = vld [vmem:[#allocation24 + $0x1c] sm:$0xf]
        %v2771 = vld [vmem:[#allocation24 + $0x20] sm:$0xf]
        %v2772 = vld [vmem:[#allocation24 + $0x24] sm:$0xf]
        %v2773 = vld [vmem:[#allocation24 + $0x28] sm:$0xf]
        %v2774 = vld [vmem:[#allocation24 + $0x2c] sm:$0xf]
        %v2775 = vld [vmem:[#allocation24 + $0x30] sm:$0xf]
        %v2776 = vld [vmem:[#allocation24 + $0x34] sm:$0xf]
        %v2777 = vld [vmem:[#allocation24 + $0x38] sm:$0xf]
        %v2778 = vld [vmem:[#allocation24 + $0x3c] sm:$0xf]
        %v2779 = vpack.c.bf16 %v2762, %v2762
        %v2796 = vunpack.c.l.b16 %v2763
        %v2797 = vunpack.c.l.b16 %v2764
        %v2798 = vunpack.c.l.b16 %v2765
        %v2799 = vunpack.c.l.b16 %v2766
        %v2800 = vunpack.c.l.b16 %v2767
        %v2801 = vunpack.c.l.b16 %v2768
        %v2802 = vunpack.c.l.b16 %v2769
        %v2803 = vunpack.c.l.b16 %v2770
        %v2804 = vunpack.c.l.b16 %v2771
        %v2805 = vunpack.c.l.b16 %v2772
        %v2806 = vunpack.c.l.b16 %v2773
        %v2807 = vunpack.c.l.b16 %v2774
        %v2808 = vunpack.c.l.b16 %v2775
        %v2809 = vunpack.c.l.b16 %v2776
        %v2810 = vunpack.c.l.b16 %v2777
        %v2811 = vunpack.c.l.b16 %v2778
        %v2812 = vpack.c.b16 %v2797, %v2796
        %v2813 = vpack.c.b16 %v2799, %v2798
        %v2814 = vpack.c.b16 %v2801, %v2800
        %v2815 = vpack.c.b16 %v2803, %v2802
        %v2816 = vpack.c.b16 %v2805, %v2804
        %v2817 = vpack.c.b16 %v2807, %v2806
        %v2818 = vpack.c.b16 %v2809, %v2808
        %v2819 = vpack.c.b16 %v2811, %v2810
        %2828 = vmatpush.bf16.msra.mxu0 %v2819
        %2829 = vmatpush.bf16.msra.mxu0 %v2818
        %2830 = vmatpush.bf16.msra.mxu0 %v2817
        %2831 = vmatpush.bf16.msra.mxu0 %v2816
        %2832 = vmatpush.bf16.msra.mxu0 %v2815
        %2833 = vmatpush.bf16.msra.mxu0 %v2814
        %2834 = vmatpush.bf16.msra.mxu0 %v2813
        %2835 = vmatpush.bf16.msra.mxu0 %v2812
        %2836 = vmatmul.bf16.gmra.mxu0 %v2779
        %v2837 = vpop.f32.mrf.mxu0
        %v2838 = vadd.f32 0.0, %v2837
        %v2839 = vpop.f32.mrf.mxu0
        %2840 = vdwg.mxu0
        %v2841 = vadd.f32 %v2690, %v2838
        %v2842 = vld [vmem:[%s25] sm:$0x1]
        %v2843 = vmul.f32 %v2841, %v2841
        %v2844 = vsel %vm1207, %v2843, 0.0
        %2845 = vadd.xlane.f32.xlu0 %v2844
        %v2846 = vpop.xlane.xlu0 %2845
        %v2847 = vmul.f32 %v2846, %v1217
        %v2848 = vadd.f32 %v2847, 1e-06
        %v2849 = vrsqrt.pop %v2848
        %v2850 = vmul.f32 %v2849, %v2848
        %v2851 = vmul.f32 %v2850, %v2849
        %v2852 = vmul.f32 0.5, %v2851
        %v2853 = vsub.f32 1.5, %v2852
        %v2854 = vmul.f32 %v2849, %v2853
        %vm2855 = vweird.f32 %v2848
        %vm2856 = vweird.f32 %v2849
        %vm2857 = vmor %vm2855, %vm2856
        %v2858 = vsel %vm2857, %v2849, %v2854
        %v2859 = vmul.f32 %v2841, %v2858
        %v2861 = vperm.slane %v2842, 0
        %v2863 = vmul.f32 %v2859, %v2861
        %v2864 = vmul.f32 %v2863, 0.125
        %v2865 = vld [vmem:[#allocation6] sm:$0xf]
        %v2866 = vld [vmem:[#allocation6 + $0x4] sm:$0xf]
        %v2867 = vld [vmem:[#allocation6 + $0x8] sm:$0xf]
        %v2868 = vld [vmem:[#allocation6 + $0xc] sm:$0xf]
        %v2869 = vld [vmem:[#allocation6 + $0x10] sm:$0xf]
        %v2870 = vld [vmem:[#allocation6 + $0x14] sm:$0xf]
        %v2871 = vld [vmem:[#allocation6 + $0x18] sm:$0xf]
        %v2872 = vld [vmem:[#allocation6 + $0x1c] sm:$0xf]
        %v2873 = vpack.c.bf16 %v2864, %v2864
        %v2882 = vunpack.c.l.b16 %v2865
        %v2883 = vunpack.c.l.b16 %v2866
        %v2884 = vunpack.c.l.b16 %v2867
        %v2885 = vunpack.c.l.b16 %v2868
        %v2886 = vunpack.c.l.b16 %v2869
        %v2887 = vunpack.c.l.b16 %v2870
        %v2888 = vunpack.c.l.b16 %v2871
        %v2889 = vunpack.c.l.b16 %v2872
        %v2890 = vpack.c.b16 %v2883, %v2882
        %v2891 = vpack.c.b16 %v2885, %v2884
        %v2892 = vpack.c.b16 %v2887, %v2886
        %v2893 = vpack.c.b16 %v2889, %v2888
        %v2899 = vsel %vm1207, %v2873, 0
        %2901 = vmatpush.bf16.msra.mxu0 0
        %2902 = vmatpush.bf16.msra.mxu0 0
        %2903 = vmatpush.bf16.msra.mxu0 0
        %2904 = vmatpush.bf16.msra.mxu0 0
        %2905 = vmatpush.bf16.msra.mxu0 %v2893
        %2906 = vmatpush.bf16.msra.mxu0 %v2892
        %2907 = vmatpush.bf16.msra.mxu0 %v2891
        %2908 = vmatpush.bf16.msra.mxu0 %v2890
        %2909 = vmatmul.bf16.gmra.mxu0 %v2899
        %v2910 = vpop.f32.mrf.mxu0
        %v2911 = vadd.f32 0.0, %v2910
        %v2912 = vpop.f32.mrf.mxu0
        %2913 = vdwg.mxu0
        %2914 = vst [vmem:[%s1079] sm:$0xff] %v2911
        %v2915 = vld [vmem:[%s1096] sm:$0xff]
        %2916 = vset.pattern.permute.xlu0 0
        %2917 = vperm.xlu0 %2916, %v2915
        %v2918 = vpop.permute.xlu0 %2917
        %vm2919 = vcmp.eq.s32.totalorder %v1105, %v2918
        %v2920 = vsel %vm2919, 1, 0
        %v2921 = vcvt.s32.f32 %v2920
        %2922 = vmax.xlane.f32.xlu0 %v2911
        %v2923 = vpop.xlane.xlu0 %2922
        %v2924 = vsub.f32 %v2911, %v2923
        %v2925 = vmul.f32 %v2924, 1.442695
        %v2926 = vpow.pop %v2925
        %2927 = vadd.xlane.f32.xlu0 %v2926
        %v2928 = vpop.xlane.xlu0 %2927
        %v2929 = vlog2.pop %v2928
        %v2930 = vmul.f32 %v2929, 0.6931472
        %v2931 = vadd.f32 %v2930, %v2923
        %v2932 = vmul.f32 %v2911, %v2921
        %2933 = vadd.xlane.f32.xlu0 %v2932
        %v2934 = vpop.xlane.xlu0 %2933
        %v2935 = vsub.f32 %v2931, %v2934
        %vm2936 = vcmask 7168
        %v2937 = vsel %vm2936, %v2935, 0.0
        %2938 = vadd.xlane.f32.xlu0 %v2937
        %v2939 = vpop.xlane.xlu0 %2938
        %v2940 = vrot.slane %v2939, 4
        %v2941 = vadd.f32 %v2939, %v2940
        %v2942 = vrot.slane %v2941, 2
        %v2943 = vadd.f32 %v2941, %v2942
        %v2944 = vrot.slane %v2943, 1
        %v2945 = vadd.f32 %v2943, %v2944
        %s2946 = vtos %v2945
        %v2947 = vstv %s2946
        %vm2948 = vcmask 0
        %2949 = vst.msk [vmem:[%s1102] sm:$0x1] %vm2948, %v2947
        %s2950 = sand.u32 %s624, 1
        %s2951 = scalar_lea.sflag [#allocation5], %s2950
        %s2952 = sand.u32 %s624, 1
        %s2953 = smul.addr %s2952, 8
        %s2954 = scalar_lea.vmem [#allocation26], %s2953
        %p2955 = scmp.lt.s32.totalorder %s50, 1
        %s2956 = scalar_select %p2955, %s50, 1
        %s2957 = scalar_lea.vmem %s27, %s2956
        // Predicated region
        $region181: #{t5_forward.1} parent=123 // pred_check
          %p2958 = pneg %p634
        $region182: #{t5_forward.1} parent=123 // pred_check_branch
          %2960 = sbr.rel (%p2958) target = $region184
        $region183: #{t5_forward.1} parent=123 // pred_region
          %2962 = vsyncadd %s2951, 0
          %s2963 = smul.addr %s50, 8
          %s2964 = scalar_lea.hbm %s26, %s2963
          %s2966 = sshll.u32 %s2954, 4
          %s2967 = int_to_ptr.vmem [resolvable:$true] %s2966
          %s2968 = sshll.u32 %s2964, 4
          %s2969 = int_to_ptr.hbm [resolvable:$true] %s2968
          %2971 = dma.vmem_to_hbm [thread:$0]  %s2967, 128, %s2969, %s2951
        $region184: #{t5_forward.1} parent=123 // pred_fallthru
          _
        // Predicated region
        $region185: #{t5_forward.1} parent=123 // pred_check
          %p2972 = pneg %p660
        $region186: #{t5_forward.1} parent=123 // pred_check_branch
          %2974 = sbr.rel (%p2972) target = $region188
        $region187: #{t5_forward.1} parent=123 // pred_region
          _
        $region188: #{t5_forward.1} parent=123 // pred_fallthru
          _
      $region124: #{t5_forward.1} parent=5 // pred_fallthru
        _
      %p2975 = scmp.le.s32.totalorder 2, %s45
      // Predicated region
      $region189: #{t5_forward.1} parent=5 // pred_check
        %p2976 = pneg %p2975
      $region190: #{t5_forward.1} parent=5 // pred_check_branch
        %2978 = sbr.rel (%p2976) target = $region192
      $region191: #{t5_forward.1} parent=5 // pred_region
        %s2979 = ssub.s32 %s45, 2
        // Predicated region
        $region193: #{t5_forward.1} parent=191 // pred_check
          %p2980 = pneg %p640
        $region194: #{t5_forward.1} parent=191 // pred_check_branch
          %2982 = sbr.rel (%p2980) target = $region196
        $region195: #{t5_forward.1} parent=191 // pred_region
          %s2983 = sand.u32 %s625, 1
          %s2984 = scalar_lea.sflag [#allocation5], %s2983
          %s2985 = sand.u32 %s625, 1
          %s2986 = smul.addr %s2985, 8
          %s2987 = scalar_lea.vmem [#allocation26], %s2986
          %2989 = dma.done %s2984, 128
        $region196: #{t5_forward.1} parent=191 // pred_fallthru
          _
        // Predicated region
        $region197: #{t5_forward.1} parent=191 // pred_check
          %p2990 = pneg %p666
        $region198: #{t5_forward.1} parent=191 // pred_check_branch
          %2992 = sbr.rel (%p2990) target = $region200
        $region199: #{t5_forward.1} parent=191 // pred_region
          %p2993 = scmp.lt.s32.totalorder %s51, 1
          %s2994 = scalar_select %p2993, %s51, 1
          %s2995 = scalar_lea.vmem %s27, %s2994
        $region200: #{t5_forward.1} parent=191 // pred_fallthru
          _
      $region192: #{t5_forward.1} parent=5 // pred_fallthru
        _
    $region6: #{t5_forward.1} parent=1 // loop_footer
      %s49 = sadd.s32 1, %s45
    $region7: #{t5_forward.1} parent=1 // loop_footer_branch
      %44 = sbr.rel target = $region3
    $region8: #{t5_forward.1} parent=1 // loop_exit
      _
    %2996 = vsyncpa [#allocation4], 1
    %s2997 = scalar_lea.sflag [#allocation4], 1
    %2998 = vsyncpa %s2997, 1
    %2999 = vsyncpa [#allocation7], 1
    %3000 = vsyncpa [#allocation10], 1
    %3001 = vsyncpa [#allocation13], 1
    %3002 = vsyncpa [#allocation16], 1
    %3003 = vsyncpa [#allocation19], 1
    %3004 = vsyncpa [#allocation22], 1
    %3005 = vsyncpa [#allocation25], 1
    %3006 = vsyncpa [#allocation5], 1
    %s3007 = scalar_lea.sflag [#allocation5], 1
    %3008 = vsyncpa %s3007, 1

</llo_original>
